<compile_context>
chip_gen: v5e
topology: v5e:2x2
jax: 0.10.0
libtpu: 0.0.40
codegen_flags: <defaults>
</compile_context>

<pallas_src>
from functools import partial

import numpy as np
import jax
import jax.numpy as jnp
from jax.experimental import pallas as pl
from jax.experimental.pallas import tpu as pltpu

# The spec module uses nn.LeakyReLU() -> default negative_slope = 0.01.
# (Canonical ESRGAN uses 0.2, but we mirror the given module exactly.)
LRELU_SLOPE = 0.01


def _rdb_kernel(x_ref,
                w1, b1, w2, b2, w3, b3, w4, b4, w5, b5,
                out_ref, stack_ref,
                *, W, cin_p, gc_p, res_scale, pre, chunk, n_chunks):
    HW = chunk * n_chunks
    c_total = cin_p + 4 * gc_p
    cdt = stack_ref.dtype

    # Zero only the top/bottom row-halo strips; the interior is fully overwritten.
    # Re-done every grid step so per-core scratch is always initialized.
    zeros_strip = jnp.zeros((c_total, pre), cdt)
    stack_ref[:, 0:pre] = zeros_strip
    stack_ref[:, pre + HW:pre + HW + pre] = zeros_strip

    # Input features -> stack channels [0:cin_p)  (lane/sublane-aligned store).
    stack_ref[0:cin_p, pre:pre + HW] = x_ref[0].astype(cdt)

    # Column-border masks (f32, applied to the conv OUTPUT rows).  chunk % W == 0,
    # so the per-chunk column pattern is identical for every chunk; hoisted once.
    col = jax.lax.broadcasted_iota(jnp.int32, (1, chunk), 1) % W
    mask_l = (col > 0).astype(jnp.float32)       # kills x == 0     (kx == 0 tap)
    mask_r = (col < W - 1).astype(jnp.float32)   # kills x == W - 1 (kx == 2 tap)

    ws = (w1, w2, w3, w4, w5)
    bs = (b1, b2, b3, b4, b5)
    couts = (gc_p, gc_p, gc_p, gc_p, cin_p)

    for l in range(5):                            # layers (static unroll)
        cin_l = cin_p + l * gc_p
        cout = couts[l]
        w_ref, b_ref = ws[l], bs[l]
        for c in range(n_chunks):                 # row-aligned lane chunks
            base = pre + c * chunk
            # f32 accumulator for all 3 dx taps of this chunk, kept local across
            # all matmuls of the layer-chunk (no per-tap VMEM round trips).
            acc3 = jnp.zeros((3 * cout, chunk), jnp.float32)
            for dy in range(3):
                start = base + (dy - 1) * W
                win = stack_ref[0:cin_l, start:start + chunk]      # (cin_l, chunk)
                acc3 = acc3 + jnp.dot(w_ref[dy], win,
                                      preferred_element_type=jnp.float32)
            # Horizontal +-1 shift + border mask on the OUTPUT (per-lane matmul
            # => identical to shifting/masking the input window), plus bias.
            out = (acc3[cout:2 * cout]
                   + pltpu.roll(acc3[0:cout], 1, axis=1) * mask_l
                   + pltpu.roll(acc3[2 * cout:3 * cout], chunk - 1, axis=1) * mask_r
                   + b_ref[...])
            if l < 4:
                out = jnp.where(out >= 0, out, LRELU_SLOPE * out)   # LeakyReLU
                stack_ref[cin_l:cin_l + cout, base:base + chunk] = out.astype(cdt)
            else:
                # Residual: re-read x from the VMEM-resident input block here
                # instead of keeping it live across all five layers.
                x_c = x_ref[0, :, c * chunk:(c + 1) * chunk].astype(jnp.float32)
                out_ref[0, :, c * chunk:(c + 1) * chunk] = (
                    out * res_scale + x_c).astype(out_ref.dtype)


def _round_up(v, m):
    return ((v + m - 1) // m) * m


def _pick_chunk_rows(H, W, max_chunk_lanes):
    best = 1
    for r in range(1, H + 1):
        if H % r == 0 and r * W <= max_chunk_lanes:
            best = r
    return best


def _prep_params(params, cin, gc, cin_p, gc_p, compute_dtype):
    """Zero-pad channels to the packed-sublane multiple and pre-arrange each
    layer's weights as (3[dy], 3*cout_p [dx-major rows], cin_l_p): 1 matmul/dy."""
    prepped = []
    for l, (w, b) in enumerate(params):
        _, _, cin_l, cout = w.shape
        cout_p = gc_p if l < 4 else cin_p
        cin_l_p = cin_p + l * gc_p
        # original concatenated-channel index -> padded stack row
        rows = np.array(
            [i if i < cin else cin_p + ((i - cin) // gc) * gc_p + ((i - cin) % gc)
             for i in range(cin_l)], dtype=np.int32)
        wp = jnp.zeros((3, 3, cin_l_p, cout_p), jnp.float32)
        wp = wp.at[:, :, rows, :cout].set(w.astype(jnp.float32))
        wm = jnp.concatenate(
            [jnp.transpose(wp[:, dx], (0, 2, 1)) for dx in range(3)],
            axis=1).astype(compute_dtype)                 # (3, 3*cout_p, cin_l_p)
        bm = jnp.zeros((cout_p, 1), jnp.float32).at[:cout, 0].set(
            b.reshape(-1).astype(jnp.float32))
        prepped.append((wm, bm))
    return prepped


def _vmem_limit_bytes(needed):
    try:
        phys = int(pltpu.get_tpu_info().vmem_capacity_bytes)
    except Exception:
        phys = 64 * 2 ** 20                    # conservative (v7x per-core VMEM)
    cap = int(phys * 0.85)                     # headroom for compiler scratch
    return int(max(32 * 2 ** 20, min(2 * needed, cap)))


def residual_dense_block(x_nchw, params, *, gc, res_scale=0.2,
                         compute_dtype=jnp.bfloat16, io_dtype=jnp.bfloat16,
                         max_chunk_lanes=512):
    """params: list of 5 (w, b); w: (3,3,cin_l,cout) HWIO f32, b: (1,cout) f32."""
    N, C, H, W = x_nchw.shape
    HW = H * W
    cpad = 8 * (4 // jnp.dtype(compute_dtype).itemsize)   # 16 for bf16, 8 for f32
    cin_p, gc_p = _round_up(C, cpad), _round_up(gc, cpad)
    c_total_p = cin_p + 4 * gc_p
    pre = _round_up(W, 128)                   # lane-aligned row-halo width (>= W)
    rows = _pick_chunk_rows(H, W, max_chunk_lanes)
    chunk, n_chunks = rows * W, H // rows

    x = x_nchw.reshape(N, C, HW)              # NCHW -> (N, C, H*W), no transpose
    if cin_p > C:
        x = jnp.pad(x, ((0, 0), (0, cin_p - C), (0, 0)))
    x = x.astype(io_dtype)

    prepped = _prep_params(params, C, gc, cin_p, gc_p, compute_dtype)

    in_specs = [pl.BlockSpec((1, cin_p, HW), lambda n: (n, 0, 0))]
    weight_args = []
    for (wm, bm) in prepped:
        weight_args += [wm, bm]
        in_specs.append(pl.BlockSpec(wm.shape, lambda n: (0, 0, 0)))
        in_specs.append(pl.BlockSpec(bm.shape, lambda n: (0, 0)))

    cd_isz = jnp.dtype(compute_dtype).itemsize
    io_isz = jnp.dtype(io_dtype).itemsize
    needed = (c_total_p * (2 * pre + HW) * cd_isz          # dense-stack scratch
              + 2 * 2 * cin_p * HW * io_isz                # dbl-buffered in/out blocks
              + 2 * sum(int(wm.size) * cd_isz + int(bm.size) * 4
                        for (wm, bm) in prepped)           # dbl-buffered weights
              + 4 * 3 * max(gc_p, cin_p) * chunk * 4)      # accumulator/temp headroom

    kernel = partial(_rdb_kernel, W=W, cin_p=cin_p, gc_p=gc_p,
                     res_scale=float(res_scale), pre=pre,
                     chunk=chunk, n_chunks=n_chunks)

    out_flat = pl.pallas_call(
        kernel,
        out_shape=jax.ShapeDtypeStruct((N, cin_p, HW), io_dtype),
        grid_spec=pltpu.PrefetchScalarGridSpec(
            num_scalar_prefetch=0,
            grid=(N,),
            in_specs=in_specs,
            out_specs=pl.BlockSpec((1, cin_p, HW), lambda n: (n, 0, 0)),
            scratch_shapes=[pltpu.VMEM((c_total_p, 2 * pre + HW), compute_dtype)],
        ),
        compiler_params=pltpu.CompilerParams(
            dimension_semantics=("parallel",),
            vmem_limit_bytes=_vmem_limit_bytes(needed)),
    )(x, *weight_args)

    return out_flat[:, :C, :].reshape(N, C, H, W).astype(x_nchw.dtype)


def _reference(x_nchw, params, *, res_scale=0.2):
    """Pure-JAX f32 reference (lax conv) mirroring the PyTorch forward."""
    x = jnp.transpose(x_nchw, (0, 2, 3, 1)).astype(jnp.float32)     # NHWC

    def conv(feat, w, b):
        y = jax.lax.conv_general_dilated(
            feat, w, window_strides=(1, 1), padding="SAME",
            dimension_numbers=("NHWC", "HWIO", "NHWC"))
        return y + b[0]

    cur = x
    for l in range(4):
        o = conv(cur, *params[l])
        o = jnp.where(o >= 0, o, LRELU_SLOPE * o)
        cur = jnp.concatenate([cur, o], axis=-1)
    out5 = conv(cur, *params[4])
    out = out5 * res_scale + x
    return jnp.transpose(out, (0, 3, 1, 2))


def _init_params(key, cin, gc):
    params = []
    cins = [cin + l * gc for l in range(5)]
    couts = [gc, gc, gc, gc, cin]
    for l in range(5):
        key, k1, k2 = jax.random.split(key, 3)
        w = jax.random.normal(k1, (3, 3, cins[l], couts[l]), jnp.float32) * 0.05
        b = jax.random.normal(k2, (1, couts[l]), jnp.float32) * 0.05
        params.append((w, b))
    return params


if __name__ == "__main__":
    key = jax.random.PRNGKey(0)
    N, C, H, W = 2, 4, 16, 16          # in_channels = 4
    GC = 8                             # out_channels (growth channels) = 8
    RES_SCALE = 0.2

    key, kx = jax.random.split(key)
    x = jax.random.normal(kx, (N, C, H, W), jnp.float32)
    params = _init_params(key, C, GC)

    # max_chunk_lanes=128 -> 2 spatial chunks at this toy size, exercising the
    # chunked-accumulator path as well as the single-chunk math.
    out = residual_dense_block(x, params, gc=GC, res_scale=RES_SCALE,
                               max_chunk_lanes=128)
    out = jax.block_until_ready(out)

    ref = _reference(x, params, res_scale=RES_SCALE)
    assert out.shape == (N, C, H, W)
    # bf16 MXU inputs + bf16 dense-stack activations + bf16 I/O vs f32 reference.
    assert jnp.allclose(out, ref, atol=3e-2, rtol=3e-2), "mismatch vs reference"

    print("KERNEL_OK")
</pallas_src>

<mosaic_0001>
module attributes {stable_mosaic.version = 11 : i64} {
  func.func @_rdb_kernel(%arg0: i32, %arg1: memref<1x16x256xbf16, #tpu.memory_space<vmem>>, %arg2: memref<3x48x16xbf16, #tpu.memory_space<vmem>>, %arg3: memref<16x1xf32, #tpu.memory_space<vmem>>, %arg4: memref<3x48x32xbf16, #tpu.memory_space<vmem>>, %arg5: memref<16x1xf32, #tpu.memory_space<vmem>>, %arg6: memref<3x48x48xbf16, #tpu.memory_space<vmem>>, %arg7: memref<16x1xf32, #tpu.memory_space<vmem>>, %arg8: memref<3x48x64xbf16, #tpu.memory_space<vmem>>, %arg9: memref<16x1xf32, #tpu.memory_space<vmem>>, %arg10: memref<3x48x80xbf16, #tpu.memory_space<vmem>>, %arg11: memref<16x1xf32, #tpu.memory_space<vmem>>, %arg12: memref<1x16x256xbf16, #tpu.memory_space<vmem>>, %arg13: memref<80x512xbf16, #tpu.memory_space<vmem>>) attributes {dimension_semantics = [#tpu.dimension_semantics<parallel>], iteration_bounds = array<i64: 2>, scalar_prefetch = 0 : i64, scratch_operands = 1 : i64, tpu.core_type = #tpu.core_type<tc>, window_params = [{transform_indices = @transform_0, window_bounds = array<i64: 1, 16, 256>}, {pipeline_mode = #tpu.pipeline_mode<synchronous>, transform_indices = @transform_1, window_bounds = array<i64: 3, 48, 16>}, {pipeline_mode = #tpu.pipeline_mode<synchronous>, transform_indices = @transform_2, window_bounds = array<i64: 16, 1>}, {pipeline_mode = #tpu.pipeline_mode<synchronous>, transform_indices = @transform_3, window_bounds = array<i64: 3, 48, 32>}, {pipeline_mode = #tpu.pipeline_mode<synchronous>, transform_indices = @transform_4, window_bounds = array<i64: 16, 1>}, {pipeline_mode = #tpu.pipeline_mode<synchronous>, transform_indices = @transform_5, window_bounds = array<i64: 3, 48, 48>}, {pipeline_mode = #tpu.pipeline_mode<synchronous>, transform_indices = @transform_6, window_bounds = array<i64: 16, 1>}, {pipeline_mode = #tpu.pipeline_mode<synchronous>, transform_indices = @transform_7, window_bounds = array<i64: 3, 48, 64>}, {pipeline_mode = #tpu.pipeline_mode<synchronous>, transform_indices = @transform_8, window_bounds = array<i64: 16, 1>}, {pipeline_mode = #tpu.pipeline_mode<synchronous>, transform_indices = @transform_9, window_bounds = array<i64: 3, 48, 80>}, {pipeline_mode = #tpu.pipeline_mode<synchronous>, transform_indices = @transform_10, window_bounds = array<i64: 16, 1>}, {transform_indices = @transform_11, window_bounds = array<i64: 1, 16, 256>}]} {
    %cst = arith.constant 0.000000e+00 : bf16
    %0 = vector.broadcast %cst : bf16 to vector<80x128xbf16>
    %c0 = arith.constant 0 : index
    %c0_0 = arith.constant 0 : index
    %1 = vector.load %arg13[%c0, %c0_0] : memref<80x512xbf16, #tpu.memory_space<vmem>>, vector<80x128xbf16>
    tpu.vector_store %arg13[%c0, %c0_0], %0 {strides = array<i32>} : memref<80x512xbf16, #tpu.memory_space<vmem>>, vector<80x128xbf16>,
    %c0_1 = arith.constant 0 : index
    %c384 = arith.constant 384 : index
    %2 = vector.load %arg13[%c0_1, %c384] : memref<80x512xbf16, #tpu.memory_space<vmem>>, vector<80x128xbf16>
    tpu.vector_store %arg13[%c0_1, %c384], %0 {strides = array<i32>} : memref<80x512xbf16, #tpu.memory_space<vmem>>, vector<80x128xbf16>,
    %c0_2 = arith.constant 0 : index
    %c0_3 = arith.constant 0 : index
    %c0_4 = arith.constant 0 : index
    %3 = vector.load %arg1[%c0_2, %c0_3, %c0_4] : memref<1x16x256xbf16, #tpu.memory_space<vmem>>, vector<1x16x256xbf16>
    %4 = vector.shape_cast %3 : vector<1x16x256xbf16> to vector<16x256xbf16>
    %c0_5 = arith.constant 0 : index
    %c128 = arith.constant 128 : index
    %5 = vector.load %arg13[%c0_5, %c128] : memref<80x512xbf16, #tpu.memory_space<vmem>>, vector<16x256xbf16>
    tpu.vector_store %arg13[%c0_5, %c128], %4 {strides = array<i32>} : memref<80x512xbf16, #tpu.memory_space<vmem>>, vector<16x256xbf16>,
    %6 = tpu.iota {dimensions = array<i32: 1>} : vector<1x128xi32>
    %c16_i32 = arith.constant 16 : i32
    %c0_i32 = arith.constant 0 : i32
    %7 = arith.cmpi eq, %c16_i32, %c0_i32 : i32
    %c1_i32 = arith.constant 1 : i32
    %8 = arith.select %7, %c1_i32, %c16_i32 : i32
    %9 = vector.broadcast %8 : i32 to vector<1x128xi32>
    %10 = arith.remsi %6, %9 : vector<1x128xi32>
    %c0_i32_6 = arith.constant 0 : i32
    %11 = vector.broadcast %c0_i32_6 : i32 to vector<1x128xi32>
    %12 = arith.cmpi ne, %10, %11 : vector<1x128xi32>
    %c0_i32_7 = arith.constant 0 : i32
    %13 = vector.broadcast %c0_i32_7 : i32 to vector<1x128xi32>
    %14 = arith.cmpi slt, %10, %13 : vector<1x128xi32>
    %c0_i32_8 = arith.constant 0 : i32
    %15 = arith.cmpi slt, %8, %c0_i32_8 : i32
    %16 = vector.broadcast %15 : i1 to vector<1x128xi1>
    %17 = vector.broadcast %16 : vector<1x128xi1> to vector<1x128xi1>
    %18 = arith.xori %14, %17 : vector<1x128xi1>
    %19 = arith.andi %18, %12 : vector<1x128xi1>
    %20 = vector.broadcast %8 : i32 to vector<1x128xi32>
    %21 = arith.addi %10, %20 : vector<1x128xi32>
    %22 = arith.select %19, %21, %10 : vector<1x128xi1>, vector<1x128xi32>
    %c0_i32_9 = arith.constant 0 : i32
    %23 = vector.broadcast %c0_i32_9 : i32 to vector<1x128xi32>
    %24 = arith.cmpi sgt, %22, %23 : vector<1x128xi32>
    %25 = arith.extui %24 : vector<1x128xi1> to vector<1x128xi32>
    %26 = arith.sitofp %25 : vector<1x128xi32> to vector<1x128xf32>
    %c15_i32 = arith.constant 15 : i32
    %27 = vector.broadcast %c15_i32 : i32 to vector<1x128xi32>
    %28 = arith.cmpi slt, %22, %27 : vector<1x128xi32>
    %29 = arith.extui %28 : vector<1x128xi1> to vector<1x128xi32>
    %30 = arith.sitofp %29 : vector<1x128xi32> to vector<1x128xf32>
    %cst_10 = arith.constant 0.000000e+00 : f32
    %31 = vector.broadcast %cst_10 : f32 to vector<48x128xf32>
    %c0_11 = arith.constant 0 : index
    %c112 = arith.constant 112 : index
    %32 = vector.load %arg13[%c0_11, %c112] : memref<80x512xbf16, #tpu.memory_space<vmem>>, vector<16x128xbf16>
    %c0_12 = arith.constant 0 : index
    %c0_13 = arith.constant 0 : index
    %c0_14 = arith.constant 0 : index
    %33 = vector.load %arg2[%c0_12, %c0_13, %c0_14] : memref<3x48x16xbf16, #tpu.memory_space<vmem>>, vector<1x48x16xbf16>
    %34 = vector.shape_cast %33 : vector<1x48x16xbf16> to vector<48x16xbf16>
    %cst_15 = arith.constant dense<0.000000e+00> : vector<48x128xf32>
    %35 = tpu.matmul %34, %32, %cst_15 {dimension_numbers = #tpu.dot_dimension_numbers<[1], [0], [0], [1], [0, 0, 1, 1], [], []>} : vector<48x16xbf16>, vector<16x128xbf16>, vector<48x128xf32> -> vector<48x128xf32>
    %36 = arith.addf %31, %35 : vector<48x128xf32>
    %c0_16 = arith.constant 0 : index
    %c128_17 = arith.constant 128 : index
    %37 = vector.load %arg13[%c0_16, %c128_17] : memref<80x512xbf16, #tpu.memory_space<vmem>>, vector<16x128xbf16>
    %c1 = arith.constant 1 : index
    %c0_18 = arith.constant 0 : index
    %c0_19 = arith.constant 0 : index
    %38 = vector.load %arg2[%c1, %c0_18, %c0_19] : memref<3x48x16xbf16, #tpu.memory_space<vmem>>, vector<1x48x16xbf16>
    %39 = vector.shape_cast %38 : vector<1x48x16xbf16> to vector<48x16xbf16>
    %cst_20 = arith.constant dense<0.000000e+00> : vector<48x128xf32>
    %40 = tpu.matmul %39, %37, %cst_20 {dimension_numbers = #tpu.dot_dimension_numbers<[1], [0], [0], [1], [0, 0, 1, 1], [], []>} : vector<48x16xbf16>, vector<16x128xbf16>, vector<48x128xf32> -> vector<48x128xf32>
    %41 = arith.addf %36, %40 : vector<48x128xf32>
    %c0_21 = arith.constant 0 : index
    %c144 = arith.constant 144 : index
    %42 = vector.load %arg13[%c0_21, %c144] : memref<80x512xbf16, #tpu.memory_space<vmem>>, vector<16x128xbf16>
    %c2 = arith.constant 2 : index
    %c0_22 = arith.constant 0 : index
    %c0_23 = arith.constant 0 : index
    %43 = vector.load %arg2[%c2, %c0_22, %c0_23] : memref<3x48x16xbf16, #tpu.memory_space<vmem>>, vector<1x48x16xbf16>
    %44 = vector.shape_cast %43 : vector<1x48x16xbf16> to vector<48x16xbf16>
    %cst_24 = arith.constant dense<0.000000e+00> : vector<48x128xf32>
    %45 = tpu.matmul %44, %42, %cst_24 {dimension_numbers = #tpu.dot_dimension_numbers<[1], [0], [0], [1], [0, 0, 1, 1], [], []>} : vector<48x16xbf16>, vector<16x128xbf16>, vector<48x128xf32> -> vector<48x128xf32>
    %46 = arith.addf %41, %45 : vector<48x128xf32>
    %47 = vector.extract_strided_slice %46 {offsets = [16, 0], sizes = [16, 128], strides = [1, 1]} : vector<48x128xf32> to vector<16x128xf32>
    %48 = vector.extract_strided_slice %46 {offsets = [0, 0], sizes = [16, 128], strides = [1, 1]} : vector<48x128xf32> to vector<16x128xf32>
    %c1_i32_25 = arith.constant 1 : i32
    %49 = tpu.dynamic_rotate %48 by %c1_i32_25 dim 1 : vector<16x128xf32>, i32 -> vector<16x128xf32>
    %50 = vector.broadcast %26 : vector<1x128xf32> to vector<16x128xf32>
    %51 = arith.mulf %49, %50 : vector<16x128xf32>
    %52 = arith.addf %47, %51 : vector<16x128xf32>
    %53 = vector.extract_strided_slice %46 {offsets = [32, 0], sizes = [16, 128], strides = [1, 1]} : vector<48x128xf32> to vector<16x128xf32>
    %c127_i32 = arith.constant 127 : i32
    %54 = tpu.dynamic_rotate %53 by %c127_i32 dim 1 : vector<16x128xf32>, i32 -> vector<16x128xf32>
    %55 = vector.broadcast %30 : vector<1x128xf32> to vector<16x128xf32>
    %56 = arith.mulf %54, %55 : vector<16x128xf32>
    %57 = arith.addf %52, %56 : vector<16x128xf32>
    %c0_26 = arith.constant 0 : index
    %c0_27 = arith.constant 0 : index
    %58 = vector.load %arg3[%c0_26, %c0_27] : memref<16x1xf32, #tpu.memory_space<vmem>>, vector<16x1xf32>
    %59 = vector.broadcast %58 : vector<16x1xf32> to vector<16x128xf32>
    %60 = arith.addf %57, %59 : vector<16x128xf32>
    %cst_28 = arith.constant 0.000000e+00 : f32
    %61 = vector.broadcast %cst_28 : f32 to vector<16x128xf32>
    %62 = arith.cmpf oge, %60, %61 : vector<16x128xf32>
    %cst_29 = arith.constant 0.00999999977 : f32
    %63 = vector.broadcast %cst_29 : f32 to vector<16x128xf32>
    %64 = arith.mulf %63, %60 : vector<16x128xf32>
    %65 = arith.select %62, %60, %64 : vector<16x128xi1>, vector<16x128xf32>
    %66 = arith.truncf %65 : vector<16x128xf32> to vector<16x128xbf16>
    %c16 = arith.constant 16 : index
    %c128_30 = arith.constant 128 : index
    %67 = vector.load %arg13[%c16, %c128_30] : memref<80x512xbf16, #tpu.memory_space<vmem>>, vector<16x128xbf16>
    tpu.vector_store %arg13[%c16, %c128_30], %66 {strides = array<i32>} : memref<80x512xbf16, #tpu.memory_space<vmem>>, vector<16x128xbf16>,
    %cst_31 = arith.constant 0.000000e+00 : f32
    %68 = vector.broadcast %cst_31 : f32 to vector<48x128xf32>
    %c0_32 = arith.constant 0 : index
    %c240 = arith.constant 240 : index
    %69 = vector.load %arg13[%c0_32, %c240] : memref<80x512xbf16, #tpu.memory_space<vmem>>, vector<16x128xbf16>
    %c0_33 = arith.constant 0 : index
    %c0_34 = arith.constant 0 : index
    %c0_35 = arith.constant 0 : index
    %70 = vector.load %arg2[%c0_33, %c0_34, %c0_35] : memref<3x48x16xbf16, #tpu.memory_space<vmem>>, vector<1x48x16xbf16>
    %71 = vector.shape_cast %70 : vector<1x48x16xbf16> to vector<48x16xbf16>
    %cst_36 = arith.constant dense<0.000000e+00> : vector<48x128xf32>
    %72 = tpu.matmul %71, %69, %cst_36 {dimension_numbers = #tpu.dot_dimension_numbers<[1], [0], [0], [1], [0, 0, 1, 1], [], []>} : vector<48x16xbf16>, vector<16x128xbf16>, vector<48x128xf32> -> vector<48x128xf32>
    %73 = arith.addf %68, %72 : vector<48x128xf32>
    %c0_37 = arith.constant 0 : index
    %c256 = arith.constant 256 : index
    %74 = vector.load %arg13[%c0_37, %c256] : memref<80x512xbf16, #tpu.memory_space<vmem>>, vector<16x128xbf16>
    %c1_38 = arith.constant 1 : index
    %c0_39 = arith.constant 0 : index
    %c0_40 = arith.constant 0 : index
    %75 = vector.load %arg2[%c1_38, %c0_39, %c0_40] : memref<3x48x16xbf16, #tpu.memory_space<vmem>>, vector<1x48x16xbf16>
    %76 = vector.shape_cast %75 : vector<1x48x16xbf16> to vector<48x16xbf16>
    %cst_41 = arith.constant dense<0.000000e+00> : vector<48x128xf32>
    %77 = tpu.matmul %76, %74, %cst_41 {dimension_numbers = #tpu.dot_dimension_numbers<[1], [0], [0], [1], [0, 0, 1, 1], [], []>} : vector<48x16xbf16>, vector<16x128xbf16>, vector<48x128xf32> -> vector<48x128xf32>
    %78 = arith.addf %73, %77 : vector<48x128xf32>
    %c0_42 = arith.constant 0 : index
    %c272 = arith.constant 272 : index
    %79 = vector.load %arg13[%c0_42, %c272] : memref<80x512xbf16, #tpu.memory_space<vmem>>, vector<16x128xbf16>
    %c2_43 = arith.constant 2 : index
    %c0_44 = arith.constant 0 : index
    %c0_45 = arith.constant 0 : index
    %80 = vector.load %arg2[%c2_43, %c0_44, %c0_45] : memref<3x48x16xbf16, #tpu.memory_space<vmem>>, vector<1x48x16xbf16>
    %81 = vector.shape_cast %80 : vector<1x48x16xbf16> to vector<48x16xbf16>
    %cst_46 = arith.constant dense<0.000000e+00> : vector<48x128xf32>
    %82 = tpu.matmul %81, %79, %cst_46 {dimension_numbers = #tpu.dot_dimension_numbers<[1], [0], [0], [1], [0, 0, 1, 1], [], []>} : vector<48x16xbf16>, vector<16x128xbf16>, vector<48x128xf32> -> vector<48x128xf32>
    %83 = arith.addf %78, %82 : vector<48x128xf32>
    %84 = vector.extract_strided_slice %83 {offsets = [16, 0], sizes = [16, 128], strides = [1, 1]} : vector<48x128xf32> to vector<16x128xf32>
    %85 = vector.extract_strided_slice %83 {offsets = [0, 0], sizes = [16, 128], strides = [1, 1]} : vector<48x128xf32> to vector<16x128xf32>
    %c1_i32_47 = arith.constant 1 : i32
    %86 = tpu.dynamic_rotate %85 by %c1_i32_47 dim 1 : vector<16x128xf32>, i32 -> vector<16x128xf32>
    %87 = vector.broadcast %26 : vector<1x128xf32> to vector<16x128xf32>
    %88 = arith.mulf %86, %87 : vector<16x128xf32>
    %89 = arith.addf %84, %88 : vector<16x128xf32>
    %90 = vector.extract_strided_slice %83 {offsets = [32, 0], sizes = [16, 128], strides = [1, 1]} : vector<48x128xf32> to vector<16x128xf32>
    %c127_i32_48 = arith.constant 127 : i32
    %91 = tpu.dynamic_rotate %90 by %c127_i32_48 dim 1 : vector<16x128xf32>, i32 -> vector<16x128xf32>
    %92 = vector.broadcast %30 : vector<1x128xf32> to vector<16x128xf32>
    %93 = arith.mulf %91, %92 : vector<16x128xf32>
    %94 = arith.addf %89, %93 : vector<16x128xf32>
    %c0_49 = arith.constant 0 : index
    %c0_50 = arith.constant 0 : index
    %95 = vector.load %arg3[%c0_49, %c0_50] : memref<16x1xf32, #tpu.memory_space<vmem>>, vector<16x1xf32>
    %96 = vector.broadcast %95 : vector<16x1xf32> to vector<16x128xf32>
    %97 = arith.addf %94, %96 : vector<16x128xf32>
    %cst_51 = arith.constant 0.000000e+00 : f32
    %98 = vector.broadcast %cst_51 : f32 to vector<16x128xf32>
    %99 = arith.cmpf oge, %97, %98 : vector<16x128xf32>
    %cst_52 = arith.constant 0.00999999977 : f32
    %100 = vector.broadcast %cst_52 : f32 to vector<16x128xf32>
    %101 = arith.mulf %100, %97 : vector<16x128xf32>
    %102 = arith.select %99, %97, %101 : vector<16x128xi1>, vector<16x128xf32>
    %103 = arith.truncf %102 : vector<16x128xf32> to vector<16x128xbf16>
    %c16_53 = arith.constant 16 : index
    %c256_54 = arith.constant 256 : index
    %104 = vector.load %arg13[%c16_53, %c256_54] : memref<80x512xbf16, #tpu.memory_space<vmem>>, vector<16x128xbf16>
    tpu.vector_store %arg13[%c16_53, %c256_54], %103 {strides = array<i32>} : memref<80x512xbf16, #tpu.memory_space<vmem>>, vector<16x128xbf16>,
    %cst_55 = arith.constant 0.000000e+00 : f32
    %105 = vector.broadcast %cst_55 : f32 to vector<48x128xf32>
    %c0_56 = arith.constant 0 : index
    %c112_57 = arith.constant 112 : index
    %106 = vector.load %arg13[%c0_56, %c112_57] : memref<80x512xbf16, #tpu.memory_space<vmem>>, vector<32x128xbf16>
    %c0_58 = arith.constant 0 : index
    %c0_59 = arith.constant 0 : index
    %c0_60 = arith.constant 0 : index
    %107 = vector.load %arg4[%c0_58, %c0_59, %c0_60] : memref<3x48x32xbf16, #tpu.memory_space<vmem>>, vector<1x48x32xbf16>
    %108 = vector.shape_cast %107 : vector<1x48x32xbf16> to vector<48x32xbf16>
    %cst_61 = arith.constant dense<0.000000e+00> : vector<48x128xf32>
    %109 = tpu.matmul %108, %106, %cst_61 {dimension_numbers = #tpu.dot_dimension_numbers<[1], [0], [0], [1], [0, 0, 1, 1], [], []>} : vector<48x32xbf16>, vector<32x128xbf16>, vector<48x128xf32> -> vector<48x128xf32>
    %110 = arith.addf %105, %109 : vector<48x128xf32>
    %c0_62 = arith.constant 0 : index
    %c128_63 = arith.constant 128 : index
    %111 = vector.load %arg13[%c0_62, %c128_63] : memref<80x512xbf16, #tpu.memory_space<vmem>>, vector<32x128xbf16>
    %c1_64 = arith.constant 1 : index
    %c0_65 = arith.constant 0 : index
    %c0_66 = arith.constant 0 : index
    %112 = vector.load %arg4[%c1_64, %c0_65, %c0_66] : memref<3x48x32xbf16, #tpu.memory_space<vmem>>, vector<1x48x32xbf16>
    %113 = vector.shape_cast %112 : vector<1x48x32xbf16> to vector<48x32xbf16>
    %cst_67 = arith.constant dense<0.000000e+00> : vector<48x128xf32>
    %114 = tpu.matmul %113, %111, %cst_67 {dimension_numbers = #tpu.dot_dimension_numbers<[1], [0], [0], [1], [0, 0, 1, 1], [], []>} : vector<48x32xbf16>, vector<32x128xbf16>, vector<48x128xf32> -> vector<48x128xf32>
    %115 = arith.addf %110, %114 : vector<48x128xf32>
    %c0_68 = arith.constant 0 : index
    %c144_69 = arith.constant 144 : index
    %116 = vector.load %arg13[%c0_68, %c144_69] : memref<80x512xbf16, #tpu.memory_space<vmem>>, vector<32x128xbf16>
    %c2_70 = arith.constant 2 : index
    %c0_71 = arith.constant 0 : index
    %c0_72 = arith.constant 0 : index
    %117 = vector.load %arg4[%c2_70, %c0_71, %c0_72] : memref<3x48x32xbf16, #tpu.memory_space<vmem>>, vector<1x48x32xbf16>
    %118 = vector.shape_cast %117 : vector<1x48x32xbf16> to vector<48x32xbf16>
    %cst_73 = arith.constant dense<0.000000e+00> : vector<48x128xf32>
    %119 = tpu.matmul %118, %116, %cst_73 {dimension_numbers = #tpu.dot_dimension_numbers<[1], [0], [0], [1], [0, 0, 1, 1], [], []>} : vector<48x32xbf16>, vector<32x128xbf16>, vector<48x128xf32> -> vector<48x128xf32>
    %120 = arith.addf %115, %119 : vector<48x128xf32>
    %121 = vector.extract_strided_slice %120 {offsets = [16, 0], sizes = [16, 128], strides = [1, 1]} : vector<48x128xf32> to vector<16x128xf32>
    %122 = vector.extract_strided_slice %120 {offsets = [0, 0], sizes = [16, 128], strides = [1, 1]} : vector<48x128xf32> to vector<16x128xf32>
    %c1_i32_74 = arith.constant 1 : i32
    %123 = tpu.dynamic_rotate %122 by %c1_i32_74 dim 1 : vector<16x128xf32>, i32 -> vector<16x128xf32>
    %124 = vector.broadcast %26 : vector<1x128xf32> to vector<16x128xf32>
    %125 = arith.mulf %123, %124 : vector<16x128xf32>
    %126 = arith.addf %121, %125 : vector<16x128xf32>
    %127 = vector.extract_strided_slice %120 {offsets = [32, 0], sizes = [16, 128], strides = [1, 1]} : vector<48x128xf32> to vector<16x128xf32>
    %c127_i32_75 = arith.constant 127 : i32
    %128 = tpu.dynamic_rotate %127 by %c127_i32_75 dim 1 : vector<16x128xf32>, i32 -> vector<16x128xf32>
    %129 = vector.broadcast %30 : vector<1x128xf32> to vector<16x128xf32>
    %130 = arith.mulf %128, %129 : vector<16x128xf32>
    %131 = arith.addf %126, %130 : vector<16x128xf32>
    %c0_76 = arith.constant 0 : index
    %c0_77 = arith.constant 0 : index
    %132 = vector.load %arg5[%c0_76, %c0_77] : memref<16x1xf32, #tpu.memory_space<vmem>>, vector<16x1xf32>
    %133 = vector.broadcast %132 : vector<16x1xf32> to vector<16x128xf32>
    %134 = arith.addf %131, %133 : vector<16x128xf32>
    %cst_78 = arith.constant 0.000000e+00 : f32
    %135 = vector.broadcast %cst_78 : f32 to vector<16x128xf32>
    %136 = arith.cmpf oge, %134, %135 : vector<16x128xf32>
    %cst_79 = arith.constant 0.00999999977 : f32
    %137 = vector.broadcast %cst_79 : f32 to vector<16x128xf32>
    %138 = arith.mulf %137, %134 : vector<16x128xf32>
    %139 = arith.select %136, %134, %138 : vector<16x128xi1>, vector<16x128xf32>
    %140 = arith.truncf %139 : vector<16x128xf32> to vector<16x128xbf16>
    %c32 = arith.constant 32 : index
    %c128_80 = arith.constant 128 : index
    %141 = vector.load %arg13[%c32, %c128_80] : memref<80x512xbf16, #tpu.memory_space<vmem>>, vector<16x128xbf16>
    tpu.vector_store %arg13[%c32, %c128_80], %140 {strides = array<i32>} : memref<80x512xbf16, #tpu.memory_space<vmem>>, vector<16x128xbf16>,
    %cst_81 = arith.constant 0.000000e+00 : f32
    %142 = vector.broadcast %cst_81 : f32 to vector<48x128xf32>
    %c0_82 = arith.constant 0 : index
    %c240_83 = arith.constant 240 : index
    %143 = vector.load %arg13[%c0_82, %c240_83] : memref<80x512xbf16, #tpu.memory_space<vmem>>, vector<32x128xbf16>
    %c0_84 = arith.constant 0 : index
    %c0_85 = arith.constant 0 : index
    %c0_86 = arith.constant 0 : index
    %144 = vector.load %arg4[%c0_84, %c0_85, %c0_86] : memref<3x48x32xbf16, #tpu.memory_space<vmem>>, vector<1x48x32xbf16>
    %145 = vector.shape_cast %144 : vector<1x48x32xbf16> to vector<48x32xbf16>
    %cst_87 = arith.constant dense<0.000000e+00> : vector<48x128xf32>
    %146 = tpu.matmul %145, %143, %cst_87 {dimension_numbers = #tpu.dot_dimension_numbers<[1], [0], [0], [1], [0, 0, 1, 1], [], []>} : vector<48x32xbf16>, vector<32x128xbf16>, vector<48x128xf32> -> vector<48x128xf32>
    %147 = arith.addf %142, %146 : vector<48x128xf32>
    %c0_88 = arith.constant 0 : index
    %c256_89 = arith.constant 256 : index
    %148 = vector.load %arg13[%c0_88, %c256_89] : memref<80x512xbf16, #tpu.memory_space<vmem>>, vector<32x128xbf16>
    %c1_90 = arith.constant 1 : index
    %c0_91 = arith.constant 0 : index
    %c0_92 = arith.constant 0 : index
    %149 = vector.load %arg4[%c1_90, %c0_91, %c0_92] : memref<3x48x32xbf16, #tpu.memory_space<vmem>>, vector<1x48x32xbf16>
    %150 = vector.shape_cast %149 : vector<1x48x32xbf16> to vector<48x32xbf16>
    %cst_93 = arith.constant dense<0.000000e+00> : vector<48x128xf32>
    %151 = tpu.matmul %150, %148, %cst_93 {dimension_numbers = #tpu.dot_dimension_numbers<[1], [0], [0], [1], [0, 0, 1, 1], [], []>} : vector<48x32xbf16>, vector<32x128xbf16>, vector<48x128xf32> -> vector<48x128xf32>
    %152 = arith.addf %147, %151 : vector<48x128xf32>
    %c0_94 = arith.constant 0 : index
    %c272_95 = arith.constant 272 : index
    %153 = vector.load %arg13[%c0_94, %c272_95] : memref<80x512xbf16, #tpu.memory_space<vmem>>, vector<32x128xbf16>
    %c2_96 = arith.constant 2 : index
    %c0_97 = arith.constant 0 : index
    %c0_98 = arith.constant 0 : index
    %154 = vector.load %arg4[%c2_96, %c0_97, %c0_98] : memref<3x48x32xbf16, #tpu.memory_space<vmem>>, vector<1x48x32xbf16>
    %155 = vector.shape_cast %154 : vector<1x48x32xbf16> to vector<48x32xbf16>
    %cst_99 = arith.constant dense<0.000000e+00> : vector<48x128xf32>
    %156 = tpu.matmul %155, %153, %cst_99 {dimension_numbers = #tpu.dot_dimension_numbers<[1], [0], [0], [1], [0, 0, 1, 1], [], []>} : vector<48x32xbf16>, vector<32x128xbf16>, vector<48x128xf32> -> vector<48x128xf32>
    %157 = arith.addf %152, %156 : vector<48x128xf32>
    %158 = vector.extract_strided_slice %157 {offsets = [16, 0], sizes = [16, 128], strides = [1, 1]} : vector<48x128xf32> to vector<16x128xf32>
    %159 = vector.extract_strided_slice %157 {offsets = [0, 0], sizes = [16, 128], strides = [1, 1]} : vector<48x128xf32> to vector<16x128xf32>
    %c1_i32_100 = arith.constant 1 : i32
    %160 = tpu.dynamic_rotate %159 by %c1_i32_100 dim 1 : vector<16x128xf32>, i32 -> vector<16x128xf32>
    %161 = vector.broadcast %26 : vector<1x128xf32> to vector<16x128xf32>
    %162 = arith.mulf %160, %161 : vector<16x128xf32>
    %163 = arith.addf %158, %162 : vector<16x128xf32>
    %164 = vector.extract_strided_slice %157 {offsets = [32, 0], sizes = [16, 128], strides = [1, 1]} : vector<48x128xf32> to vector<16x128xf32>
    %c127_i32_101 = arith.constant 127 : i32
    %165 = tpu.dynamic_rotate %164 by %c127_i32_101 dim 1 : vector<16x128xf32>, i32 -> vector<16x128xf32>
    %166 = vector.broadcast %30 : vector<1x128xf32> to vector<16x128xf32>
    %167 = arith.mulf %165, %166 : vector<16x128xf32>
    %168 = arith.addf %163, %167 : vector<16x128xf32>
    %c0_102 = arith.constant 0 : index
    %c0_103 = arith.constant 0 : index
    %169 = vector.load %arg5[%c0_102, %c0_103] : memref<16x1xf32, #tpu.memory_space<vmem>>, vector<16x1xf32>
    %170 = vector.broadcast %169 : vector<16x1xf32> to vector<16x128xf32>
    %171 = arith.addf %168, %170 : vector<16x128xf32>
    %cst_104 = arith.constant 0.000000e+00 : f32
    %172 = vector.broadcast %cst_104 : f32 to vector<16x128xf32>
    %173 = arith.cmpf oge, %171, %172 : vector<16x128xf32>
    %cst_105 = arith.constant 0.00999999977 : f32
    %174 = vector.broadcast %cst_105 : f32 to vector<16x128xf32>
    %175 = arith.mulf %174, %171 : vector<16x128xf32>
    %176 = arith.select %173, %171, %175 : vector<16x128xi1>, vector<16x128xf32>
    %177 = arith.truncf %176 : vector<16x128xf32> to vector<16x128xbf16>
    %c32_106 = arith.constant 32 : index
    %c256_107 = arith.constant 256 : index
    %178 = vector.load %arg13[%c32_106, %c256_107] : memref<80x512xbf16, #tpu.memory_space<vmem>>, vector<16x128xbf16>
    tpu.vector_store %arg13[%c32_106, %c256_107], %177 {strides = array<i32>} : memref<80x512xbf16, #tpu.memory_space<vmem>>, vector<16x128xbf16>,
    %cst_108 = arith.constant 0.000000e+00 : f32
    %179 = vector.broadcast %cst_108 : f32 to vector<48x128xf32>
    %c0_109 = arith.constant 0 : index
    %c112_110 = arith.constant 112 : index
    %180 = vector.load %arg13[%c0_109, %c112_110] : memref<80x512xbf16, #tpu.memory_space<vmem>>, vector<48x128xbf16>
    %c0_111 = arith.constant 0 : index
    %c0_112 = arith.constant 0 : index
    %c0_113 = arith.constant 0 : index
    %181 = vector.load %arg6[%c0_111, %c0_112, %c0_113] : memref<3x48x48xbf16, #tpu.memory_space<vmem>>, vector<1x48x48xbf16>
    %182 = vector.shape_cast %181 : vector<1x48x48xbf16> to vector<48x48xbf16>
    %cst_114 = arith.constant dense<0.000000e+00> : vector<48x128xf32>
    %183 = tpu.matmul %182, %180, %cst_114 {dimension_numbers = #tpu.dot_dimension_numbers<[1], [0], [0], [1], [0, 0, 1, 1], [], []>} : vector<48x48xbf16>, vector<48x128xbf16>, vector<48x128xf32> -> vector<48x128xf32>
    %184 = arith.addf %179, %183 : vector<48x128xf32>
    %c0_115 = arith.constant 0 : index
    %c128_116 = arith.constant 128 : index
    %185 = vector.load %arg13[%c0_115, %c128_116] : memref<80x512xbf16, #tpu.memory_space<vmem>>, vector<48x128xbf16>
    %c1_117 = arith.constant 1 : index
    %c0_118 = arith.constant 0 : index
    %c0_119 = arith.constant 0 : index
    %186 = vector.load %arg6[%c1_117, %c0_118, %c0_119] : memref<3x48x48xbf16, #tpu.memory_space<vmem>>, vector<1x48x48xbf16>
    %187 = vector.shape_cast %186 : vector<1x48x48xbf16> to vector<48x48xbf16>
    %cst_120 = arith.constant dense<0.000000e+00> : vector<48x128xf32>
    %188 = tpu.matmul %187, %185, %cst_120 {dimension_numbers = #tpu.dot_dimension_numbers<[1], [0], [0], [1], [0, 0, 1, 1], [], []>} : vector<48x48xbf16>, vector<48x128xbf16>, vector<48x128xf32> -> vector<48x128xf32>
    %189 = arith.addf %184, %188 : vector<48x128xf32>
    %c0_121 = arith.constant 0 : index
    %c144_122 = arith.constant 144 : index
    %190 = vector.load %arg13[%c0_121, %c144_122] : memref<80x512xbf16, #tpu.memory_space<vmem>>, vector<48x128xbf16>
    %c2_123 = arith.constant 2 : index
    %c0_124 = arith.constant 0 : index
    %c0_125 = arith.constant 0 : index
    %191 = vector.load %arg6[%c2_123, %c0_124, %c0_125] : memref<3x48x48xbf16, #tpu.memory_space<vmem>>, vector<1x48x48xbf16>
    %192 = vector.shape_cast %191 : vector<1x48x48xbf16> to vector<48x48xbf16>
    %cst_126 = arith.constant dense<0.000000e+00> : vector<48x128xf32>
    %193 = tpu.matmul %192, %190, %cst_126 {dimension_numbers = #tpu.dot_dimension_numbers<[1], [0], [0], [1], [0, 0, 1, 1], [], []>} : vector<48x48xbf16>, vector<48x128xbf16>, vector<48x128xf32> -> vector<48x128xf32>
    %194 = arith.addf %189, %193 : vector<48x128xf32>
    %195 = vector.extract_strided_slice %194 {offsets = [16, 0], sizes = [16, 128], strides = [1, 1]} : vector<48x128xf32> to vector<16x128xf32>
    %196 = vector.extract_strided_slice %194 {offsets = [0, 0], sizes = [16, 128], strides = [1, 1]} : vector<48x128xf32> to vector<16x128xf32>
    %c1_i32_127 = arith.constant 1 : i32
    %197 = tpu.dynamic_rotate %196 by %c1_i32_127 dim 1 : vector<16x128xf32>, i32 -> vector<16x128xf32>
    %198 = vector.broadcast %26 : vector<1x128xf32> to vector<16x128xf32>
    %199 = arith.mulf %197, %198 : vector<16x128xf32>
    %200 = arith.addf %195, %199 : vector<16x128xf32>
    %201 = vector.extract_strided_slice %194 {offsets = [32, 0], sizes = [16, 128], strides = [1, 1]} : vector<48x128xf32> to vector<16x128xf32>
    %c127_i32_128 = arith.constant 127 : i32
    %202 = tpu.dynamic_rotate %201 by %c127_i32_128 dim 1 : vector<16x128xf32>, i32 -> vector<16x128xf32>
    %203 = vector.broadcast %30 : vector<1x128xf32> to vector<16x128xf32>
    %204 = arith.mulf %202, %203 : vector<16x128xf32>
    %205 = arith.addf %200, %204 : vector<16x128xf32>
    %c0_129 = arith.constant 0 : index
    %c0_130 = arith.constant 0 : index
    %206 = vector.load %arg7[%c0_129, %c0_130] : memref<16x1xf32, #tpu.memory_space<vmem>>, vector<16x1xf32>
    %207 = vector.broadcast %206 : vector<16x1xf32> to vector<16x128xf32>
    %208 = arith.addf %205, %207 : vector<16x128xf32>
    %cst_131 = arith.constant 0.000000e+00 : f32
    %209 = vector.broadcast %cst_131 : f32 to vector<16x128xf32>
    %210 = arith.cmpf oge, %208, %209 : vector<16x128xf32>
    %cst_132 = arith.constant 0.00999999977 : f32
    %211 = vector.broadcast %cst_132 : f32 to vector<16x128xf32>
    %212 = arith.mulf %211, %208 : vector<16x128xf32>
    %213 = arith.select %210, %208, %212 : vector<16x128xi1>, vector<16x128xf32>
    %214 = arith.truncf %213 : vector<16x128xf32> to vector<16x128xbf16>
    %c48 = arith.constant 48 : index
    %c128_133 = arith.constant 128 : index
    %215 = vector.load %arg13[%c48, %c128_133] : memref<80x512xbf16, #tpu.memory_space<vmem>>, vector<16x128xbf16>
    tpu.vector_store %arg13[%c48, %c128_133], %214 {strides = array<i32>} : memref<80x512xbf16, #tpu.memory_space<vmem>>, vector<16x128xbf16>,
    %cst_134 = arith.constant 0.000000e+00 : f32
    %216 = vector.broadcast %cst_134 : f32 to vector<48x128xf32>
    %c0_135 = arith.constant 0 : index
    %c240_136 = arith.constant 240 : index
    %217 = vector.load %arg13[%c0_135, %c240_136] : memref<80x512xbf16, #tpu.memory_space<vmem>>, vector<48x128xbf16>
    %c0_137 = arith.constant 0 : index
    %c0_138 = arith.constant 0 : index
    %c0_139 = arith.constant 0 : index
    %218 = vector.load %arg6[%c0_137, %c0_138, %c0_139] : memref<3x48x48xbf16, #tpu.memory_space<vmem>>, vector<1x48x48xbf16>
    %219 = vector.shape_cast %218 : vector<1x48x48xbf16> to vector<48x48xbf16>
    %cst_140 = arith.constant dense<0.000000e+00> : vector<48x128xf32>
    %220 = tpu.matmul %219, %217, %cst_140 {dimension_numbers = #tpu.dot_dimension_numbers<[1], [0], [0], [1], [0, 0, 1, 1], [], []>} : vector<48x48xbf16>, vector<48x128xbf16>, vector<48x128xf32> -> vector<48x128xf32>
    %221 = arith.addf %216, %220 : vector<48x128xf32>
    %c0_141 = arith.constant 0 : index
    %c256_142 = arith.constant 256 : index
    %222 = vector.load %arg13[%c0_141, %c256_142] : memref<80x512xbf16, #tpu.memory_space<vmem>>, vector<48x128xbf16>
    %c1_143 = arith.constant 1 : index
    %c0_144 = arith.constant 0 : index
    %c0_145 = arith.constant 0 : index
    %223 = vector.load %arg6[%c1_143, %c0_144, %c0_145] : memref<3x48x48xbf16, #tpu.memory_space<vmem>>, vector<1x48x48xbf16>
    %224 = vector.shape_cast %223 : vector<1x48x48xbf16> to vector<48x48xbf16>
    %cst_146 = arith.constant dense<0.000000e+00> : vector<48x128xf32>
    %225 = tpu.matmul %224, %222, %cst_146 {dimension_numbers = #tpu.dot_dimension_numbers<[1], [0], [0], [1], [0, 0, 1, 1], [], []>} : vector<48x48xbf16>, vector<48x128xbf16>, vector<48x128xf32> -> vector<48x128xf32>
    %226 = arith.addf %221, %225 : vector<48x128xf32>
    %c0_147 = arith.constant 0 : index
    %c272_148 = arith.constant 272 : index
    %227 = vector.load %arg13[%c0_147, %c272_148] : memref<80x512xbf16, #tpu.memory_space<vmem>>, vector<48x128xbf16>
    %c2_149 = arith.constant 2 : index
    %c0_150 = arith.constant 0 : index
    %c0_151 = arith.constant 0 : index
    %228 = vector.load %arg6[%c2_149, %c0_150, %c0_151] : memref<3x48x48xbf16, #tpu.memory_space<vmem>>, vector<1x48x48xbf16>
    %229 = vector.shape_cast %228 : vector<1x48x48xbf16> to vector<48x48xbf16>
    %cst_152 = arith.constant dense<0.000000e+00> : vector<48x128xf32>
    %230 = tpu.matmul %229, %227, %cst_152 {dimension_numbers = #tpu.dot_dimension_numbers<[1], [0], [0], [1], [0, 0, 1, 1], [], []>} : vector<48x48xbf16>, vector<48x128xbf16>, vector<48x128xf32> -> vector<48x128xf32>
    %231 = arith.addf %226, %230 : vector<48x128xf32>
    %232 = vector.extract_strided_slice %231 {offsets = [16, 0], sizes = [16, 128], strides = [1, 1]} : vector<48x128xf32> to vector<16x128xf32>
    %233 = vector.extract_strided_slice %231 {offsets = [0, 0], sizes = [16, 128], strides = [1, 1]} : vector<48x128xf32> to vector<16x128xf32>
    %c1_i32_153 = arith.constant 1 : i32
    %234 = tpu.dynamic_rotate %233 by %c1_i32_153 dim 1 : vector<16x128xf32>, i32 -> vector<16x128xf32>
    %235 = vector.broadcast %26 : vector<1x128xf32> to vector<16x128xf32>
    %236 = arith.mulf %234, %235 : vector<16x128xf32>
    %237 = arith.addf %232, %236 : vector<16x128xf32>
    %238 = vector.extract_strided_slice %231 {offsets = [32, 0], sizes = [16, 128], strides = [1, 1]} : vector<48x128xf32> to vector<16x128xf32>
    %c127_i32_154 = arith.constant 127 : i32
    %239 = tpu.dynamic_rotate %238 by %c127_i32_154 dim 1 : vector<16x128xf32>, i32 -> vector<16x128xf32>
    %240 = vector.broadcast %30 : vector<1x128xf32> to vector<16x128xf32>
    %241 = arith.mulf %239, %240 : vector<16x128xf32>
    %242 = arith.addf %237, %241 : vector<16x128xf32>
    %c0_155 = arith.constant 0 : index
    %c0_156 = arith.constant 0 : index
    %243 = vector.load %arg7[%c0_155, %c0_156] : memref<16x1xf32, #tpu.memory_space<vmem>>, vector<16x1xf32>
    %244 = vector.broadcast %243 : vector<16x1xf32> to vector<16x128xf32>
    %245 = arith.addf %242, %244 : vector<16x128xf32>
    %cst_157 = arith.constant 0.000000e+00 : f32
    %246 = vector.broadcast %cst_157 : f32 to vector<16x128xf32>
    %247 = arith.cmpf oge, %245, %246 : vector<16x128xf32>
    %cst_158 = arith.constant 0.00999999977 : f32
    %248 = vector.broadcast %cst_158 : f32 to vector<16x128xf32>
    %249 = arith.mulf %248, %245 : vector<16x128xf32>
    %250 = arith.select %247, %245, %249 : vector<16x128xi1>, vector<16x128xf32>
    %251 = arith.truncf %250 : vector<16x128xf32> to vector<16x128xbf16>
    %c48_159 = arith.constant 48 : index
    %c256_160 = arith.constant 256 : index
    %252 = vector.load %arg13[%c48_159, %c256_160] : memref<80x512xbf16, #tpu.memory_space<vmem>>, vector<16x128xbf16>
    tpu.vector_store %arg13[%c48_159, %c256_160], %251 {strides = array<i32>} : memref<80x512xbf16, #tpu.memory_space<vmem>>, vector<16x128xbf16>,
    %cst_161 = arith.constant 0.000000e+00 : f32
    %253 = vector.broadcast %cst_161 : f32 to vector<48x128xf32>
    %c0_162 = arith.constant 0 : index
    %c112_163 = arith.constant 112 : index
    %254 = vector.load %arg13[%c0_162, %c112_163] : memref<80x512xbf16, #tpu.memory_space<vmem>>, vector<64x128xbf16>
    %c0_164 = arith.constant 0 : index
    %c0_165 = arith.constant 0 : index
    %c0_166 = arith.constant 0 : index
    %255 = vector.load %arg8[%c0_164, %c0_165, %c0_166] : memref<3x48x64xbf16, #tpu.memory_space<vmem>>, vector<1x48x64xbf16>
    %256 = vector.shape_cast %255 : vector<1x48x64xbf16> to vector<48x64xbf16>
    %cst_167 = arith.constant dense<0.000000e+00> : vector<48x128xf32>
    %257 = tpu.matmul %256, %254, %cst_167 {dimension_numbers = #tpu.dot_dimension_numbers<[1], [0], [0], [1], [0, 0, 1, 1], [], []>} : vector<48x64xbf16>, vector<64x128xbf16>, vector<48x128xf32> -> vector<48x128xf32>
    %258 = arith.addf %253, %257 : vector<48x128xf32>
    %c0_168 = arith.constant 0 : index
    %c128_169 = arith.constant 128 : index
    %259 = vector.load %arg13[%c0_168, %c128_169] : memref<80x512xbf16, #tpu.memory_space<vmem>>, vector<64x128xbf16>
    %c1_170 = arith.constant 1 : index
    %c0_171 = arith.constant 0 : index
    %c0_172 = arith.constant 0 : index
    %260 = vector.load %arg8[%c1_170, %c0_171, %c0_172] : memref<3x48x64xbf16, #tpu.memory_space<vmem>>, vector<1x48x64xbf16>
    %261 = vector.shape_cast %260 : vector<1x48x64xbf16> to vector<48x64xbf16>
    %cst_173 = arith.constant dense<0.000000e+00> : vector<48x128xf32>
    %262 = tpu.matmul %261, %259, %cst_173 {dimension_numbers = #tpu.dot_dimension_numbers<[1], [0], [0], [1], [0, 0, 1, 1], [], []>} : vector<48x64xbf16>, vector<64x128xbf16>, vector<48x128xf32> -> vector<48x128xf32>
    %263 = arith.addf %258, %262 : vector<48x128xf32>
    %c0_174 = arith.constant 0 : index
    %c144_175 = arith.constant 144 : index
    %264 = vector.load %arg13[%c0_174, %c144_175] : memref<80x512xbf16, #tpu.memory_space<vmem>>, vector<64x128xbf16>
    %c2_176 = arith.constant 2 : index
    %c0_177 = arith.constant 0 : index
    %c0_178 = arith.constant 0 : index
    %265 = vector.load %arg8[%c2_176, %c0_177, %c0_178] : memref<3x48x64xbf16, #tpu.memory_space<vmem>>, vector<1x48x64xbf16>
    %266 = vector.shape_cast %265 : vector<1x48x64xbf16> to vector<48x64xbf16>
    %cst_179 = arith.constant dense<0.000000e+00> : vector<48x128xf32>
    %267 = tpu.matmul %266, %264, %cst_179 {dimension_numbers = #tpu.dot_dimension_numbers<[1], [0], [0], [1], [0, 0, 1, 1], [], []>} : vector<48x64xbf16>, vector<64x128xbf16>, vector<48x128xf32> -> vector<48x128xf32>
    %268 = arith.addf %263, %267 : vector<48x128xf32>
    %269 = vector.extract_strided_slice %268 {offsets = [16, 0], sizes = [16, 128], strides = [1, 1]} : vector<48x128xf32> to vector<16x128xf32>
    %270 = vector.extract_strided_slice %268 {offsets = [0, 0], sizes = [16, 128], strides = [1, 1]} : vector<48x128xf32> to vector<16x128xf32>
    %c1_i32_180 = arith.constant 1 : i32
    %271 = tpu.dynamic_rotate %270 by %c1_i32_180 dim 1 : vector<16x128xf32>, i32 -> vector<16x128xf32>
    %272 = vector.broadcast %26 : vector<1x128xf32> to vector<16x128xf32>
    %273 = arith.mulf %271, %272 : vector<16x128xf32>
    %274 = arith.addf %269, %273 : vector<16x128xf32>
    %275 = vector.extract_strided_slice %268 {offsets = [32, 0], sizes = [16, 128], strides = [1, 1]} : vector<48x128xf32> to vector<16x128xf32>
    %c127_i32_181 = arith.constant 127 : i32
    %276 = tpu.dynamic_rotate %275 by %c127_i32_181 dim 1 : vector<16x128xf32>, i32 -> vector<16x128xf32>
    %277 = vector.broadcast %30 : vector<1x128xf32> to vector<16x128xf32>
    %278 = arith.mulf %276, %277 : vector<16x128xf32>
    %279 = arith.addf %274, %278 : vector<16x128xf32>
    %c0_182 = arith.constant 0 : index
    %c0_183 = arith.constant 0 : index
    %280 = vector.load %arg9[%c0_182, %c0_183] : memref<16x1xf32, #tpu.memory_space<vmem>>, vector<16x1xf32>
    %281 = vector.broadcast %280 : vector<16x1xf32> to vector<16x128xf32>
    %282 = arith.addf %279, %281 : vector<16x128xf32>
    %cst_184 = arith.constant 0.000000e+00 : f32
    %283 = vector.broadcast %cst_184 : f32 to vector<16x128xf32>
    %284 = arith.cmpf oge, %282, %283 : vector<16x128xf32>
    %cst_185 = arith.constant 0.00999999977 : f32
    %285 = vector.broadcast %cst_185 : f32 to vector<16x128xf32>
    %286 = arith.mulf %285, %282 : vector<16x128xf32>
    %287 = arith.select %284, %282, %286 : vector<16x128xi1>, vector<16x128xf32>
    %288 = arith.truncf %287 : vector<16x128xf32> to vector<16x128xbf16>
    %c64 = arith.constant 64 : index
    %c128_186 = arith.constant 128 : index
    %289 = vector.load %arg13[%c64, %c128_186] : memref<80x512xbf16, #tpu.memory_space<vmem>>, vector<16x128xbf16>
    tpu.vector_store %arg13[%c64, %c128_186], %288 {strides = array<i32>} : memref<80x512xbf16, #tpu.memory_space<vmem>>, vector<16x128xbf16>,
    %cst_187 = arith.constant 0.000000e+00 : f32
    %290 = vector.broadcast %cst_187 : f32 to vector<48x128xf32>
    %c0_188 = arith.constant 0 : index
    %c240_189 = arith.constant 240 : index
    %291 = vector.load %arg13[%c0_188, %c240_189] : memref<80x512xbf16, #tpu.memory_space<vmem>>, vector<64x128xbf16>
    %c0_190 = arith.constant 0 : index
    %c0_191 = arith.constant 0 : index
    %c0_192 = arith.constant 0 : index
    %292 = vector.load %arg8[%c0_190, %c0_191, %c0_192] : memref<3x48x64xbf16, #tpu.memory_space<vmem>>, vector<1x48x64xbf16>
    %293 = vector.shape_cast %292 : vector<1x48x64xbf16> to vector<48x64xbf16>
    %cst_193 = arith.constant dense<0.000000e+00> : vector<48x128xf32>
    %294 = tpu.matmul %293, %291, %cst_193 {dimension_numbers = #tpu.dot_dimension_numbers<[1], [0], [0], [1], [0, 0, 1, 1], [], []>} : vector<48x64xbf16>, vector<64x128xbf16>, vector<48x128xf32> -> vector<48x128xf32>
    %295 = arith.addf %290, %294 : vector<48x128xf32>
    %c0_194 = arith.constant 0 : index
    %c256_195 = arith.constant 256 : index
    %296 = vector.load %arg13[%c0_194, %c256_195] : memref<80x512xbf16, #tpu.memory_space<vmem>>, vector<64x128xbf16>
    %c1_196 = arith.constant 1 : index
    %c0_197 = arith.constant 0 : index
    %c0_198 = arith.constant 0 : index
    %297 = vector.load %arg8[%c1_196, %c0_197, %c0_198] : memref<3x48x64xbf16, #tpu.memory_space<vmem>>, vector<1x48x64xbf16>
    %298 = vector.shape_cast %297 : vector<1x48x64xbf16> to vector<48x64xbf16>
    %cst_199 = arith.constant dense<0.000000e+00> : vector<48x128xf32>
    %299 = tpu.matmul %298, %296, %cst_199 {dimension_numbers = #tpu.dot_dimension_numbers<[1], [0], [0], [1], [0, 0, 1, 1], [], []>} : vector<48x64xbf16>, vector<64x128xbf16>, vector<48x128xf32> -> vector<48x128xf32>
    %300 = arith.addf %295, %299 : vector<48x128xf32>
    %c0_200 = arith.constant 0 : index
    %c272_201 = arith.constant 272 : index
    %301 = vector.load %arg13[%c0_200, %c272_201] : memref<80x512xbf16, #tpu.memory_space<vmem>>, vector<64x128xbf16>
    %c2_202 = arith.constant 2 : index
    %c0_203 = arith.constant 0 : index
    %c0_204 = arith.constant 0 : index
    %302 = vector.load %arg8[%c2_202, %c0_203, %c0_204] : memref<3x48x64xbf16, #tpu.memory_space<vmem>>, vector<1x48x64xbf16>
    %303 = vector.shape_cast %302 : vector<1x48x64xbf16> to vector<48x64xbf16>
    %cst_205 = arith.constant dense<0.000000e+00> : vector<48x128xf32>
    %304 = tpu.matmul %303, %301, %cst_205 {dimension_numbers = #tpu.dot_dimension_numbers<[1], [0], [0], [1], [0, 0, 1, 1], [], []>} : vector<48x64xbf16>, vector<64x128xbf16>, vector<48x128xf32> -> vector<48x128xf32>
    %305 = arith.addf %300, %304 : vector<48x128xf32>
    %306 = vector.extract_strided_slice %305 {offsets = [16, 0], sizes = [16, 128], strides = [1, 1]} : vector<48x128xf32> to vector<16x128xf32>
    %307 = vector.extract_strided_slice %305 {offsets = [0, 0], sizes = [16, 128], strides = [1, 1]} : vector<48x128xf32> to vector<16x128xf32>
    %c1_i32_206 = arith.constant 1 : i32
    %308 = tpu.dynamic_rotate %307 by %c1_i32_206 dim 1 : vector<16x128xf32>, i32 -> vector<16x128xf32>
    %309 = vector.broadcast %26 : vector<1x128xf32> to vector<16x128xf32>
    %310 = arith.mulf %308, %309 : vector<16x128xf32>
    %311 = arith.addf %306, %310 : vector<16x128xf32>
    %312 = vector.extract_strided_slice %305 {offsets = [32, 0], sizes = [16, 128], strides = [1, 1]} : vector<48x128xf32> to vector<16x128xf32>
    %c127_i32_207 = arith.constant 127 : i32
    %313 = tpu.dynamic_rotate %312 by %c127_i32_207 dim 1 : vector<16x128xf32>, i32 -> vector<16x128xf32>
    %314 = vector.broadcast %30 : vector<1x128xf32> to vector<16x128xf32>
    %315 = arith.mulf %313, %314 : vector<16x128xf32>
    %316 = arith.addf %311, %315 : vector<16x128xf32>
    %c0_208 = arith.constant 0 : index
    %c0_209 = arith.constant 0 : index
    %317 = vector.load %arg9[%c0_208, %c0_209] : memref<16x1xf32, #tpu.memory_space<vmem>>, vector<16x1xf32>
    %318 = vector.broadcast %317 : vector<16x1xf32> to vector<16x128xf32>
    %319 = arith.addf %316, %318 : vector<16x128xf32>
    %cst_210 = arith.constant 0.000000e+00 : f32
    %320 = vector.broadcast %cst_210 : f32 to vector<16x128xf32>
    %321 = arith.cmpf oge, %319, %320 : vector<16x128xf32>
    %cst_211 = arith.constant 0.00999999977 : f32
    %322 = vector.broadcast %cst_211 : f32 to vector<16x128xf32>
    %323 = arith.mulf %322, %319 : vector<16x128xf32>
    %324 = arith.select %321, %319, %323 : vector<16x128xi1>, vector<16x128xf32>
    %325 = arith.truncf %324 : vector<16x128xf32> to vector<16x128xbf16>
    %c64_212 = arith.constant 64 : index
    %c256_213 = arith.constant 256 : index
    %326 = vector.load %arg13[%c64_212, %c256_213] : memref<80x512xbf16, #tpu.memory_space<vmem>>, vector<16x128xbf16>
    tpu.vector_store %arg13[%c64_212, %c256_213], %325 {strides = array<i32>} : memref<80x512xbf16, #tpu.memory_space<vmem>>, vector<16x128xbf16>,
    %cst_214 = arith.constant 0.000000e+00 : f32
    %327 = vector.broadcast %cst_214 : f32 to vector<48x128xf32>
    %c0_215 = arith.constant 0 : index
    %c112_216 = arith.constant 112 : index
    %328 = vector.load %arg13[%c0_215, %c112_216] : memref<80x512xbf16, #tpu.memory_space<vmem>>, vector<80x128xbf16>
    %c0_217 = arith.constant 0 : index
    %c0_218 = arith.constant 0 : index
    %c0_219 = arith.constant 0 : index
    %329 = vector.load %arg10[%c0_217, %c0_218, %c0_219] : memref<3x48x80xbf16, #tpu.memory_space<vmem>>, vector<1x48x80xbf16>
    %330 = vector.shape_cast %329 : vector<1x48x80xbf16> to vector<48x80xbf16>
    %cst_220 = arith.constant dense<0.000000e+00> : vector<48x128xf32>
    %331 = tpu.matmul %330, %328, %cst_220 {dimension_numbers = #tpu.dot_dimension_numbers<[1], [0], [0], [1], [0, 0, 1, 1], [], []>} : vector<48x80xbf16>, vector<80x128xbf16>, vector<48x128xf32> -> vector<48x128xf32>
    %332 = arith.addf %327, %331 : vector<48x128xf32>
    %c0_221 = arith.constant 0 : index
    %c128_222 = arith.constant 128 : index
    %333 = vector.load %arg13[%c0_221, %c128_222] : memref<80x512xbf16, #tpu.memory_space<vmem>>, vector<80x128xbf16>
    %c1_223 = arith.constant 1 : index
    %c0_224 = arith.constant 0 : index
    %c0_225 = arith.constant 0 : index
    %334 = vector.load %arg10[%c1_223, %c0_224, %c0_225] : memref<3x48x80xbf16, #tpu.memory_space<vmem>>, vector<1x48x80xbf16>
    %335 = vector.shape_cast %334 : vector<1x48x80xbf16> to vector<48x80xbf16>
    %cst_226 = arith.constant dense<0.000000e+00> : vector<48x128xf32>
    %336 = tpu.matmul %335, %333, %cst_226 {dimension_numbers = #tpu.dot_dimension_numbers<[1], [0], [0], [1], [0, 0, 1, 1], [], []>} : vector<48x80xbf16>, vector<80x128xbf16>, vector<48x128xf32> -> vector<48x128xf32>
    %337 = arith.addf %332, %336 : vector<48x128xf32>
    %c0_227 = arith.constant 0 : index
    %c144_228 = arith.constant 144 : index
    %338 = vector.load %arg13[%c0_227, %c144_228] : memref<80x512xbf16, #tpu.memory_space<vmem>>, vector<80x128xbf16>
    %c2_229 = arith.constant 2 : index
    %c0_230 = arith.constant 0 : index
    %c0_231 = arith.constant 0 : index
    %339 = vector.load %arg10[%c2_229, %c0_230, %c0_231] : memref<3x48x80xbf16, #tpu.memory_space<vmem>>, vector<1x48x80xbf16>
    %340 = vector.shape_cast %339 : vector<1x48x80xbf16> to vector<48x80xbf16>
    %cst_232 = arith.constant dense<0.000000e+00> : vector<48x128xf32>
    %341 = tpu.matmul %340, %338, %cst_232 {dimension_numbers = #tpu.dot_dimension_numbers<[1], [0], [0], [1], [0, 0, 1, 1], [], []>} : vector<48x80xbf16>, vector<80x128xbf16>, vector<48x128xf32> -> vector<48x128xf32>
    %342 = arith.addf %337, %341 : vector<48x128xf32>
    %343 = vector.extract_strided_slice %342 {offsets = [16, 0], sizes = [16, 128], strides = [1, 1]} : vector<48x128xf32> to vector<16x128xf32>
    %344 = vector.extract_strided_slice %342 {offsets = [0, 0], sizes = [16, 128], strides = [1, 1]} : vector<48x128xf32> to vector<16x128xf32>
    %c1_i32_233 = arith.constant 1 : i32
    %345 = tpu.dynamic_rotate %344 by %c1_i32_233 dim 1 : vector<16x128xf32>, i32 -> vector<16x128xf32>
    %346 = vector.broadcast %26 : vector<1x128xf32> to vector<16x128xf32>
    %347 = arith.mulf %345, %346 : vector<16x128xf32>
    %348 = arith.addf %343, %347 : vector<16x128xf32>
    %349 = vector.extract_strided_slice %342 {offsets = [32, 0], sizes = [16, 128], strides = [1, 1]} : vector<48x128xf32> to vector<16x128xf32>
    %c127_i32_234 = arith.constant 127 : i32
    %350 = tpu.dynamic_rotate %349 by %c127_i32_234 dim 1 : vector<16x128xf32>, i32 -> vector<16x128xf32>
    %351 = vector.broadcast %30 : vector<1x128xf32> to vector<16x128xf32>
    %352 = arith.mulf %350, %351 : vector<16x128xf32>
    %353 = arith.addf %348, %352 : vector<16x128xf32>
    %c0_235 = arith.constant 0 : index
    %c0_236 = arith.constant 0 : index
    %354 = vector.load %arg11[%c0_235, %c0_236] : memref<16x1xf32, #tpu.memory_space<vmem>>, vector<16x1xf32>
    %355 = vector.broadcast %354 : vector<16x1xf32> to vector<16x128xf32>
    %356 = arith.addf %353, %355 : vector<16x128xf32>
    %c0_237 = arith.constant 0 : index
    %c0_238 = arith.constant 0 : index
    %c0_239 = arith.constant 0 : index
    %357 = vector.load %arg1[%c0_237, %c0_238, %c0_239] : memref<1x16x256xbf16, #tpu.memory_space<vmem>>, vector<1x16x128xbf16>
    %358 = vector.shape_cast %357 : vector<1x16x128xbf16> to vector<16x128xbf16>
    %359 = arith.extf %358 : vector<16x128xbf16> to vector<16x128xf32>
    %cst_240 = arith.constant 2.000000e-01 : f32
    %360 = vector.broadcast %cst_240 : f32 to vector<16x128xf32>
    %361 = arith.mulf %356, %360 : vector<16x128xf32>
    %362 = arith.addf %361, %359 : vector<16x128xf32>
    %363 = arith.truncf %362 : vector<16x128xf32> to vector<16x128xbf16>
    %c0_241 = arith.constant 0 : index
    %c0_242 = arith.constant 0 : index
    %c0_243 = arith.constant 0 : index
    %364 = vector.load %arg12[%c0_241, %c0_242, %c0_243] : memref<1x16x256xbf16, #tpu.memory_space<vmem>>, vector<1x16x128xbf16>
    %365 = vector.shape_cast %364 : vector<1x16x128xbf16> to vector<16x128xbf16>
    %366 = vector.shape_cast %363 : vector<16x128xbf16> to vector<1x16x128xbf16>
    tpu.vector_store %arg12[%c0_241, %c0_242, %c0_243], %366 {strides = array<i32>} : memref<1x16x256xbf16, #tpu.memory_space<vmem>>, vector<1x16x128xbf16>,
    %cst_244 = arith.constant 0.000000e+00 : f32
    %367 = vector.broadcast %cst_244 : f32 to vector<48x128xf32>
    %c0_245 = arith.constant 0 : index
    %c240_246 = arith.constant 240 : index
    %368 = vector.load %arg13[%c0_245, %c240_246] : memref<80x512xbf16, #tpu.memory_space<vmem>>, vector<80x128xbf16>
    %c0_247 = arith.constant 0 : index
    %c0_248 = arith.constant 0 : index
    %c0_249 = arith.constant 0 : index
    %369 = vector.load %arg10[%c0_247, %c0_248, %c0_249] : memref<3x48x80xbf16, #tpu.memory_space<vmem>>, vector<1x48x80xbf16>
    %370 = vector.shape_cast %369 : vector<1x48x80xbf16> to vector<48x80xbf16>
    %cst_250 = arith.constant dense<0.000000e+00> : vector<48x128xf32>
    %371 = tpu.matmul %370, %368, %cst_250 {dimension_numbers = #tpu.dot_dimension_numbers<[1], [0], [0], [1], [0, 0, 1, 1], [], []>} : vector<48x80xbf16>, vector<80x128xbf16>, vector<48x128xf32> -> vector<48x128xf32>
    %372 = arith.addf %367, %371 : vector<48x128xf32>
    %c0_251 = arith.constant 0 : index
    %c256_252 = arith.constant 256 : index
    %373 = vector.load %arg13[%c0_251, %c256_252] : memref<80x512xbf16, #tpu.memory_space<vmem>>, vector<80x128xbf16>
    %c1_253 = arith.constant 1 : index
    %c0_254 = arith.constant 0 : index
    %c0_255 = arith.constant 0 : index
    %374 = vector.load %arg10[%c1_253, %c0_254, %c0_255] : memref<3x48x80xbf16, #tpu.memory_space<vmem>>, vector<1x48x80xbf16>
    %375 = vector.shape_cast %374 : vector<1x48x80xbf16> to vector<48x80xbf16>
    %cst_256 = arith.constant dense<0.000000e+00> : vector<48x128xf32>
    %376 = tpu.matmul %375, %373, %cst_256 {dimension_numbers = #tpu.dot_dimension_numbers<[1], [0], [0], [1], [0, 0, 1, 1], [], []>} : vector<48x80xbf16>, vector<80x128xbf16>, vector<48x128xf32> -> vector<48x128xf32>
    %377 = arith.addf %372, %376 : vector<48x128xf32>
    %c0_257 = arith.constant 0 : index
    %c272_258 = arith.constant 272 : index
    %378 = vector.load %arg13[%c0_257, %c272_258] : memref<80x512xbf16, #tpu.memory_space<vmem>>, vector<80x128xbf16>
    %c2_259 = arith.constant 2 : index
    %c0_260 = arith.constant 0 : index
    %c0_261 = arith.constant 0 : index
    %379 = vector.load %arg10[%c2_259, %c0_260, %c0_261] : memref<3x48x80xbf16, #tpu.memory_space<vmem>>, vector<1x48x80xbf16>
    %380 = vector.shape_cast %379 : vector<1x48x80xbf16> to vector<48x80xbf16>
    %cst_262 = arith.constant dense<0.000000e+00> : vector<48x128xf32>
    %381 = tpu.matmul %380, %378, %cst_262 {dimension_numbers = #tpu.dot_dimension_numbers<[1], [0], [0], [1], [0, 0, 1, 1], [], []>} : vector<48x80xbf16>, vector<80x128xbf16>, vector<48x128xf32> -> vector<48x128xf32>
    %382 = arith.addf %377, %381 : vector<48x128xf32>
    %383 = vector.extract_strided_slice %382 {offsets = [16, 0], sizes = [16, 128], strides = [1, 1]} : vector<48x128xf32> to vector<16x128xf32>
    %384 = vector.extract_strided_slice %382 {offsets = [0, 0], sizes = [16, 128], strides = [1, 1]} : vector<48x128xf32> to vector<16x128xf32>
    %c1_i32_263 = arith.constant 1 : i32
    %385 = tpu.dynamic_rotate %384 by %c1_i32_263 dim 1 : vector<16x128xf32>, i32 -> vector<16x128xf32>
    %386 = vector.broadcast %26 : vector<1x128xf32> to vector<16x128xf32>
    %387 = arith.mulf %385, %386 : vector<16x128xf32>
    %388 = arith.addf %383, %387 : vector<16x128xf32>
    %389 = vector.extract_strided_slice %382 {offsets = [32, 0], sizes = [16, 128], strides = [1, 1]} : vector<48x128xf32> to vector<16x128xf32>
    %c127_i32_264 = arith.constant 127 : i32
    %390 = tpu.dynamic_rotate %389 by %c127_i32_264 dim 1 : vector<16x128xf32>, i32 -> vector<16x128xf32>
    %391 = vector.broadcast %30 : vector<1x128xf32> to vector<16x128xf32>
    %392 = arith.mulf %390, %391 : vector<16x128xf32>
    %393 = arith.addf %388, %392 : vector<16x128xf32>
    %c0_265 = arith.constant 0 : index
    %c0_266 = arith.constant 0 : index
    %394 = vector.load %arg11[%c0_265, %c0_266] : memref<16x1xf32, #tpu.memory_space<vmem>>, vector<16x1xf32>
    %395 = vector.broadcast %394 : vector<16x1xf32> to vector<16x128xf32>
    %396 = arith.addf %393, %395 : vector<16x128xf32>
    %c0_267 = arith.constant 0 : index
    %c0_268 = arith.constant 0 : index
    %c128_269 = arith.constant 128 : index
    %397 = vector.load %arg1[%c0_267, %c0_268, %c128_269] : memref<1x16x256xbf16, #tpu.memory_space<vmem>>, vector<1x16x128xbf16>
    %398 = vector.shape_cast %397 : vector<1x16x128xbf16> to vector<16x128xbf16>
    %399 = arith.extf %398 : vector<16x128xbf16> to vector<16x128xf32>
    %cst_270 = arith.constant 2.000000e-01 : f32
    %400 = vector.broadcast %cst_270 : f32 to vector<16x128xf32>
    %401 = arith.mulf %396, %400 : vector<16x128xf32>
    %402 = arith.addf %401, %399 : vector<16x128xf32>
    %403 = arith.truncf %402 : vector<16x128xf32> to vector<16x128xbf16>
    %c0_271 = arith.constant 0 : index
    %c0_272 = arith.constant 0 : index
    %c128_273 = arith.constant 128 : index
    %404 = vector.load %arg12[%c0_271, %c0_272, %c128_273] : memref<1x16x256xbf16, #tpu.memory_space<vmem>>, vector<1x16x128xbf16>
    %405 = vector.shape_cast %404 : vector<1x16x128xbf16> to vector<16x128xbf16>
    %406 = vector.shape_cast %403 : vector<16x128xbf16> to vector<1x16x128xbf16>
    tpu.vector_store %arg12[%c0_271, %c0_272, %c128_273], %406 {strides = array<i32>} : memref<1x16x256xbf16, #tpu.memory_space<vmem>>, vector<1x16x128xbf16>,
    return
  }
  func.func @transform_0(%arg0: i32) -> (i32, i32, i32) {
    %c0_i32 = arith.constant 0 : i32
    %c0_i32_0 = arith.constant 0 : i32
    %c0_i32_1 = arith.constant 0 : i32
    return %arg0, %c0_i32, %c0_i32_0 : i32, i32, i32
  }
  func.func @transform_1(%arg0: i32) -> (i32, i32, i32) {
    %c0_i32 = arith.constant 0 : i32
    %c0_i32_0 = arith.constant 0 : i32
    %c0_i32_1 = arith.constant 0 : i32
    %c0_i32_2 = arith.constant 0 : i32
    return %c0_i32, %c0_i32_0, %c0_i32_1 : i32, i32, i32
  }
  func.func @transform_2(%arg0: i32) -> (i32, i32) {
    %c0_i32 = arith.constant 0 : i32
    %c0_i32_0 = arith.constant 0 : i32
    %c0_i32_1 = arith.constant 0 : i32
    return %c0_i32, %c0_i32_0 : i32, i32
  }
  func.func @transform_3(%arg0: i32) -> (i32, i32, i32) {
    %c0_i32 = arith.constant 0 : i32
    %c0_i32_0 = arith.constant 0 : i32
    %c0_i32_1 = arith.constant 0 : i32
    %c0_i32_2 = arith.constant 0 : i32
    return %c0_i32, %c0_i32_0, %c0_i32_1 : i32, i32, i32
  }
  func.func @transform_4(%arg0: i32) -> (i32, i32) {
    %c0_i32 = arith.constant 0 : i32
    %c0_i32_0 = arith.constant 0 : i32
    %c0_i32_1 = arith.constant 0 : i32
    return %c0_i32, %c0_i32_0 : i32, i32
  }
  func.func @transform_5(%arg0: i32) -> (i32, i32, i32) {
    %c0_i32 = arith.constant 0 : i32
    %c0_i32_0 = arith.constant 0 : i32
    %c0_i32_1 = arith.constant 0 : i32
    %c0_i32_2 = arith.constant 0 : i32
    return %c0_i32, %c0_i32_0, %c0_i32_1 : i32, i32, i32
  }
  func.func @transform_6(%arg0: i32) -> (i32, i32) {
    %c0_i32 = arith.constant 0 : i32
    %c0_i32_0 = arith.constant 0 : i32
    %c0_i32_1 = arith.constant 0 : i32
    return %c0_i32, %c0_i32_0 : i32, i32
  }
  func.func @transform_7(%arg0: i32) -> (i32, i32, i32) {
    %c0_i32 = arith.constant 0 : i32
    %c0_i32_0 = arith.constant 0 : i32
    %c0_i32_1 = arith.constant 0 : i32
    %c0_i32_2 = arith.constant 0 : i32
    return %c0_i32, %c0_i32_0, %c0_i32_1 : i32, i32, i32
  }
  func.func @transform_8(%arg0: i32) -> (i32, i32) {
    %c0_i32 = arith.constant 0 : i32
    %c0_i32_0 = arith.constant 0 : i32
    %c0_i32_1 = arith.constant 0 : i32
    return %c0_i32, %c0_i32_0 : i32, i32
  }
  func.func @transform_9(%arg0: i32) -> (i32, i32, i32) {
    %c0_i32 = arith.constant 0 : i32
    %c0_i32_0 = arith.constant 0 : i32
    %c0_i32_1 = arith.constant 0 : i32
    %c0_i32_2 = arith.constant 0 : i32
    return %c0_i32, %c0_i32_0, %c0_i32_1 : i32, i32, i32
  }
  func.func @transform_10(%arg0: i32) -> (i32, i32) {
    %c0_i32 = arith.constant 0 : i32
    %c0_i32_0 = arith.constant 0 : i32
    %c0_i32_1 = arith.constant 0 : i32
    return %c0_i32, %c0_i32_0 : i32, i32
  }
  func.func @transform_11(%arg0: i32) -> (i32, i32, i32) {
    %c0_i32 = arith.constant 0 : i32
    %c0_i32_0 = arith.constant 0 : i32
    %c0_i32_1 = arith.constant 0 : i32
    return %arg0, %c0_i32, %c0_i32_0 : i32, i32, i32
  }
}

</mosaic_0001>

<llo_original>
// kernel: tpu_custom_call.1
$region0: #{tpu_custom_call.1}
  #allocation0 [shape = 'u32[]', space=smem, size = 0x4, offset = 0x4, fixed_abs, tag = 'smem constant byte address 0x4 - core index']
  #allocation1 [shape = 'u32[72,128]{1,0:T(1,128)}', space=vmem, size = 0x9000, scoped, tag = 'internal scratch']
  #allocation2 [shape = 'bf16[80,512]{1,0:T(8,128)(2,1)}', space=vmem, size = 0x14000, scoped, tag = 'scratch operand']
  %s0 = inlined_call_operand.vmem [shape: bf16[2,16,256], index: 0, kind: input, shape index: {}]
  %s1 = inlined_call_operand.vmem [shape: bf16[3,48,16], index: 1, kind: input, shape index: {}]
  %s2 = inlined_call_operand.vmem [shape: f32[16,1], index: 2, kind: input, shape index: {}]
  %s3 = inlined_call_operand.vmem [shape: bf16[3,48,32], index: 3, kind: input, shape index: {}]
  %s4 = inlined_call_operand.vmem [shape: f32[16,1], index: 4, kind: input, shape index: {}]
  %s5 = inlined_call_operand.vmem [shape: bf16[3,48,48], index: 5, kind: input, shape index: {}]
  %s6 = inlined_call_operand.vmem [shape: f32[16,1], index: 6, kind: input, shape index: {}]
  %s7 = inlined_call_operand.vmem [shape: bf16[3,48,64], index: 7, kind: input, shape index: {}]
  %s8 = inlined_call_operand.vmem [shape: f32[16,1], index: 8, kind: input, shape index: {}]
  %s9 = inlined_call_operand.hbm [shape: bf16[3,48,80], index: 9, kind: input, shape index: {}]
  %s10 = inlined_call_operand.vmem [shape: f32[16,1], index: 10, kind: input, shape index: {}]
  %s11 = inlined_call_operand.hbm [shape: bf16[2,16,256], index: 11, kind: output, shape index: {}]
  %s12 = sld [smem:[#allocation0]]
  $region81: #{tpu_custom_call.1} parent=0
    _
  %s14 = ssub.s32 1, %s12
  %s15 = scalar_select 0, %s14, %s12
  $region1: #{tpu_custom_call.1} parent=0
    #allocation3 [shape = 'u8[36864]{0}', space=vmem, size = 0x9000, scoped, tag = 'input window, operand 9, single buffered']
    #allocation4 [shape = 's32[2]{0}', space=sflag, size = 0x8, scoped, tag = 'scoped memory for tpu_custom_call.1']
    #allocation5 [shape = 's32[2]{0}', space=sflag, size = 0x8, scoped, tag = 'scoped memory for tpu_custom_call.1']
    #allocation6 [shape = 'u8[16384]{0}', space=vmem, size = 0x4000, scoped, tag = 'output window, operand 0']
    %16 = vsyncpa [#allocation4], 0
    %17 = vsyncpa [#allocation5], 0
    %s18 = scalar_lea.sflag [#allocation5], 1
    %19 = vsyncpa %s18, 0
    loop: start=0, step=1, limit=4
    $region2: #{tpu_custom_call.1} parent=1 // loop_pre_header
      _
    $region3: #{tpu_custom_call.1} parent=1 // loop_header
      %s21 = sphi 0, %s25
      %p22 = scmp.ge.s32.totalorder %s21, 4
      %s31 = sphi 0, %s33
      %s34 = sphi 0, %s31
      %s35 = sphi 0, %s34
      %s51 = sphi 0, %s35
      %s55 = sphi 0, %s55
      %s57 = sphi 0, %s55
      %s58 = sphi 0, %s57
      %s72 = sphi 0, %s58
      %s76 = sphi 0, %s76
      %s78 = sphi 0, %s76
      %s79 = sphi 0, %s78
      %s93 = sphi 0, %s79
      %s97 = sphi 0, %s97
      %s99 = sphi 0, %s97
      %s100 = sphi 0, %s99
      %s114 = sphi 0, %s100
      %s118 = sphi 0, %s118
      %s120 = sphi 0, %s118
      %s121 = sphi 0, %s120
      %s135 = sphi 0, %s121
      %s139 = sphi 0, %s139
      %s141 = sphi 0, %s139
      %s142 = sphi 0, %s141
      %s156 = sphi 0, %s142
      %s160 = sphi 0, %s160
      %s162 = sphi 0, %s160
      %s163 = sphi 0, %s162
      %s177 = sphi 0, %s163
      %s181 = sphi 0, %s181
      %s183 = sphi 0, %s181
      %s184 = sphi 0, %s183
      %s198 = sphi 0, %s184
      %s202 = sphi 0, %s202
      %s204 = sphi 0, %s202
      %s205 = sphi 0, %s204
      %s219 = sphi 0, %s205
      %s223 = sphi 0, %s223
      %s225 = sphi 0, %s223
      %s226 = sphi 0, %s225
      %s240 = sphi 0, %s226
      %s244 = sphi 0, %s244
      %s246 = sphi 0, %s244
      %s247 = sphi 0, %s246
      %s261 = sphi 0, %s247
      %s267 = sphi 0, %s269
      %s270 = sphi 0, %s267
      %s271 = sphi 0, %s270
      %s287 = sphi 0, %s271
    $region4: #{tpu_custom_call.1} parent=1 // loop_header_branch
      %24 = sbr.rel (%p22) target = $region8
    $region5: #{tpu_custom_call.1} parent=1 // loop_body
      %s26 = ssub.s32 %s21, 1
      %s27 = ssub.s32 %s21, 2
      %s28 = sadd.s32 %s21, 1
      %s29 = ssub.s32 %s21, %s28
      %p30 = scmp.eq.s32.totalorder %s29, 0
      %s32 = sadd.s32 %s31, 1
      %s33 = scalar_select %p30, %s31, %s32
      %p36 = pneg %p30
      %p37 = scmp.eq.s32.totalorder %s21, 1
      %p38 = por %p36, %p37
      %p39 = scmp.ne.s32.totalorder %s31, %s34
      %p40 = scmp.eq.s32.totalorder %s21, 0
      %p41 = por %p39, %p40
      %p42 = scmp.ne.s32.totalorder %s31, %s34
      %p43 = scmp.eq.s32.totalorder %s26, 1
      %p44 = por %p42, %p43
      %p45 = scmp.ne.s32.totalorder %s34, %s35
      %p46 = scmp.eq.s32.totalorder %s26, 0
      %p47 = por %p45, %p46
      %p48 = scmp.ne.s32.totalorder %s34, %s35
      %p49 = scmp.eq.s32.totalorder %s27, 1
      %p50 = por %p48, %p49
      %p52 = scmp.ne.s32.totalorder %s35, %s51
      %p53 = scmp.eq.s32.totalorder %s27, 0
      %p54 = por %p52, %p53
      %s56 = sadd.s32 %s55, 1
      %p59 = scmp.eq.s32.totalorder %s21, 1
      %p60 = scmp.ne.s32.totalorder %s55, %s57
      %p61 = scmp.eq.s32.totalorder %s21, 0
      %p62 = por %p60, %p61
      %p63 = scmp.ne.s32.totalorder %s55, %s57
      %p64 = scmp.eq.s32.totalorder %s26, 1
      %p65 = por %p63, %p64
      %p66 = scmp.ne.s32.totalorder %s57, %s58
      %p67 = scmp.eq.s32.totalorder %s26, 0
      %p68 = por %p66, %p67
      %p69 = scmp.ne.s32.totalorder %s57, %s58
      %p70 = scmp.eq.s32.totalorder %s27, 1
      %p71 = por %p69, %p70
      %p73 = scmp.ne.s32.totalorder %s58, %s72
      %p74 = scmp.eq.s32.totalorder %s27, 0
      %p75 = por %p73, %p74
      %s77 = sadd.s32 %s76, 1
      %p80 = scmp.eq.s32.totalorder %s21, 1
      %p81 = scmp.ne.s32.totalorder %s76, %s78
      %p82 = scmp.eq.s32.totalorder %s21, 0
      %p83 = por %p81, %p82
      %p84 = scmp.ne.s32.totalorder %s76, %s78
      %p85 = scmp.eq.s32.totalorder %s26, 1
      %p86 = por %p84, %p85
      %p87 = scmp.ne.s32.totalorder %s78, %s79
      %p88 = scmp.eq.s32.totalorder %s26, 0
      %p89 = por %p87, %p88
      %p90 = scmp.ne.s32.totalorder %s78, %s79
      %p91 = scmp.eq.s32.totalorder %s27, 1
      %p92 = por %p90, %p91
      %p94 = scmp.ne.s32.totalorder %s79, %s93
      %p95 = scmp.eq.s32.totalorder %s27, 0
      %p96 = por %p94, %p95
      %s98 = sadd.s32 %s97, 1
      %p101 = scmp.eq.s32.totalorder %s21, 1
      %p102 = scmp.ne.s32.totalorder %s97, %s99
      %p103 = scmp.eq.s32.totalorder %s21, 0
      %p104 = por %p102, %p103
      %p105 = scmp.ne.s32.totalorder %s97, %s99
      %p106 = scmp.eq.s32.totalorder %s26, 1
      %p107 = por %p105, %p106
      %p108 = scmp.ne.s32.totalorder %s99, %s100
      %p109 = scmp.eq.s32.totalorder %s26, 0
      %p110 = por %p108, %p109
      %p111 = scmp.ne.s32.totalorder %s99, %s100
      %p112 = scmp.eq.s32.totalorder %s27, 1
      %p113 = por %p111, %p112
      %p115 = scmp.ne.s32.totalorder %s100, %s114
      %p116 = scmp.eq.s32.totalorder %s27, 0
      %p117 = por %p115, %p116
      %s119 = sadd.s32 %s118, 1
      %p122 = scmp.eq.s32.totalorder %s21, 1
      %p123 = scmp.ne.s32.totalorder %s118, %s120
      %p124 = scmp.eq.s32.totalorder %s21, 0
      %p125 = por %p123, %p124
      %p126 = scmp.ne.s32.totalorder %s118, %s120
      %p127 = scmp.eq.s32.totalorder %s26, 1
      %p128 = por %p126, %p127
      %p129 = scmp.ne.s32.totalorder %s120, %s121
      %p130 = scmp.eq.s32.totalorder %s26, 0
      %p131 = por %p129, %p130
      %p132 = scmp.ne.s32.totalorder %s120, %s121
      %p133 = scmp.eq.s32.totalorder %s27, 1
      %p134 = por %p132, %p133
      %p136 = scmp.ne.s32.totalorder %s121, %s135
      %p137 = scmp.eq.s32.totalorder %s27, 0
      %p138 = por %p136, %p137
      %s140 = sadd.s32 %s139, 1
      %p143 = scmp.eq.s32.totalorder %s21, 1
      %p144 = scmp.ne.s32.totalorder %s139, %s141
      %p145 = scmp.eq.s32.totalorder %s21, 0
      %p146 = por %p144, %p145
      %p147 = scmp.ne.s32.totalorder %s139, %s141
      %p148 = scmp.eq.s32.totalorder %s26, 1
      %p149 = por %p147, %p148
      %p150 = scmp.ne.s32.totalorder %s141, %s142
      %p151 = scmp.eq.s32.totalorder %s26, 0
      %p152 = por %p150, %p151
      %p153 = scmp.ne.s32.totalorder %s141, %s142
      %p154 = scmp.eq.s32.totalorder %s27, 1
      %p155 = por %p153, %p154
      %p157 = scmp.ne.s32.totalorder %s142, %s156
      %p158 = scmp.eq.s32.totalorder %s27, 0
      %p159 = por %p157, %p158
      %s161 = sadd.s32 %s160, 1
      %p164 = scmp.eq.s32.totalorder %s21, 1
      %p165 = scmp.ne.s32.totalorder %s160, %s162
      %p166 = scmp.eq.s32.totalorder %s21, 0
      %p167 = por %p165, %p166
      %p168 = scmp.ne.s32.totalorder %s160, %s162
      %p169 = scmp.eq.s32.totalorder %s26, 1
      %p170 = por %p168, %p169
      %p171 = scmp.ne.s32.totalorder %s162, %s163
      %p172 = scmp.eq.s32.totalorder %s26, 0
      %p173 = por %p171, %p172
      %p174 = scmp.ne.s32.totalorder %s162, %s163
      %p175 = scmp.eq.s32.totalorder %s27, 1
      %p176 = por %p174, %p175
      %p178 = scmp.ne.s32.totalorder %s163, %s177
      %p179 = scmp.eq.s32.totalorder %s27, 0
      %p180 = por %p178, %p179
      %s182 = sadd.s32 %s181, 1
      %p185 = scmp.eq.s32.totalorder %s21, 1
      %p186 = scmp.ne.s32.totalorder %s181, %s183
      %p187 = scmp.eq.s32.totalorder %s21, 0
      %p188 = por %p186, %p187
      %p189 = scmp.ne.s32.totalorder %s181, %s183
      %p190 = scmp.eq.s32.totalorder %s26, 1
      %p191 = por %p189, %p190
      %p192 = scmp.ne.s32.totalorder %s183, %s184
      %p193 = scmp.eq.s32.totalorder %s26, 0
      %p194 = por %p192, %p193
      %p195 = scmp.ne.s32.totalorder %s183, %s184
      %p196 = scmp.eq.s32.totalorder %s27, 1
      %p197 = por %p195, %p196
      %p199 = scmp.ne.s32.totalorder %s184, %s198
      %p200 = scmp.eq.s32.totalorder %s27, 0
      %p201 = por %p199, %p200
      %s203 = sadd.s32 %s202, 1
      %p206 = scmp.eq.s32.totalorder %s21, 1
      %p207 = scmp.ne.s32.totalorder %s202, %s204
      %p208 = scmp.eq.s32.totalorder %s21, 0
      %p209 = por %p207, %p208
      %p210 = scmp.ne.s32.totalorder %s202, %s204
      %p211 = scmp.eq.s32.totalorder %s26, 1
      %p212 = por %p210, %p211
      %p213 = scmp.ne.s32.totalorder %s204, %s205
      %p214 = scmp.eq.s32.totalorder %s26, 0
      %p215 = por %p213, %p214
      %p216 = scmp.ne.s32.totalorder %s204, %s205
      %p217 = scmp.eq.s32.totalorder %s27, 1
      %p218 = por %p216, %p217
      %p220 = scmp.ne.s32.totalorder %s205, %s219
      %p221 = scmp.eq.s32.totalorder %s27, 0
      %p222 = por %p220, %p221
      %s224 = sadd.s32 %s223, 1
      %p227 = scmp.eq.s32.totalorder %s21, 1
      %p228 = scmp.ne.s32.totalorder %s223, %s225
      %p229 = scmp.eq.s32.totalorder %s21, 0
      %p230 = por %p228, %p229
      %p231 = scmp.ne.s32.totalorder %s223, %s225
      %p232 = scmp.eq.s32.totalorder %s26, 1
      %p233 = por %p231, %p232
      %p234 = scmp.ne.s32.totalorder %s225, %s226
      %p235 = scmp.eq.s32.totalorder %s26, 0
      %p236 = por %p234, %p235
      %p237 = scmp.ne.s32.totalorder %s225, %s226
      %p238 = scmp.eq.s32.totalorder %s27, 1
      %p239 = por %p237, %p238
      %p241 = scmp.ne.s32.totalorder %s226, %s240
      %p242 = scmp.eq.s32.totalorder %s27, 0
      %p243 = por %p241, %p242
      %s245 = sadd.s32 %s244, 1
      %p248 = scmp.eq.s32.totalorder %s21, 1
      %p249 = scmp.ne.s32.totalorder %s244, %s246
      %p250 = scmp.eq.s32.totalorder %s21, 0
      %p251 = por %p249, %p250
      %p252 = scmp.ne.s32.totalorder %s244, %s246
      %p253 = scmp.eq.s32.totalorder %s26, 1
      %p254 = por %p252, %p253
      %p255 = scmp.ne.s32.totalorder %s246, %s247
      %p256 = scmp.eq.s32.totalorder %s26, 0
      %p257 = por %p255, %p256
      %p258 = scmp.ne.s32.totalorder %s246, %s247
      %p259 = scmp.eq.s32.totalorder %s27, 1
      %p260 = por %p258, %p259
      %p262 = scmp.ne.s32.totalorder %s247, %s261
      %p263 = scmp.eq.s32.totalorder %s27, 0
      %p264 = por %p262, %p263
      %s265 = ssub.s32 %s21, %s28
      %p266 = scmp.eq.s32.totalorder %s265, 0
      %s268 = sadd.s32 %s267, 1
      %s269 = scalar_select %p266, %s267, %s268
      %p272 = pneg %p266
      %p273 = scmp.eq.s32.totalorder %s21, 1
      %p274 = por %p272, %p273
      %p275 = scmp.ne.s32.totalorder %s267, %s270
      %p276 = scmp.eq.s32.totalorder %s21, 0
      %p277 = por %p275, %p276
      %p278 = scmp.ne.s32.totalorder %s267, %s270
      %p279 = scmp.eq.s32.totalorder %s26, 1
      %p280 = por %p278, %p279
      %p281 = scmp.ne.s32.totalorder %s270, %s271
      %p282 = scmp.eq.s32.totalorder %s26, 0
      %p283 = por %p281, %p282
      %p284 = scmp.ne.s32.totalorder %s270, %s271
      %p285 = scmp.eq.s32.totalorder %s27, 1
      %p286 = por %p284, %p285
      %p288 = scmp.ne.s32.totalorder %s271, %s287
      %p289 = scmp.eq.s32.totalorder %s27, 0
      %p290 = por %p288, %p289
      %p291 = scmp.le.s32.totalorder 1, %s21
      %p292 = scmp.lt.s32.totalorder %s21, 3
      %p293 = pnand %p291, %p292
      %p294 = pneg %p293
      // Predicated region
      $region9: #{tpu_custom_call.1} parent=5 // pred_check
        _
      $region10: #{tpu_custom_call.1} parent=5 // pred_check_branch
        %296 = sbr.rel (%p293) target = $region12
      $region11: #{tpu_custom_call.1} parent=5 // pred_region
        %s297 = ssub.s32 %s21, 1
        // Predicated region
        $region13: #{tpu_custom_call.1} parent=11 // pred_check
          %p298 = pneg %p68
        $region14: #{tpu_custom_call.1} parent=11 // pred_check_branch
          %300 = sbr.rel (%p298) target = $region16
        $region15: #{tpu_custom_call.1} parent=11 // pred_region
          _
        $region16: #{tpu_custom_call.1} parent=11 // pred_fallthru
          _
        // Predicated region
        $region17: #{tpu_custom_call.1} parent=11 // pred_check
          %p301 = pneg %p89
        $region18: #{tpu_custom_call.1} parent=11 // pred_check_branch
          %303 = sbr.rel (%p301) target = $region20
        $region19: #{tpu_custom_call.1} parent=11 // pred_region
          _
        $region20: #{tpu_custom_call.1} parent=11 // pred_fallthru
          _
        // Predicated region
        $region21: #{tpu_custom_call.1} parent=11 // pred_check
          %p304 = pneg %p110
        $region22: #{tpu_custom_call.1} parent=11 // pred_check_branch
          %306 = sbr.rel (%p304) target = $region24
        $region23: #{tpu_custom_call.1} parent=11 // pred_region
          _
        $region24: #{tpu_custom_call.1} parent=11 // pred_fallthru
          _
        // Predicated region
        $region25: #{tpu_custom_call.1} parent=11 // pred_check
          %p307 = pneg %p131
        $region26: #{tpu_custom_call.1} parent=11 // pred_check_branch
          %309 = sbr.rel (%p307) target = $region28
        $region27: #{tpu_custom_call.1} parent=11 // pred_region
          _
        $region28: #{tpu_custom_call.1} parent=11 // pred_fallthru
          _
        // Predicated region
        $region29: #{tpu_custom_call.1} parent=11 // pred_check
          %p310 = pneg %p152
        $region30: #{tpu_custom_call.1} parent=11 // pred_check_branch
          %312 = sbr.rel (%p310) target = $region32
        $region31: #{tpu_custom_call.1} parent=11 // pred_region
          _
        $region32: #{tpu_custom_call.1} parent=11 // pred_fallthru
          _
        // Predicated region
        $region33: #{tpu_custom_call.1} parent=11 // pred_check
          %p313 = pneg %p173
        $region34: #{tpu_custom_call.1} parent=11 // pred_check_branch
          %315 = sbr.rel (%p313) target = $region36
        $region35: #{tpu_custom_call.1} parent=11 // pred_region
          _
        $region36: #{tpu_custom_call.1} parent=11 // pred_fallthru
          _
        // Predicated region
        $region37: #{tpu_custom_call.1} parent=11 // pred_check
          %p316 = pneg %p194
        $region38: #{tpu_custom_call.1} parent=11 // pred_check_branch
          %318 = sbr.rel (%p316) target = $region40
        $region39: #{tpu_custom_call.1} parent=11 // pred_region
          _
        $region40: #{tpu_custom_call.1} parent=11 // pred_fallthru
          _
        // Predicated region
        $region41: #{tpu_custom_call.1} parent=11 // pred_check
          %p319 = pneg %p215
        $region42: #{tpu_custom_call.1} parent=11 // pred_check_branch
          %321 = sbr.rel (%p319) target = $region44
        $region43: #{tpu_custom_call.1} parent=11 // pred_region
          _
        $region44: #{tpu_custom_call.1} parent=11 // pred_fallthru
          _
        // Predicated region
        $region45: #{tpu_custom_call.1} parent=11 // pred_check
          %p322 = pneg %p236
        $region46: #{tpu_custom_call.1} parent=11 // pred_check_branch
          %324 = sbr.rel (%p322) target = $region48
        $region47: #{tpu_custom_call.1} parent=11 // pred_region
          %326 = vsyncadd [#allocation4], 0
          %s327 = sshll.u32 %s9, 4
          %s328 = int_to_ptr.hbm [resolvable:$true] %s327
          %s329 = sshll.u32 [#allocation3], 4
          %s330 = int_to_ptr.vmem [resolvable:$true] %s329
          %335 = dma.hbm_to_vmem [thread:$0]  %s328, 1152, %s330, [#allocation4], 64, 64, 4
        $region48: #{tpu_custom_call.1} parent=11 // pred_fallthru
          _
        // Predicated region
        $region49: #{tpu_custom_call.1} parent=11 // pred_check
          %p336 = pneg %p257
        $region50: #{tpu_custom_call.1} parent=11 // pred_check_branch
          %338 = sbr.rel (%p336) target = $region52
        $region51: #{tpu_custom_call.1} parent=11 // pred_region
          _
        $region52: #{tpu_custom_call.1} parent=11 // pred_fallthru
          _
      $region12: #{tpu_custom_call.1} parent=5 // pred_fallthru
        _
      %p339 = scmp.lt.s32.totalorder %s21, 2
      // Predicated region
      $region53: #{tpu_custom_call.1} parent=5 // pred_check
        %p340 = pneg %p339
      $region54: #{tpu_custom_call.1} parent=5 // pred_check_branch
        %342 = sbr.rel (%p340) target = $region56
      $region55: #{tpu_custom_call.1} parent=5 // pred_region
        // Predicated region
        $region57: #{tpu_custom_call.1} parent=55 // pred_check
          %p343 = pneg %p41
        $region58: #{tpu_custom_call.1} parent=55 // pred_check_branch
          %345 = sbr.rel (%p343) target = $region60
        $region59: #{tpu_custom_call.1} parent=55 // pred_region
          %p346 = scmp.lt.s32.totalorder %s21, 1
          %s347 = scalar_select %p346, %s21, 1
          %s348 = smul.addr %s347, 4
          %s349 = smul.addr %s348, 4
          %s350 = scalar_lea.vmem %s0, %s349
        $region60: #{tpu_custom_call.1} parent=55 // pred_fallthru
          _
      $region56: #{tpu_custom_call.1} parent=5 // pred_fallthru
        _
      %p351 = scmp.le.s32.totalorder 1, %s21
      %p352 = scmp.lt.s32.totalorder %s21, 3
      %p353 = pnand %p351, %p352
      %p354 = pneg %p353
      // Predicated region
      $region61: #{tpu_custom_call.1} parent=5 // pred_check
        _
      $region62: #{tpu_custom_call.1} parent=5 // pred_check_branch
        %356 = sbr.rel (%p353) target = $region64
      $region63: #{tpu_custom_call.1} parent=5 // pred_region
        %s357 = ssub.s32 %s21, 1
        // Predicated region
        $region65: #{tpu_custom_call.1} parent=63 // pred_check
          %p358 = pneg %p236
        $region66: #{tpu_custom_call.1} parent=63 // pred_check_branch
          %360 = sbr.rel (%p358) target = $region68
        $region67: #{tpu_custom_call.1} parent=63 // pred_region
          %362 = dma.done [#allocation4], 1152
        $region68: #{tpu_custom_call.1} parent=63 // pred_fallthru
          _
        %p363 = scmp.lt.s32.totalorder %s26, 1
        %s364 = scalar_select %p363, %s26, 1
        %s365 = smul.addr %s364, 4
        %s366 = smul.addr %s365, 4
        %s367 = scalar_lea.vmem %s0, %s366
        %p368 = pneg %p47
        %p369 = pneg %p44
        %p370 = pneg %p68
        %p371 = pneg %p65
        %p372 = pneg %p89
        %p373 = pneg %p86
        %p374 = pneg %p110
        %p375 = pneg %p107
        %p376 = pneg %p131
        %p377 = pneg %p128
        %p378 = pneg %p152
        %p379 = pneg %p149
        %p380 = pneg %p173
        %p381 = pneg %p170
        %p382 = pneg %p194
        %p383 = pneg %p191
        %p384 = pneg %p215
        %p385 = pneg %p212
        %p386 = pneg %p236
        %p387 = pneg %p233
        %p388 = pneg %p257
        %p389 = pneg %p254
        %p390 = pneg %p283
        %p391 = pneg %p280
        %s392 = sand.u32 %s270, 1
        %s393 = scalar_lea.sflag [#allocation5], %s392
        %s394 = sand.u32 %s270, 1
        %s395 = smul.addr %s394, 16
        %s396 = scalar_lea.vmem [#allocation6], %s395
        %p397 = scmp.lt.s32.totalorder %s26, 1
        %s398 = scalar_select %p397, %s26, 1
        %s399 = smul.addr %s398, 4
        %s400 = smul.addr %s399, 4
        %s401 = scalar_lea.vmem %s0, %s400
        %403 = vst [vmem:[#allocation2] sm:$0xf] 0
        %404 = vst [vmem:[#allocation2 + $0x10] sm:$0xf] 0
        %405 = vst [vmem:[#allocation2 + $0x20] sm:$0xf] 0
        %406 = vst [vmem:[#allocation2 + $0x30] sm:$0xf] 0
        %407 = vst [vmem:[#allocation2 + $0x40] sm:$0xf] 0
        %408 = vst [vmem:[#allocation2 + $0x50] sm:$0xf] 0
        %409 = vst [vmem:[#allocation2 + $0x60] sm:$0xf] 0
        %410 = vst [vmem:[#allocation2 + $0x70] sm:$0xf] 0
        %411 = vst [vmem:[#allocation2 + $0x80] sm:$0xf] 0
        %412 = vst [vmem:[#allocation2 + $0x90] sm:$0xf] 0
        %413 = vst [vmem:[#allocation2 + $0xc] sm:$0xf] 0
        %414 = vst [vmem:[#allocation2 + $0x1c] sm:$0xf] 0
        %415 = vst [vmem:[#allocation2 + $0x2c] sm:$0xf] 0
        %416 = vst [vmem:[#allocation2 + $0x3c] sm:$0xf] 0
        %417 = vst [vmem:[#allocation2 + $0x4c] sm:$0xf] 0
        %418 = vst [vmem:[#allocation2 + $0x5c] sm:$0xf] 0
        %419 = vst [vmem:[#allocation2 + $0x6c] sm:$0xf] 0
        %420 = vst [vmem:[#allocation2 + $0x7c] sm:$0xf] 0
        %421 = vst [vmem:[#allocation2 + $0x8c] sm:$0xf] 0
        %422 = vst [vmem:[#allocation2 + $0x9c] sm:$0xf] 0
        %v423 = vld [vmem:[%s401] sm:$0xff]
        %v424 = vld [vmem:[%s401 + $0x8] sm:$0xff]
        %425 = vst [vmem:[#allocation2 + $0x4] sm:$0xff] %v423
        %426 = vst [vmem:[#allocation2 + $0x14] sm:$0xff] %v424
        %v427 = vlaneseq
        %v428 = vand.u32 %v427, 127
        %vm429 = vcmp.lt.s32.totalorder %v428, 0
        %v430 = vsub.s32 0, %v428
        %v431 = vsel %vm429, %v430, %v428
        %v432 = vshrl.u32 %v431, 4
        %v433 = vand.u32 %v431, 15
        %v434 = vsub.s32 0, %v433
        %v435 = vsel %vm429, %v434, %v433
        %vm436 = vcmp.ne.s32.totalorder %v435, 0
        %vm437 = vcmp.lt.s32.totalorder %v435, 0
        %vm438 = vmand %vm437, %vm436
        %v439 = vadd.s32 %v435, 16
        %v440 = vsel %vm438, %v439, %v435
        %vm441 = vcmp.gt.s32.totalorder %v440, 0
        %v442 = vsel %vm441, 1, 0
        %v443 = vcvt.s32.f32 %v442
        %vm444 = vcmp.lt.s32.totalorder %v440, 15
        %v445 = vsel %vm444, 1, 0
        %v446 = vcvt.s32.f32 %v445
        %v447 = vld [vmem:[#allocation2] sm:$0xff]
        %v448 = vld [vmem:[#allocation2 + $0x10] sm:$0xff]
        %v449 = vld [vmem:[%s1] sm:$0xf]
        %v450 = vld [vmem:[%s1 + $0x4] sm:$0xf]
        %v451 = vld [vmem:[%s1 + $0x8] sm:$0xf]
        %v452 = vld [vmem:[%s1 + $0xc] sm:$0xf]
        %v453 = vld [vmem:[%s1 + $0x10] sm:$0xf]
        %v454 = vld [vmem:[%s1 + $0x14] sm:$0xf]
        %v455 = vld [vmem:[#allocation2 + $0x4] sm:$0xf]
        %v456 = vld [vmem:[#allocation2 + $0x14] sm:$0xf]
        %s457 = scalar_lea.vmem %s1, 24
        %v458 = vld [vmem:[%s457] sm:$0xf]
        %v459 = vld [vmem:[%s457 + $0x4] sm:$0xf]
        %v460 = vld [vmem:[%s457 + $0x8] sm:$0xf]
        %v461 = vld [vmem:[%s457 + $0xc] sm:$0xf]
        %v462 = vld [vmem:[%s457 + $0x10] sm:$0xf]
        %v463 = vld [vmem:[%s457 + $0x14] sm:$0xf]
        %v470 = vunpack.c.l.b16 %v458
        %v471 = vunpack.c.l.b16 %v459
        %v472 = vunpack.c.l.b16 %v460
        %v473 = vunpack.c.l.b16 %v461
        %v474 = vunpack.c.l.b16 %v462
        %v475 = vunpack.c.l.b16 %v463
        %v476 = vpack.c.b16 %v471, %v470
        %v477 = vpack.c.b16 %v473, %v472
        %v478 = vpack.c.b16 %v475, %v474
        %v481 = vunpack.c.l.b16 %v455
        %v482 = vunpack.c.l.b16 %v456
        %v483 = vpack.c.b16 %v482, %v481
        %vm485 = vcmask 130048
        %v487 = vsel %vm485, %v476, 0
        %v490 = vsel %vm485, %v477, 0
        %v493 = vsel %vm485, %v478, 0
        %495 = vmatpush.bf16.msra.mxu0 0
        %496 = vmatpush.bf16.msra.mxu0 0
        %497 = vmatpush.bf16.msra.mxu0 0
        %498 = vmatpush.bf16.msra.mxu0 0
        %499 = vmatpush.bf16.msra.mxu0 0
        %500 = vmatpush.bf16.msra.mxu0 0
        %501 = vmatpush.bf16.msra.mxu0 0
        %502 = vmatpush.bf16.msra.mxu0 %v483
        %503 = vmatmul.bf16.gmra.mxu0 %v487
        %v504 = vpop.f32.mrf.mxu0
        %v505 = vadd.f32 0.0, %v504
        %v506 = vpop.f32.mrf.mxu0
        %v507 = vadd.f32 0.0, %v506
        %508 = vmatmul.bf16.gmra.mxu0 %v490
        %v509 = vpop.f32.mrf.mxu0
        %v510 = vadd.f32 0.0, %v509
        %v511 = vpop.f32.mrf.mxu0
        %v512 = vadd.f32 0.0, %v511
        %513 = vmatmul.bf16.gmra.mxu0 %v493
        %v514 = vpop.f32.mrf.mxu0
        %v515 = vadd.f32 0.0, %v514
        %v516 = vpop.f32.mrf.mxu0
        %v517 = vadd.f32 0.0, %v516
        %518 = vdwg.mxu0
        %v525 = vunpack.c.l.b16 %v449
        %v526 = vunpack.c.l.b16 %v450
        %v527 = vunpack.c.l.b16 %v451
        %v528 = vunpack.c.l.b16 %v452
        %v529 = vunpack.c.l.b16 %v453
        %v530 = vunpack.c.l.b16 %v454
        %v531 = vpack.c.b16 %v526, %v525
        %v532 = vpack.c.b16 %v528, %v527
        %v533 = vpack.c.b16 %v530, %v529
        %v536 = vunpack.c.l.b16 %v447
        %v537 = vunpack.c.h.b16 %v447
        %v538 = vunpack.c.l.b16 %v448
        %v539 = vunpack.c.h.b16 %v448
        %v540 = vpack.c.b16 %v538, %v536
        %v541 = vpack.c.b16 %v539, %v537
        %542 = vrot.lane.b32.xlu0 %v540, 16
        %v543 = vpop.permute.xlu0 %542
        %544 = vrot.lane.b32.xlu0 %v541, 16
        %v545 = vpop.permute.xlu0 %544
        %vm546 = vcmask 130048
        %v547 = vsel %vm546, %v543, %v545
        %v550 = vsel %vm485, %v531, 0
        %v553 = vsel %vm485, %v532, 0
        %v556 = vsel %vm485, %v533, 0
        %558 = vmatpush.bf16.msra.mxu0 0
        %559 = vmatpush.bf16.msra.mxu0 0
        %560 = vmatpush.bf16.msra.mxu0 0
        %561 = vmatpush.bf16.msra.mxu0 0
        %562 = vmatpush.bf16.msra.mxu0 0
        %563 = vmatpush.bf16.msra.mxu0 0
        %564 = vmatpush.bf16.msra.mxu0 0
        %565 = vmatpush.bf16.msra.mxu0 %v547
        %566 = vmatmul.bf16.gmra.mxu0 %v550
        %v567 = vpop.f32.mrf.mxu0
        %v568 = vadd.f32 %v505, %v567
        %v569 = vpop.f32.mrf.mxu0
        %v570 = vadd.f32 %v507, %v569
        %571 = vmatmul.bf16.gmra.mxu0 %v553
        %v572 = vpop.f32.mrf.mxu0
        %v573 = vadd.f32 %v510, %v572
        %v574 = vpop.f32.mrf.mxu0
        %v575 = vadd.f32 %v512, %v574
        %576 = vmatmul.bf16.gmra.mxu0 %v556
        %v577 = vpop.f32.mrf.mxu0
        %v578 = vadd.f32 %v515, %v577
        %v579 = vpop.f32.mrf.mxu0
        %v580 = vadd.f32 %v517, %v579
        %581 = vdwg.mxu0
        %v582 = vld [vmem:[#allocation2 + $0x4] sm:$0xff]
        %v583 = vld [vmem:[#allocation2 + $0x14] sm:$0xff]
        %s584 = scalar_lea.vmem %s1, 48
        %v585 = vld [vmem:[%s584] sm:$0xf]
        %v586 = vld [vmem:[%s584 + $0x4] sm:$0xf]
        %v587 = vld [vmem:[%s584 + $0x8] sm:$0xf]
        %v588 = vld [vmem:[%s584 + $0xc] sm:$0xf]
        %v589 = vld [vmem:[%s584 + $0x10] sm:$0xf]
        %v590 = vld [vmem:[%s584 + $0x14] sm:$0xf]
        %v597 = vunpack.c.l.b16 %v585
        %v598 = vunpack.c.l.b16 %v586
        %v599 = vunpack.c.l.b16 %v587
        %v600 = vunpack.c.l.b16 %v588
        %v601 = vunpack.c.l.b16 %v589
        %v602 = vunpack.c.l.b16 %v590
        %v603 = vpack.c.b16 %v598, %v597
        %v604 = vpack.c.b16 %v600, %v599
        %v605 = vpack.c.b16 %v602, %v601
        %v608 = vunpack.c.l.b16 %v582
        %v609 = vunpack.c.h.b16 %v582
        %v610 = vunpack.c.l.b16 %v583
        %v611 = vunpack.c.h.b16 %v583
        %v612 = vpack.c.b16 %v610, %v608
        %v613 = vpack.c.b16 %v611, %v609
        %614 = vrot.lane.b32.xlu0 %v612, 112
        %v615 = vpop.permute.xlu0 %614
        %616 = vrot.lane.b32.xlu0 %v613, 112
        %v617 = vpop.permute.xlu0 %616
        %vm618 = vcmask 916480
        %v619 = vsel %vm618, %v615, %v617
        %v622 = vsel %vm485, %v603, 0
        %v625 = vsel %vm485, %v604, 0
        %v628 = vsel %vm485, %v605, 0
        %630 = vmatpush.bf16.msra.mxu0 0
        %631 = vmatpush.bf16.msra.mxu0 0
        %632 = vmatpush.bf16.msra.mxu0 0
        %633 = vmatpush.bf16.msra.mxu0 0
        %634 = vmatpush.bf16.msra.mxu0 0
        %635 = vmatpush.bf16.msra.mxu0 0
        %636 = vmatpush.bf16.msra.mxu0 0
        %637 = vmatpush.bf16.msra.mxu0 %v619
        %638 = vmatmul.bf16.gmra.mxu0 %v622
        %v639 = vpop.f32.mrf.mxu0
        %v640 = vadd.f32 0.0, %v639
        %v641 = vpop.f32.mrf.mxu0
        %v642 = vadd.f32 0.0, %v641
        %643 = vmatmul.bf16.gmra.mxu0 %v625
        %v644 = vpop.f32.mrf.mxu0
        %v645 = vadd.f32 0.0, %v644
        %v646 = vpop.f32.mrf.mxu0
        %v647 = vadd.f32 0.0, %v646
        %648 = vmatmul.bf16.gmra.mxu0 %v628
        %v649 = vpop.f32.mrf.mxu0
        %v650 = vadd.f32 0.0, %v649
        %v651 = vpop.f32.mrf.mxu0
        %v652 = vadd.f32 0.0, %v651
        %653 = vdwg.mxu0
        %v654 = vadd.f32 %v568, %v640
        %v655 = vadd.f32 %v570, %v642
        %v656 = vadd.f32 %v573, %v645
        %v657 = vadd.f32 %v575, %v647
        %v658 = vadd.f32 %v578, %v650
        %v659 = vadd.f32 %v580, %v652
        %660 = vrot.lane.b32.xlu0 %v654, 1
        %v661 = vpop.permute.xlu0 %660
        %662 = vrot.lane.b32.xlu0 %v655, 1
        %v663 = vpop.permute.xlu0 %662
        %v664 = vmul.f32 %v661, %v443
        %v665 = vmul.f32 %v663, %v443
        %v666 = vadd.f32 %v656, %v664
        %v667 = vadd.f32 %v657, %v665
        %668 = vrot.lane.b32.xlu0 %v658, 127
        %v669 = vpop.permute.xlu0 %668
        %670 = vrot.lane.b32.xlu0 %v659, 127
        %v671 = vpop.permute.xlu0 %670
        %v672 = vmul.f32 %v669, %v446
        %v673 = vmul.f32 %v671, %v446
        %v674 = vadd.f32 %v666, %v672
        %v675 = vadd.f32 %v667, %v673
        %v676 = vld [vmem:[%s2] sm:$0xff]
        %v677 = vld [vmem:[%s2 + $0x8] sm:$0xff]
        %679 = vset.pattern.permute.xlu0 0
        %680 = vperm.xlu0 %679, %v676
        %v681 = vpop.permute.xlu0 %680
        %684 = vset.pattern.permute.xlu0 0
        %685 = vperm.xlu0 %684, %v677
        %v686 = vpop.permute.xlu0 %685
        %v688 = vadd.f32 %v674, %v681
        %v689 = vadd.f32 %v675, %v686
        %vm690 = vcmp.ge.f32.partialorder %v688, 0.0
        %vm691 = vcmp.ge.f32.partialorder %v689, 0.0
        %v692 = vmul.f32 %v688, 0.01
        %v693 = vmul.f32 %v689, 0.01
        %v694 = vsel %vm690, %v688, %v692
        %v695 = vsel %vm691, %v689, %v693
        %v696 = vpack.c.bf16 %v694, %v694
        %v697 = vpack.c.bf16 %v695, %v695
        %698 = vst [vmem:[#allocation2 + $0x24] sm:$0xf] %v696
        %699 = vst [vmem:[#allocation2 + $0x34] sm:$0xf] %v697
        %v700 = vld [vmem:[#allocation2 + $0x4] sm:$0xff]
        %v701 = vld [vmem:[#allocation2 + $0x14] sm:$0xff]
        %v702 = vld [vmem:[%s1] sm:$0xf]
        %v703 = vld [vmem:[%s1 + $0x4] sm:$0xf]
        %v704 = vld [vmem:[%s1 + $0x8] sm:$0xf]
        %v705 = vld [vmem:[%s1 + $0xc] sm:$0xf]
        %v706 = vld [vmem:[%s1 + $0x10] sm:$0xf]
        %v707 = vld [vmem:[%s1 + $0x14] sm:$0xf]
        %v708 = vld [vmem:[#allocation2 + $0x8] sm:$0xf]
        %v709 = vld [vmem:[#allocation2 + $0x18] sm:$0xf]
        %v710 = vld [vmem:[%s457] sm:$0xf]
        %v711 = vld [vmem:[%s457 + $0x4] sm:$0xf]
        %v712 = vld [vmem:[%s457 + $0x8] sm:$0xf]
        %v713 = vld [vmem:[%s457 + $0xc] sm:$0xf]
        %v714 = vld [vmem:[%s457 + $0x10] sm:$0xf]
        %v715 = vld [vmem:[%s457 + $0x14] sm:$0xf]
        %v722 = vunpack.c.l.b16 %v710
        %v723 = vunpack.c.l.b16 %v711
        %v724 = vunpack.c.l.b16 %v712
        %v725 = vunpack.c.l.b16 %v713
        %v726 = vunpack.c.l.b16 %v714
        %v727 = vunpack.c.l.b16 %v715
        %v728 = vpack.c.b16 %v723, %v722
        %v729 = vpack.c.b16 %v725, %v724
        %v730 = vpack.c.b16 %v727, %v726
        %v733 = vunpack.c.l.b16 %v708
        %v734 = vunpack.c.l.b16 %v709
        %v735 = vpack.c.b16 %v734, %v733
        %v738 = vsel %vm485, %v728, 0
        %v741 = vsel %vm485, %v729, 0
        %v744 = vsel %vm485, %v730, 0
        %746 = vmatpush.bf16.msra.mxu0 0
        %747 = vmatpush.bf16.msra.mxu0 0
        %748 = vmatpush.bf16.msra.mxu0 0
        %749 = vmatpush.bf16.msra.mxu0 0
        %750 = vmatpush.bf16.msra.mxu0 0
        %751 = vmatpush.bf16.msra.mxu0 0
        %752 = vmatpush.bf16.msra.mxu0 0
        %753 = vmatpush.bf16.msra.mxu0 %v735
        %754 = vmatmul.bf16.gmra.mxu0 %v738
        %v755 = vpop.f32.mrf.mxu0
        %v756 = vadd.f32 0.0, %v755
        %v757 = vpop.f32.mrf.mxu0
        %v758 = vadd.f32 0.0, %v757
        %759 = vmatmul.bf16.gmra.mxu0 %v741
        %v760 = vpop.f32.mrf.mxu0
        %v761 = vadd.f32 0.0, %v760
        %v762 = vpop.f32.mrf.mxu0
        %v763 = vadd.f32 0.0, %v762
        %764 = vmatmul.bf16.gmra.mxu0 %v744
        %v765 = vpop.f32.mrf.mxu0
        %v766 = vadd.f32 0.0, %v765
        %v767 = vpop.f32.mrf.mxu0
        %v768 = vadd.f32 0.0, %v767
        %769 = vdwg.mxu0
        %v776 = vunpack.c.l.b16 %v702
        %v777 = vunpack.c.l.b16 %v703
        %v778 = vunpack.c.l.b16 %v704
        %v779 = vunpack.c.l.b16 %v705
        %v780 = vunpack.c.l.b16 %v706
        %v781 = vunpack.c.l.b16 %v707
        %v782 = vpack.c.b16 %v777, %v776
        %v783 = vpack.c.b16 %v779, %v778
        %v784 = vpack.c.b16 %v781, %v780
        %v787 = vunpack.c.l.b16 %v700
        %v788 = vunpack.c.h.b16 %v700
        %v789 = vunpack.c.l.b16 %v701
        %v790 = vunpack.c.h.b16 %v701
        %v791 = vpack.c.b16 %v789, %v787
        %v792 = vpack.c.b16 %v790, %v788
        %793 = vrot.lane.b32.xlu0 %v791, 16
        %v794 = vpop.permute.xlu0 %793
        %795 = vrot.lane.b32.xlu0 %v792, 16
        %v796 = vpop.permute.xlu0 %795
        %v797 = vsel %vm546, %v794, %v796
        %v800 = vsel %vm485, %v782, 0
        %v803 = vsel %vm485, %v783, 0
        %v806 = vsel %vm485, %v784, 0
        %808 = vmatpush.bf16.msra.mxu0 0
        %809 = vmatpush.bf16.msra.mxu0 0
        %810 = vmatpush.bf16.msra.mxu0 0
        %811 = vmatpush.bf16.msra.mxu0 0
        %812 = vmatpush.bf16.msra.mxu0 0
        %813 = vmatpush.bf16.msra.mxu0 0
        %814 = vmatpush.bf16.msra.mxu0 0
        %815 = vmatpush.bf16.msra.mxu0 %v797
        %816 = vmatmul.bf16.gmra.mxu0 %v800
        %v817 = vpop.f32.mrf.mxu0
        %v818 = vadd.f32 %v756, %v817
        %v819 = vpop.f32.mrf.mxu0
        %v820 = vadd.f32 %v758, %v819
        %821 = vmatmul.bf16.gmra.mxu0 %v803
        %v822 = vpop.f32.mrf.mxu0
        %v823 = vadd.f32 %v761, %v822
        %v824 = vpop.f32.mrf.mxu0
        %v825 = vadd.f32 %v763, %v824
        %826 = vmatmul.bf16.gmra.mxu0 %v806
        %v827 = vpop.f32.mrf.mxu0
        %v828 = vadd.f32 %v766, %v827
        %v829 = vpop.f32.mrf.mxu0
        %v830 = vadd.f32 %v768, %v829
        %831 = vdwg.mxu0
        %v832 = vld [vmem:[#allocation2 + $0x8] sm:$0xff]
        %v833 = vld [vmem:[#allocation2 + $0x18] sm:$0xff]
        %v834 = vld [vmem:[%s584] sm:$0xf]
        %v835 = vld [vmem:[%s584 + $0x4] sm:$0xf]
        %v836 = vld [vmem:[%s584 + $0x8] sm:$0xf]
        %v837 = vld [vmem:[%s584 + $0xc] sm:$0xf]
        %v838 = vld [vmem:[%s584 + $0x10] sm:$0xf]
        %v839 = vld [vmem:[%s584 + $0x14] sm:$0xf]
        %v846 = vunpack.c.l.b16 %v834
        %v847 = vunpack.c.l.b16 %v835
        %v848 = vunpack.c.l.b16 %v836
        %v849 = vunpack.c.l.b16 %v837
        %v850 = vunpack.c.l.b16 %v838
        %v851 = vunpack.c.l.b16 %v839
        %v852 = vpack.c.b16 %v847, %v846
        %v853 = vpack.c.b16 %v849, %v848
        %v854 = vpack.c.b16 %v851, %v850
        %v857 = vunpack.c.l.b16 %v832
        %v858 = vunpack.c.h.b16 %v832
        %v859 = vunpack.c.l.b16 %v833
        %v860 = vunpack.c.h.b16 %v833
        %v861 = vpack.c.b16 %v859, %v857
        %v862 = vpack.c.b16 %v860, %v858
        %863 = vrot.lane.b32.xlu0 %v861, 112
        %v864 = vpop.permute.xlu0 %863
        %865 = vrot.lane.b32.xlu0 %v862, 112
        %v866 = vpop.permute.xlu0 %865
        %v867 = vsel %vm618, %v864, %v866
        %v870 = vsel %vm485, %v852, 0
        %v873 = vsel %vm485, %v853, 0
        %v876 = vsel %vm485, %v854, 0
        %878 = vmatpush.bf16.msra.mxu0 0
        %879 = vmatpush.bf16.msra.mxu0 0
        %880 = vmatpush.bf16.msra.mxu0 0
        %881 = vmatpush.bf16.msra.mxu0 0
        %882 = vmatpush.bf16.msra.mxu0 0
        %883 = vmatpush.bf16.msra.mxu0 0
        %884 = vmatpush.bf16.msra.mxu0 0
        %885 = vmatpush.bf16.msra.mxu0 %v867
        %886 = vmatmul.bf16.gmra.mxu0 %v870
        %v887 = vpop.f32.mrf.mxu0
        %v888 = vadd.f32 0.0, %v887
        %v889 = vpop.f32.mrf.mxu0
        %v890 = vadd.f32 0.0, %v889
        %891 = vmatmul.bf16.gmra.mxu0 %v873
        %v892 = vpop.f32.mrf.mxu0
        %v893 = vadd.f32 0.0, %v892
        %v894 = vpop.f32.mrf.mxu0
        %v895 = vadd.f32 0.0, %v894
        %896 = vmatmul.bf16.gmra.mxu0 %v876
        %v897 = vpop.f32.mrf.mxu0
        %v898 = vadd.f32 0.0, %v897
        %v899 = vpop.f32.mrf.mxu0
        %v900 = vadd.f32 0.0, %v899
        %901 = vdwg.mxu0
        %v902 = vadd.f32 %v818, %v888
        %v903 = vadd.f32 %v820, %v890
        %v904 = vadd.f32 %v823, %v893
        %v905 = vadd.f32 %v825, %v895
        %v906 = vadd.f32 %v828, %v898
        %v907 = vadd.f32 %v830, %v900
        %908 = vrot.lane.b32.xlu0 %v902, 1
        %v909 = vpop.permute.xlu0 %908
        %910 = vrot.lane.b32.xlu0 %v903, 1
        %v911 = vpop.permute.xlu0 %910
        %v912 = vmul.f32 %v909, %v443
        %v913 = vmul.f32 %v911, %v443
        %v914 = vadd.f32 %v904, %v912
        %v915 = vadd.f32 %v905, %v913
        %916 = vrot.lane.b32.xlu0 %v906, 127
        %v917 = vpop.permute.xlu0 %916
        %918 = vrot.lane.b32.xlu0 %v907, 127
        %v919 = vpop.permute.xlu0 %918
        %v920 = vmul.f32 %v917, %v446
        %v921 = vmul.f32 %v919, %v446
        %v922 = vadd.f32 %v914, %v920
        %v923 = vadd.f32 %v915, %v921
        %v924 = vld [vmem:[%s2] sm:$0xff]
        %v925 = vld [vmem:[%s2 + $0x8] sm:$0xff]
        %927 = vset.pattern.permute.xlu0 0
        %928 = vperm.xlu0 %927, %v924
        %v929 = vpop.permute.xlu0 %928
        %932 = vset.pattern.permute.xlu0 0
        %933 = vperm.xlu0 %932, %v925
        %v934 = vpop.permute.xlu0 %933
        %v936 = vadd.f32 %v922, %v929
        %v937 = vadd.f32 %v923, %v934
        %vm938 = vcmp.ge.f32.partialorder %v936, 0.0
        %vm939 = vcmp.ge.f32.partialorder %v937, 0.0
        %v940 = vmul.f32 %v936, 0.01
        %v941 = vmul.f32 %v937, 0.01
        %v942 = vsel %vm938, %v936, %v940
        %v943 = vsel %vm939, %v937, %v941
        %v944 = vpack.c.bf16 %v942, %v942
        %v945 = vpack.c.bf16 %v943, %v943
        %946 = vst [vmem:[#allocation2 + $0x28] sm:$0xf] %v944
        %947 = vst [vmem:[#allocation2 + $0x38] sm:$0xf] %v945
        %v948 = vld [vmem:[#allocation2] sm:$0xff]
        %v949 = vld [vmem:[#allocation2 + $0x10] sm:$0xff]
        %v950 = vld [vmem:[#allocation2 + $0x20] sm:$0xff]
        %v951 = vld [vmem:[#allocation2 + $0x30] sm:$0xff]
        %v952 = vld [vmem:[%s3] sm:$0xf]
        %v953 = vld [vmem:[%s3 + $0x4] sm:$0xf]
        %v954 = vld [vmem:[%s3 + $0x8] sm:$0xf]
        %v955 = vld [vmem:[%s3 + $0xc] sm:$0xf]
        %v956 = vld [vmem:[%s3 + $0x10] sm:$0xf]
        %v957 = vld [vmem:[%s3 + $0x14] sm:$0xf]
        %v958 = vld [vmem:[#allocation2 + $0x4] sm:$0xf]
        %v959 = vld [vmem:[#allocation2 + $0x14] sm:$0xf]
        %v960 = vld [vmem:[#allocation2 + $0x24] sm:$0xf]
        %v961 = vld [vmem:[#allocation2 + $0x34] sm:$0xf]
        %s962 = scalar_lea.vmem %s3, 24
        %v963 = vld [vmem:[%s962] sm:$0xf]
        %v964 = vld [vmem:[%s962 + $0x4] sm:$0xf]
        %v965 = vld [vmem:[%s962 + $0x8] sm:$0xf]
        %v966 = vld [vmem:[%s962 + $0xc] sm:$0xf]
        %v967 = vld [vmem:[%s962 + $0x10] sm:$0xf]
        %v968 = vld [vmem:[%s962 + $0x14] sm:$0xf]
        %v975 = vunpack.c.l.b16 %v963
        %v976 = vunpack.c.l.b16 %v964
        %v977 = vunpack.c.l.b16 %v965
        %v978 = vunpack.c.l.b16 %v966
        %v979 = vunpack.c.l.b16 %v967
        %v980 = vunpack.c.l.b16 %v968
        %v981 = vpack.c.b16 %v976, %v975
        %v982 = vpack.c.b16 %v978, %v977
        %v983 = vpack.c.b16 %v980, %v979
        %v988 = vunpack.c.l.b16 %v958
        %v989 = vunpack.c.l.b16 %v959
        %v990 = vunpack.c.l.b16 %v960
        %v991 = vunpack.c.l.b16 %v961
        %v992 = vpack.c.b16 %v989, %v988
        %v993 = vpack.c.b16 %v991, %v990
        %vm996 = vcmask 261120
        %v998 = vsel %vm996, %v981, 0
        %v1001 = vsel %vm996, %v982, 0
        %v1004 = vsel %vm996, %v983, 0
        %1006 = vmatpush.bf16.msra.mxu0 0
        %1007 = vmatpush.bf16.msra.mxu0 0
        %1008 = vmatpush.bf16.msra.mxu0 0
        %1009 = vmatpush.bf16.msra.mxu0 0
        %1010 = vmatpush.bf16.msra.mxu0 0
        %1011 = vmatpush.bf16.msra.mxu0 0
        %1012 = vmatpush.bf16.msra.mxu0 %v993
        %1013 = vmatpush.bf16.msra.mxu0 %v992
        %1014 = vmatmul.bf16.gmra.mxu0 %v998
        %v1015 = vpop.f32.mrf.mxu0
        %v1016 = vadd.f32 0.0, %v1015
        %v1017 = vpop.f32.mrf.mxu0
        %v1018 = vadd.f32 0.0, %v1017
        %1019 = vmatmul.bf16.gmra.mxu0 %v1001
        %v1020 = vpop.f32.mrf.mxu0
        %v1021 = vadd.f32 0.0, %v1020
        %v1022 = vpop.f32.mrf.mxu0
        %v1023 = vadd.f32 0.0, %v1022
        %1024 = vmatmul.bf16.gmra.mxu0 %v1004
        %v1025 = vpop.f32.mrf.mxu0
        %v1026 = vadd.f32 0.0, %v1025
        %v1027 = vpop.f32.mrf.mxu0
        %v1028 = vadd.f32 0.0, %v1027
        %1029 = vdwg.mxu0
        %v1036 = vunpack.c.l.b16 %v952
        %v1037 = vunpack.c.l.b16 %v953
        %v1038 = vunpack.c.l.b16 %v954
        %v1039 = vunpack.c.l.b16 %v955
        %v1040 = vunpack.c.l.b16 %v956
        %v1041 = vunpack.c.l.b16 %v957
        %v1042 = vpack.c.b16 %v1037, %v1036
        %v1043 = vpack.c.b16 %v1039, %v1038
        %v1044 = vpack.c.b16 %v1041, %v1040
        %v1049 = vunpack.c.l.b16 %v948
        %v1050 = vunpack.c.h.b16 %v948
        %v1051 = vunpack.c.l.b16 %v949
        %v1052 = vunpack.c.h.b16 %v949
        %v1053 = vunpack.c.l.b16 %v950
        %v1054 = vunpack.c.h.b16 %v950
        %v1055 = vunpack.c.l.b16 %v951
        %v1056 = vunpack.c.h.b16 %v951
        %v1057 = vpack.c.b16 %v1051, %v1049
        %v1058 = vpack.c.b16 %v1052, %v1050
        %v1059 = vpack.c.b16 %v1055, %v1053
        %v1060 = vpack.c.b16 %v1056, %v1054
        %1061 = vrot.lane.b32.xlu0 %v1057, 16
        %v1062 = vpop.permute.xlu0 %1061
        %1063 = vrot.lane.b32.xlu0 %v1058, 16
        %v1064 = vpop.permute.xlu0 %1063
        %1065 = vrot.lane.b32.xlu0 %v1059, 16
        %v1066 = vpop.permute.xlu0 %1065
        %1067 = vrot.lane.b32.xlu0 %v1060, 16
        %v1068 = vpop.permute.xlu0 %1067
        %v1069 = vsel %vm546, %v1062, %v1064
        %v1070 = vsel %vm546, %v1066, %v1068
        %v1074 = vsel %vm996, %v1042, 0
        %v1077 = vsel %vm996, %v1043, 0
        %v1080 = vsel %vm996, %v1044, 0
        %1082 = vmatpush.bf16.msra.mxu0 0
        %1083 = vmatpush.bf16.msra.mxu0 0
        %1084 = vmatpush.bf16.msra.mxu0 0
        %1085 = vmatpush.bf16.msra.mxu0 0
        %1086 = vmatpush.bf16.msra.mxu0 0
        %1087 = vmatpush.bf16.msra.mxu0 0
        %1088 = vmatpush.bf16.msra.mxu0 %v1070
        %1089 = vmatpush.bf16.msra.mxu0 %v1069
        %1090 = vmatmul.bf16.gmra.mxu0 %v1074
        %v1091 = vpop.f32.mrf.mxu0
        %v1092 = vadd.f32 %v1016, %v1091
        %v1093 = vpop.f32.mrf.mxu0
        %v1094 = vadd.f32 %v1018, %v1093
        %1095 = vmatmul.bf16.gmra.mxu0 %v1077
        %v1096 = vpop.f32.mrf.mxu0
        %v1097 = vadd.f32 %v1021, %v1096
        %v1098 = vpop.f32.mrf.mxu0
        %v1099 = vadd.f32 %v1023, %v1098
        %1100 = vmatmul.bf16.gmra.mxu0 %v1080
        %v1101 = vpop.f32.mrf.mxu0
        %v1102 = vadd.f32 %v1026, %v1101
        %v1103 = vpop.f32.mrf.mxu0
        %v1104 = vadd.f32 %v1028, %v1103
        %1105 = vdwg.mxu0
        %v1106 = vld [vmem:[#allocation2 + $0x4] sm:$0xff]
        %v1107 = vld [vmem:[#allocation2 + $0x14] sm:$0xff]
        %v1108 = vld [vmem:[#allocation2 + $0x24] sm:$0xff]
        %v1109 = vld [vmem:[#allocation2 + $0x34] sm:$0xff]
        %s1110 = scalar_lea.vmem %s3, 48
        %v1111 = vld [vmem:[%s1110] sm:$0xf]
        %v1112 = vld [vmem:[%s1110 + $0x4] sm:$0xf]
        %v1113 = vld [vmem:[%s1110 + $0x8] sm:$0xf]
        %v1114 = vld [vmem:[%s1110 + $0xc] sm:$0xf]
        %v1115 = vld [vmem:[%s1110 + $0x10] sm:$0xf]
        %v1116 = vld [vmem:[%s1110 + $0x14] sm:$0xf]
        %v1123 = vunpack.c.l.b16 %v1111
        %v1124 = vunpack.c.l.b16 %v1112
        %v1125 = vunpack.c.l.b16 %v1113
        %v1126 = vunpack.c.l.b16 %v1114
        %v1127 = vunpack.c.l.b16 %v1115
        %v1128 = vunpack.c.l.b16 %v1116
        %v1129 = vpack.c.b16 %v1124, %v1123
        %v1130 = vpack.c.b16 %v1126, %v1125
        %v1131 = vpack.c.b16 %v1128, %v1127
        %v1136 = vunpack.c.l.b16 %v1106
        %v1137 = vunpack.c.h.b16 %v1106
        %v1138 = vunpack.c.l.b16 %v1107
        %v1139 = vunpack.c.h.b16 %v1107
        %v1140 = vunpack.c.l.b16 %v1108
        %v1141 = vunpack.c.h.b16 %v1108
        %v1142 = vunpack.c.l.b16 %v1109
        %v1143 = vunpack.c.h.b16 %v1109
        %v1144 = vpack.c.b16 %v1138, %v1136
        %v1145 = vpack.c.b16 %v1139, %v1137
        %v1146 = vpack.c.b16 %v1142, %v1140
        %v1147 = vpack.c.b16 %v1143, %v1141
        %1148 = vrot.lane.b32.xlu0 %v1144, 112
        %v1149 = vpop.permute.xlu0 %1148
        %1150 = vrot.lane.b32.xlu0 %v1145, 112
        %v1151 = vpop.permute.xlu0 %1150
        %1152 = vrot.lane.b32.xlu0 %v1146, 112
        %v1153 = vpop.permute.xlu0 %1152
        %1154 = vrot.lane.b32.xlu0 %v1147, 112
        %v1155 = vpop.permute.xlu0 %1154
        %v1156 = vsel %vm618, %v1149, %v1151
        %v1157 = vsel %vm618, %v1153, %v1155
        %v1161 = vsel %vm996, %v1129, 0
        %v1164 = vsel %vm996, %v1130, 0
        %v1167 = vsel %vm996, %v1131, 0
        %1169 = vmatpush.bf16.msra.mxu0 0
        %1170 = vmatpush.bf16.msra.mxu0 0
        %1171 = vmatpush.bf16.msra.mxu0 0
        %1172 = vmatpush.bf16.msra.mxu0 0
        %1173 = vmatpush.bf16.msra.mxu0 0
        %1174 = vmatpush.bf16.msra.mxu0 0
        %1175 = vmatpush.bf16.msra.mxu0 %v1157
        %1176 = vmatpush.bf16.msra.mxu0 %v1156
        %1177 = vmatmul.bf16.gmra.mxu0 %v1161
        %v1178 = vpop.f32.mrf.mxu0
        %v1179 = vadd.f32 0.0, %v1178
        %v1180 = vpop.f32.mrf.mxu0
        %v1181 = vadd.f32 0.0, %v1180
        %1182 = vmatmul.bf16.gmra.mxu0 %v1164
        %v1183 = vpop.f32.mrf.mxu0
        %v1184 = vadd.f32 0.0, %v1183
        %v1185 = vpop.f32.mrf.mxu0
        %v1186 = vadd.f32 0.0, %v1185
        %1187 = vmatmul.bf16.gmra.mxu0 %v1167
        %v1188 = vpop.f32.mrf.mxu0
        %v1189 = vadd.f32 0.0, %v1188
        %v1190 = vpop.f32.mrf.mxu0
        %v1191 = vadd.f32 0.0, %v1190
        %1192 = vdwg.mxu0
        %v1193 = vadd.f32 %v1092, %v1179
        %v1194 = vadd.f32 %v1094, %v1181
        %v1195 = vadd.f32 %v1097, %v1184
        %v1196 = vadd.f32 %v1099, %v1186
        %v1197 = vadd.f32 %v1102, %v1189
        %v1198 = vadd.f32 %v1104, %v1191
        %1199 = vrot.lane.b32.xlu0 %v1193, 1
        %v1200 = vpop.permute.xlu0 %1199
        %1201 = vrot.lane.b32.xlu0 %v1194, 1
        %v1202 = vpop.permute.xlu0 %1201
        %v1203 = vmul.f32 %v1200, %v443
        %v1204 = vmul.f32 %v1202, %v443
        %v1205 = vadd.f32 %v1195, %v1203
        %v1206 = vadd.f32 %v1196, %v1204
        %1207 = vrot.lane.b32.xlu0 %v1197, 127
        %v1208 = vpop.permute.xlu0 %1207
        %1209 = vrot.lane.b32.xlu0 %v1198, 127
        %v1210 = vpop.permute.xlu0 %1209
        %v1211 = vmul.f32 %v1208, %v446
        %v1212 = vmul.f32 %v1210, %v446
        %v1213 = vadd.f32 %v1205, %v1211
        %v1214 = vadd.f32 %v1206, %v1212
        %v1215 = vld [vmem:[%s4] sm:$0xff]
        %v1216 = vld [vmem:[%s4 + $0x8] sm:$0xff]
        %1218 = vset.pattern.permute.xlu0 0
        %1219 = vperm.xlu0 %1218, %v1215
        %v1220 = vpop.permute.xlu0 %1219
        %1223 = vset.pattern.permute.xlu0 0
        %1224 = vperm.xlu0 %1223, %v1216
        %v1225 = vpop.permute.xlu0 %1224
        %v1227 = vadd.f32 %v1213, %v1220
        %v1228 = vadd.f32 %v1214, %v1225
        %vm1229 = vcmp.ge.f32.partialorder %v1227, 0.0
        %vm1230 = vcmp.ge.f32.partialorder %v1228, 0.0
        %v1231 = vmul.f32 %v1227, 0.01
        %v1232 = vmul.f32 %v1228, 0.01
        %v1233 = vsel %vm1229, %v1227, %v1231
        %v1234 = vsel %vm1230, %v1228, %v1232
        %v1235 = vpack.c.bf16 %v1233, %v1233
        %v1236 = vpack.c.bf16 %v1234, %v1234
        %1237 = vst [vmem:[#allocation2 + $0x44] sm:$0xf] %v1235
        %1238 = vst [vmem:[#allocation2 + $0x54] sm:$0xf] %v1236
        %v1239 = vld [vmem:[#allocation2 + $0x4] sm:$0xff]
        %v1240 = vld [vmem:[#allocation2 + $0x14] sm:$0xff]
        %v1241 = vld [vmem:[#allocation2 + $0x24] sm:$0xff]
        %v1242 = vld [vmem:[#allocation2 + $0x34] sm:$0xff]
        %v1243 = vld [vmem:[%s3] sm:$0xf]
        %v1244 = vld [vmem:[%s3 + $0x4] sm:$0xf]
        %v1245 = vld [vmem:[%s3 + $0x8] sm:$0xf]
        %v1246 = vld [vmem:[%s3 + $0xc] sm:$0xf]
        %v1247 = vld [vmem:[%s3 + $0x10] sm:$0xf]
        %v1248 = vld [vmem:[%s3 + $0x14] sm:$0xf]
        %v1249 = vld [vmem:[#allocation2 + $0x8] sm:$0xf]
        %v1250 = vld [vmem:[#allocation2 + $0x18] sm:$0xf]
        %v1251 = vld [vmem:[#allocation2 + $0x28] sm:$0xf]
        %v1252 = vld [vmem:[#allocation2 + $0x38] sm:$0xf]
        %v1253 = vld [vmem:[%s962] sm:$0xf]
        %v1254 = vld [vmem:[%s962 + $0x4] sm:$0xf]
        %v1255 = vld [vmem:[%s962 + $0x8] sm:$0xf]
        %v1256 = vld [vmem:[%s962 + $0xc] sm:$0xf]
        %v1257 = vld [vmem:[%s962 + $0x10] sm:$0xf]
        %v1258 = vld [vmem:[%s962 + $0x14] sm:$0xf]
        %v1265 = vunpack.c.l.b16 %v1253
        %v1266 = vunpack.c.l.b16 %v1254
        %v1267 = vunpack.c.l.b16 %v1255
        %v1268 = vunpack.c.l.b16 %v1256
        %v1269 = vunpack.c.l.b16 %v1257
        %v1270 = vunpack.c.l.b16 %v1258
        %v1271 = vpack.c.b16 %v1266, %v1265
        %v1272 = vpack.c.b16 %v1268, %v1267
        %v1273 = vpack.c.b16 %v1270, %v1269
        %v1278 = vunpack.c.l.b16 %v1249
        %v1279 = vunpack.c.l.b16 %v1250
        %v1280 = vunpack.c.l.b16 %v1251
        %v1281 = vunpack.c.l.b16 %v1252
        %v1282 = vpack.c.b16 %v1279, %v1278
        %v1283 = vpack.c.b16 %v1281, %v1280
        %v1287 = vsel %vm996, %v1271, 0
        %v1290 = vsel %vm996, %v1272, 0
        %v1293 = vsel %vm996, %v1273, 0
        %1295 = vmatpush.bf16.msra.mxu0 0
        %1296 = vmatpush.bf16.msra.mxu0 0
        %1297 = vmatpush.bf16.msra.mxu0 0
        %1298 = vmatpush.bf16.msra.mxu0 0
        %1299 = vmatpush.bf16.msra.mxu0 0
        %1300 = vmatpush.bf16.msra.mxu0 0
        %1301 = vmatpush.bf16.msra.mxu0 %v1283
        %1302 = vmatpush.bf16.msra.mxu0 %v1282
        %1303 = vmatmul.bf16.gmra.mxu0 %v1287
        %v1304 = vpop.f32.mrf.mxu0
        %v1305 = vadd.f32 0.0, %v1304
        %v1306 = vpop.f32.mrf.mxu0
        %v1307 = vadd.f32 0.0, %v1306
        %1308 = vmatmul.bf16.gmra.mxu0 %v1290
        %v1309 = vpop.f32.mrf.mxu0
        %v1310 = vadd.f32 0.0, %v1309
        %v1311 = vpop.f32.mrf.mxu0
        %v1312 = vadd.f32 0.0, %v1311
        %1313 = vmatmul.bf16.gmra.mxu0 %v1293
        %v1314 = vpop.f32.mrf.mxu0
        %v1315 = vadd.f32 0.0, %v1314
        %v1316 = vpop.f32.mrf.mxu0
        %v1317 = vadd.f32 0.0, %v1316
        %1318 = vdwg.mxu0
        %v1325 = vunpack.c.l.b16 %v1243
        %v1326 = vunpack.c.l.b16 %v1244
        %v1327 = vunpack.c.l.b16 %v1245
        %v1328 = vunpack.c.l.b16 %v1246
        %v1329 = vunpack.c.l.b16 %v1247
        %v1330 = vunpack.c.l.b16 %v1248
        %v1331 = vpack.c.b16 %v1326, %v1325
        %v1332 = vpack.c.b16 %v1328, %v1327
        %v1333 = vpack.c.b16 %v1330, %v1329
        %v1338 = vunpack.c.l.b16 %v1239
        %v1339 = vunpack.c.h.b16 %v1239
        %v1340 = vunpack.c.l.b16 %v1240
        %v1341 = vunpack.c.h.b16 %v1240
        %v1342 = vunpack.c.l.b16 %v1241
        %v1343 = vunpack.c.h.b16 %v1241
        %v1344 = vunpack.c.l.b16 %v1242
        %v1345 = vunpack.c.h.b16 %v1242
        %v1346 = vpack.c.b16 %v1340, %v1338
        %v1347 = vpack.c.b16 %v1341, %v1339
        %v1348 = vpack.c.b16 %v1344, %v1342
        %v1349 = vpack.c.b16 %v1345, %v1343
        %1350 = vrot.lane.b32.xlu0 %v1346, 16
        %v1351 = vpop.permute.xlu0 %1350
        %1352 = vrot.lane.b32.xlu0 %v1347, 16
        %v1353 = vpop.permute.xlu0 %1352
        %1354 = vrot.lane.b32.xlu0 %v1348, 16
        %v1355 = vpop.permute.xlu0 %1354
        %1356 = vrot.lane.b32.xlu0 %v1349, 16
        %v1357 = vpop.permute.xlu0 %1356
        %v1358 = vsel %vm546, %v1351, %v1353
        %v1359 = vsel %vm546, %v1355, %v1357
        %v1363 = vsel %vm996, %v1331, 0
        %v1366 = vsel %vm996, %v1332, 0
        %v1369 = vsel %vm996, %v1333, 0
        %1371 = vmatpush.bf16.msra.mxu0 0
        %1372 = vmatpush.bf16.msra.mxu0 0
        %1373 = vmatpush.bf16.msra.mxu0 0
        %1374 = vmatpush.bf16.msra.mxu0 0
        %1375 = vmatpush.bf16.msra.mxu0 0
        %1376 = vmatpush.bf16.msra.mxu0 0
        %1377 = vmatpush.bf16.msra.mxu0 %v1359
        %1378 = vmatpush.bf16.msra.mxu0 %v1358
        %1379 = vmatmul.bf16.gmra.mxu0 %v1363
        %v1380 = vpop.f32.mrf.mxu0
        %v1381 = vadd.f32 %v1305, %v1380
        %v1382 = vpop.f32.mrf.mxu0
        %v1383 = vadd.f32 %v1307, %v1382
        %1384 = vmatmul.bf16.gmra.mxu0 %v1366
        %v1385 = vpop.f32.mrf.mxu0
        %v1386 = vadd.f32 %v1310, %v1385
        %v1387 = vpop.f32.mrf.mxu0
        %v1388 = vadd.f32 %v1312, %v1387
        %1389 = vmatmul.bf16.gmra.mxu0 %v1369
        %v1390 = vpop.f32.mrf.mxu0
        %v1391 = vadd.f32 %v1315, %v1390
        %v1392 = vpop.f32.mrf.mxu0
        %v1393 = vadd.f32 %v1317, %v1392
        %1394 = vdwg.mxu0
        %v1395 = vld [vmem:[#allocation2 + $0x8] sm:$0xff]
        %v1396 = vld [vmem:[#allocation2 + $0x18] sm:$0xff]
        %v1397 = vld [vmem:[#allocation2 + $0x28] sm:$0xff]
        %v1398 = vld [vmem:[#allocation2 + $0x38] sm:$0xff]
        %v1399 = vld [vmem:[%s1110] sm:$0xf]
        %v1400 = vld [vmem:[%s1110 + $0x4] sm:$0xf]
        %v1401 = vld [vmem:[%s1110 + $0x8] sm:$0xf]
        %v1402 = vld [vmem:[%s1110 + $0xc] sm:$0xf]
        %v1403 = vld [vmem:[%s1110 + $0x10] sm:$0xf]
        %v1404 = vld [vmem:[%s1110 + $0x14] sm:$0xf]
        %v1411 = vunpack.c.l.b16 %v1399
        %v1412 = vunpack.c.l.b16 %v1400
        %v1413 = vunpack.c.l.b16 %v1401
        %v1414 = vunpack.c.l.b16 %v1402
        %v1415 = vunpack.c.l.b16 %v1403
        %v1416 = vunpack.c.l.b16 %v1404
        %v1417 = vpack.c.b16 %v1412, %v1411
        %v1418 = vpack.c.b16 %v1414, %v1413
        %v1419 = vpack.c.b16 %v1416, %v1415
        %v1424 = vunpack.c.l.b16 %v1395
        %v1425 = vunpack.c.h.b16 %v1395
        %v1426 = vunpack.c.l.b16 %v1396
        %v1427 = vunpack.c.h.b16 %v1396
        %v1428 = vunpack.c.l.b16 %v1397
        %v1429 = vunpack.c.h.b16 %v1397
        %v1430 = vunpack.c.l.b16 %v1398
        %v1431 = vunpack.c.h.b16 %v1398
        %v1432 = vpack.c.b16 %v1426, %v1424
        %v1433 = vpack.c.b16 %v1427, %v1425
        %v1434 = vpack.c.b16 %v1430, %v1428
        %v1435 = vpack.c.b16 %v1431, %v1429
        %1436 = vrot.lane.b32.xlu0 %v1432, 112
        %v1437 = vpop.permute.xlu0 %1436
        %1438 = vrot.lane.b32.xlu0 %v1433, 112
        %v1439 = vpop.permute.xlu0 %1438
        %1440 = vrot.lane.b32.xlu0 %v1434, 112
        %v1441 = vpop.permute.xlu0 %1440
        %1442 = vrot.lane.b32.xlu0 %v1435, 112
        %v1443 = vpop.permute.xlu0 %1442
        %v1444 = vsel %vm618, %v1437, %v1439
        %v1445 = vsel %vm618, %v1441, %v1443
        %v1449 = vsel %vm996, %v1417, 0
        %v1452 = vsel %vm996, %v1418, 0
        %v1455 = vsel %vm996, %v1419, 0
        %1457 = vmatpush.bf16.msra.mxu0 0
        %1458 = vmatpush.bf16.msra.mxu0 0
        %1459 = vmatpush.bf16.msra.mxu0 0
        %1460 = vmatpush.bf16.msra.mxu0 0
        %1461 = vmatpush.bf16.msra.mxu0 0
        %1462 = vmatpush.bf16.msra.mxu0 0
        %1463 = vmatpush.bf16.msra.mxu0 %v1445
        %1464 = vmatpush.bf16.msra.mxu0 %v1444
        %1465 = vmatmul.bf16.gmra.mxu0 %v1449
        %v1466 = vpop.f32.mrf.mxu0
        %v1467 = vadd.f32 0.0, %v1466
        %v1468 = vpop.f32.mrf.mxu0
        %v1469 = vadd.f32 0.0, %v1468
        %1470 = vmatmul.bf16.gmra.mxu0 %v1452
        %v1471 = vpop.f32.mrf.mxu0
        %v1472 = vadd.f32 0.0, %v1471
        %v1473 = vpop.f32.mrf.mxu0
        %v1474 = vadd.f32 0.0, %v1473
        %1475 = vmatmul.bf16.gmra.mxu0 %v1455
        %v1476 = vpop.f32.mrf.mxu0
        %v1477 = vadd.f32 0.0, %v1476
        %v1478 = vpop.f32.mrf.mxu0
        %v1479 = vadd.f32 0.0, %v1478
        %1480 = vdwg.mxu0
        %v1481 = vadd.f32 %v1381, %v1467
        %v1482 = vadd.f32 %v1383, %v1469
        %v1483 = vadd.f32 %v1386, %v1472
        %v1484 = vadd.f32 %v1388, %v1474
        %v1485 = vadd.f32 %v1391, %v1477
        %v1486 = vadd.f32 %v1393, %v1479
        %1487 = vrot.lane.b32.xlu0 %v1481, 1
        %v1488 = vpop.permute.xlu0 %1487
        %1489 = vrot.lane.b32.xlu0 %v1482, 1
        %v1490 = vpop.permute.xlu0 %1489
        %v1491 = vmul.f32 %v1488, %v443
        %v1492 = vmul.f32 %v1490, %v443
        %v1493 = vadd.f32 %v1483, %v1491
        %v1494 = vadd.f32 %v1484, %v1492
        %1495 = vrot.lane.b32.xlu0 %v1485, 127
        %v1496 = vpop.permute.xlu0 %1495
        %1497 = vrot.lane.b32.xlu0 %v1486, 127
        %v1498 = vpop.permute.xlu0 %1497
        %v1499 = vmul.f32 %v1496, %v446
        %v1500 = vmul.f32 %v1498, %v446
        %v1501 = vadd.f32 %v1493, %v1499
        %v1502 = vadd.f32 %v1494, %v1500
        %v1503 = vld [vmem:[%s4] sm:$0xff]
        %v1504 = vld [vmem:[%s4 + $0x8] sm:$0xff]
        %1506 = vset.pattern.permute.xlu0 0
        %1507 = vperm.xlu0 %1506, %v1503
        %v1508 = vpop.permute.xlu0 %1507
        %1511 = vset.pattern.permute.xlu0 0
        %1512 = vperm.xlu0 %1511, %v1504
        %v1513 = vpop.permute.xlu0 %1512
        %v1515 = vadd.f32 %v1501, %v1508
        %v1516 = vadd.f32 %v1502, %v1513
        %vm1517 = vcmp.ge.f32.partialorder %v1515, 0.0
        %vm1518 = vcmp.ge.f32.partialorder %v1516, 0.0
        %v1519 = vmul.f32 %v1515, 0.01
        %v1520 = vmul.f32 %v1516, 0.01
        %v1521 = vsel %vm1517, %v1515, %v1519
        %v1522 = vsel %vm1518, %v1516, %v1520
        %v1523 = vpack.c.bf16 %v1521, %v1521
        %v1524 = vpack.c.bf16 %v1522, %v1522
        %1525 = vst [vmem:[#allocation2 + $0x48] sm:$0xf] %v1523
        %1526 = vst [vmem:[#allocation2 + $0x58] sm:$0xf] %v1524
        %v1527 = vld [vmem:[#allocation2] sm:$0xff]
        %v1528 = vld [vmem:[#allocation2 + $0x10] sm:$0xff]
        %v1529 = vld [vmem:[#allocation2 + $0x20] sm:$0xff]
        %v1530 = vld [vmem:[#allocation2 + $0x30] sm:$0xff]
        %v1531 = vld [vmem:[#allocation2 + $0x40] sm:$0xff]
        %v1532 = vld [vmem:[#allocation2 + $0x50] sm:$0xff]
        %v1533 = vld [vmem:[%s5] sm:$0xf]
        %v1534 = vld [vmem:[%s5 + $0x4] sm:$0xf]
        %v1535 = vld [vmem:[%s5 + $0x8] sm:$0xf]
        %v1536 = vld [vmem:[%s5 + $0xc] sm:$0xf]
        %v1537 = vld [vmem:[%s5 + $0x10] sm:$0xf]
        %v1538 = vld [vmem:[%s5 + $0x14] sm:$0xf]
        %v1539 = vld [vmem:[#allocation2 + $0x4] sm:$0xf]
        %v1540 = vld [vmem:[#allocation2 + $0x14] sm:$0xf]
        %v1541 = vld [vmem:[#allocation2 + $0x24] sm:$0xf]
        %v1542 = vld [vmem:[#allocation2 + $0x34] sm:$0xf]
        %v1543 = vld [vmem:[#allocation2 + $0x44] sm:$0xf]
        %v1544 = vld [vmem:[#allocation2 + $0x54] sm:$0xf]
        %s1545 = scalar_lea.vmem %s5, 24
        %v1546 = vld [vmem:[%s1545] sm:$0xf]
        %v1547 = vld [vmem:[%s1545 + $0x4] sm:$0xf]
        %v1548 = vld [vmem:[%s1545 + $0x8] sm:$0xf]
        %v1549 = vld [vmem:[%s1545 + $0xc] sm:$0xf]
        %v1550 = vld [vmem:[%s1545 + $0x10] sm:$0xf]
        %v1551 = vld [vmem:[%s1545 + $0x14] sm:$0xf]
        %v1558 = vunpack.c.l.b16 %v1546
        %v1559 = vunpack.c.l.b16 %v1547
        %v1560 = vunpack.c.l.b16 %v1548
        %v1561 = vunpack.c.l.b16 %v1549
        %v1562 = vunpack.c.l.b16 %v1550
        %v1563 = vunpack.c.l.b16 %v1551
        %v1564 = vpack.c.b16 %v1559, %v1558
        %v1565 = vpack.c.b16 %v1561, %v1560
        %v1566 = vpack.c.b16 %v1563, %v1562
        %v1573 = vunpack.c.l.b16 %v1539
        %v1574 = vunpack.c.l.b16 %v1540
        %v1575 = vunpack.c.l.b16 %v1541
        %v1576 = vunpack.c.l.b16 %v1542
        %v1577 = vunpack.c.l.b16 %v1543
        %v1578 = vunpack.c.l.b16 %v1544
        %v1579 = vpack.c.b16 %v1574, %v1573
        %v1580 = vpack.c.b16 %v1576, %v1575
        %v1581 = vpack.c.b16 %v1578, %v1577
        %vm1585 = vcmask 392192
        %v1587 = vsel %vm1585, %v1564, 0
        %v1590 = vsel %vm1585, %v1565, 0
        %v1593 = vsel %vm1585, %v1566, 0
        %1595 = vmatpush.bf16.msra.mxu0 0
        %1596 = vmatpush.bf16.msra.mxu0 0
        %1597 = vmatpush.bf16.msra.mxu0 0
        %1598 = vmatpush.bf16.msra.mxu0 0
        %1599 = vmatpush.bf16.msra.mxu0 0
        %1600 = vmatpush.bf16.msra.mxu0 %v1581
        %1601 = vmatpush.bf16.msra.mxu0 %v1580
        %1602 = vmatpush.bf16.msra.mxu0 %v1579
        %1603 = vmatmul.bf16.gmra.mxu0 %v1587
        %v1604 = vpop.f32.mrf.mxu0
        %v1605 = vadd.f32 0.0, %v1604
        %v1606 = vpop.f32.mrf.mxu0
        %v1607 = vadd.f32 0.0, %v1606
        %1608 = vmatmul.bf16.gmra.mxu0 %v1590
        %v1609 = vpop.f32.mrf.mxu0
        %v1610 = vadd.f32 0.0, %v1609
        %v1611 = vpop.f32.mrf.mxu0
        %v1612 = vadd.f32 0.0, %v1611
        %1613 = vmatmul.bf16.gmra.mxu0 %v1593
        %v1614 = vpop.f32.mrf.mxu0
        %v1615 = vadd.f32 0.0, %v1614
        %v1616 = vpop.f32.mrf.mxu0
        %v1617 = vadd.f32 0.0, %v1616
        %1618 = vdwg.mxu0
        %v1625 = vunpack.c.l.b16 %v1533
        %v1626 = vunpack.c.l.b16 %v1534
        %v1627 = vunpack.c.l.b16 %v1535
        %v1628 = vunpack.c.l.b16 %v1536
        %v1629 = vunpack.c.l.b16 %v1537
        %v1630 = vunpack.c.l.b16 %v1538
        %v1631 = vpack.c.b16 %v1626, %v1625
        %v1632 = vpack.c.b16 %v1628, %v1627
        %v1633 = vpack.c.b16 %v1630, %v1629
        %v1640 = vunpack.c.l.b16 %v1527
        %v1641 = vunpack.c.h.b16 %v1527
        %v1642 = vunpack.c.l.b16 %v1528
        %v1643 = vunpack.c.h.b16 %v1528
        %v1644 = vunpack.c.l.b16 %v1529
        %v1645 = vunpack.c.h.b16 %v1529
        %v1646 = vunpack.c.l.b16 %v1530
        %v1647 = vunpack.c.h.b16 %v1530
        %v1648 = vunpack.c.l.b16 %v1531
        %v1649 = vunpack.c.h.b16 %v1531
        %v1650 = vunpack.c.l.b16 %v1532
        %v1651 = vunpack.c.h.b16 %v1532
        %v1652 = vpack.c.b16 %v1642, %v1640
        %v1653 = vpack.c.b16 %v1643, %v1641
        %v1654 = vpack.c.b16 %v1646, %v1644
        %v1655 = vpack.c.b16 %v1647, %v1645
        %v1656 = vpack.c.b16 %v1650, %v1648
        %v1657 = vpack.c.b16 %v1651, %v1649
        %1658 = vrot.lane.b32.xlu0 %v1652, 16
        %v1659 = vpop.permute.xlu0 %1658
        %1660 = vrot.lane.b32.xlu0 %v1653, 16
        %v1661 = vpop.permute.xlu0 %1660
        %1662 = vrot.lane.b32.xlu0 %v1654, 16
        %v1663 = vpop.permute.xlu0 %1662
        %1664 = vrot.lane.b32.xlu0 %v1655, 16
        %v1665 = vpop.permute.xlu0 %1664
        %1666 = vrot.lane.b32.xlu0 %v1656, 16
        %v1667 = vpop.permute.xlu0 %1666
        %1668 = vrot.lane.b32.xlu0 %v1657, 16
        %v1669 = vpop.permute.xlu0 %1668
        %v1670 = vsel %vm546, %v1659, %v1661
        %v1671 = vsel %vm546, %v1663, %v1665
        %v1672 = vsel %vm546, %v1667, %v1669
        %v1677 = vsel %vm1585, %v1631, 0
        %v1680 = vsel %vm1585, %v1632, 0
        %v1683 = vsel %vm1585, %v1633, 0
        %1685 = vmatpush.bf16.msra.mxu0 0
        %1686 = vmatpush.bf16.msra.mxu0 0
        %1687 = vmatpush.bf16.msra.mxu0 0
        %1688 = vmatpush.bf16.msra.mxu0 0
        %1689 = vmatpush.bf16.msra.mxu0 0
        %1690 = vmatpush.bf16.msra.mxu0 %v1672
        %1691 = vmatpush.bf16.msra.mxu0 %v1671
        %1692 = vmatpush.bf16.msra.mxu0 %v1670
        %1693 = vmatmul.bf16.gmra.mxu0 %v1677
        %v1694 = vpop.f32.mrf.mxu0
        %v1695 = vadd.f32 %v1605, %v1694
        %v1696 = vpop.f32.mrf.mxu0
        %v1697 = vadd.f32 %v1607, %v1696
        %1698 = vmatmul.bf16.gmra.mxu0 %v1680
        %v1699 = vpop.f32.mrf.mxu0
        %v1700 = vadd.f32 %v1610, %v1699
        %v1701 = vpop.f32.mrf.mxu0
        %v1702 = vadd.f32 %v1612, %v1701
        %1703 = vmatmul.bf16.gmra.mxu0 %v1683
        %v1704 = vpop.f32.mrf.mxu0
        %v1705 = vadd.f32 %v1615, %v1704
        %v1706 = vpop.f32.mrf.mxu0
        %v1707 = vadd.f32 %v1617, %v1706
        %1708 = vdwg.mxu0
        %v1709 = vld [vmem:[#allocation2 + $0x4] sm:$0xff]
        %v1710 = vld [vmem:[#allocation2 + $0x14] sm:$0xff]
        %v1711 = vld [vmem:[#allocation2 + $0x24] sm:$0xff]
        %v1712 = vld [vmem:[#allocation2 + $0x34] sm:$0xff]
        %v1713 = vld [vmem:[#allocation2 + $0x44] sm:$0xff]
        %v1714 = vld [vmem:[#allocation2 + $0x54] sm:$0xff]
        %s1715 = scalar_lea.vmem %s5, 48
        %v1716 = vld [vmem:[%s1715] sm:$0xf]
        %v1717 = vld [vmem:[%s1715 + $0x4] sm:$0xf]
        %v1718 = vld [vmem:[%s1715 + $0x8] sm:$0xf]
        %v1719 = vld [vmem:[%s1715 + $0xc] sm:$0xf]
        %v1720 = vld [vmem:[%s1715 + $0x10] sm:$0xf]
        %v1721 = vld [vmem:[%s1715 + $0x14] sm:$0xf]
        %v1728 = vunpack.c.l.b16 %v1716
        %v1729 = vunpack.c.l.b16 %v1717
        %v1730 = vunpack.c.l.b16 %v1718
        %v1731 = vunpack.c.l.b16 %v1719
        %v1732 = vunpack.c.l.b16 %v1720
        %v1733 = vunpack.c.l.b16 %v1721
        %v1734 = vpack.c.b16 %v1729, %v1728
        %v1735 = vpack.c.b16 %v1731, %v1730
        %v1736 = vpack.c.b16 %v1733, %v1732
        %v1743 = vunpack.c.l.b16 %v1709
        %v1744 = vunpack.c.h.b16 %v1709
        %v1745 = vunpack.c.l.b16 %v1710
        %v1746 = vunpack.c.h.b16 %v1710
        %v1747 = vunpack.c.l.b16 %v1711
        %v1748 = vunpack.c.h.b16 %v1711
        %v1749 = vunpack.c.l.b16 %v1712
        %v1750 = vunpack.c.h.b16 %v1712
        %v1751 = vunpack.c.l.b16 %v1713
        %v1752 = vunpack.c.h.b16 %v1713
        %v1753 = vunpack.c.l.b16 %v1714
        %v1754 = vunpack.c.h.b16 %v1714
        %v1755 = vpack.c.b16 %v1745, %v1743
        %v1756 = vpack.c.b16 %v1746, %v1744
        %v1757 = vpack.c.b16 %v1749, %v1747
        %v1758 = vpack.c.b16 %v1750, %v1748
        %v1759 = vpack.c.b16 %v1753, %v1751
        %v1760 = vpack.c.b16 %v1754, %v1752
        %1761 = vrot.lane.b32.xlu0 %v1755, 112
        %v1762 = vpop.permute.xlu0 %1761
        %1763 = vrot.lane.b32.xlu0 %v1756, 112
        %v1764 = vpop.permute.xlu0 %1763
        %1765 = vrot.lane.b32.xlu0 %v1757, 112
        %v1766 = vpop.permute.xlu0 %1765
        %1767 = vrot.lane.b32.xlu0 %v1758, 112
        %v1768 = vpop.permute.xlu0 %1767
        %1769 = vrot.lane.b32.xlu0 %v1759, 112
        %v1770 = vpop.permute.xlu0 %1769
        %1771 = vrot.lane.b32.xlu0 %v1760, 112
        %v1772 = vpop.permute.xlu0 %1771
        %v1773 = vsel %vm618, %v1762, %v1764
        %v1774 = vsel %vm618, %v1766, %v1768
        %v1775 = vsel %vm618, %v1770, %v1772
        %v1780 = vsel %vm1585, %v1734, 0
        %v1783 = vsel %vm1585, %v1735, 0
        %v1786 = vsel %vm1585, %v1736, 0
        %1788 = vmatpush.bf16.msra.mxu0 0
        %1789 = vmatpush.bf16.msra.mxu0 0
        %1790 = vmatpush.bf16.msra.mxu0 0
        %1791 = vmatpush.bf16.msra.mxu0 0
        %1792 = vmatpush.bf16.msra.mxu0 0
        %1793 = vmatpush.bf16.msra.mxu0 %v1775
        %1794 = vmatpush.bf16.msra.mxu0 %v1774
        %1795 = vmatpush.bf16.msra.mxu0 %v1773
        %1796 = vmatmul.bf16.gmra.mxu0 %v1780
        %v1797 = vpop.f32.mrf.mxu0
        %v1798 = vadd.f32 0.0, %v1797
        %v1799 = vpop.f32.mrf.mxu0
        %v1800 = vadd.f32 0.0, %v1799
        %1801 = vmatmul.bf16.gmra.mxu0 %v1783
        %v1802 = vpop.f32.mrf.mxu0
        %v1803 = vadd.f32 0.0, %v1802
        %v1804 = vpop.f32.mrf.mxu0
        %v1805 = vadd.f32 0.0, %v1804
        %1806 = vmatmul.bf16.gmra.mxu0 %v1786
        %v1807 = vpop.f32.mrf.mxu0
        %v1808 = vadd.f32 0.0, %v1807
        %v1809 = vpop.f32.mrf.mxu0
        %v1810 = vadd.f32 0.0, %v1809
        %1811 = vdwg.mxu0
        %v1812 = vadd.f32 %v1695, %v1798
        %v1813 = vadd.f32 %v1697, %v1800
        %v1814 = vadd.f32 %v1700, %v1803
        %v1815 = vadd.f32 %v1702, %v1805
        %v1816 = vadd.f32 %v1705, %v1808
        %v1817 = vadd.f32 %v1707, %v1810
        %1818 = vrot.lane.b32.xlu0 %v1812, 1
        %v1819 = vpop.permute.xlu0 %1818
        %1820 = vrot.lane.b32.xlu0 %v1813, 1
        %v1821 = vpop.permute.xlu0 %1820
        %v1822 = vmul.f32 %v1819, %v443
        %v1823 = vmul.f32 %v1821, %v443
        %v1824 = vadd.f32 %v1814, %v1822
        %v1825 = vadd.f32 %v1815, %v1823
        %1826 = vrot.lane.b32.xlu0 %v1816, 127
        %v1827 = vpop.permute.xlu0 %1826
        %1828 = vrot.lane.b32.xlu0 %v1817, 127
        %v1829 = vpop.permute.xlu0 %1828
        %v1830 = vmul.f32 %v1827, %v446
        %v1831 = vmul.f32 %v1829, %v446
        %v1832 = vadd.f32 %v1824, %v1830
        %v1833 = vadd.f32 %v1825, %v1831
        %v1834 = vld [vmem:[%s6] sm:$0xff]
        %v1835 = vld [vmem:[%s6 + $0x8] sm:$0xff]
        %1837 = vset.pattern.permute.xlu0 0
        %1838 = vperm.xlu0 %1837, %v1834
        %v1839 = vpop.permute.xlu0 %1838
        %1842 = vset.pattern.permute.xlu0 0
        %1843 = vperm.xlu0 %1842, %v1835
        %v1844 = vpop.permute.xlu0 %1843
        %v1846 = vadd.f32 %v1832, %v1839
        %v1847 = vadd.f32 %v1833, %v1844
        %vm1848 = vcmp.ge.f32.partialorder %v1846, 0.0
        %vm1849 = vcmp.ge.f32.partialorder %v1847, 0.0
        %v1850 = vmul.f32 %v1846, 0.01
        %v1851 = vmul.f32 %v1847, 0.01
        %v1852 = vsel %vm1848, %v1846, %v1850
        %v1853 = vsel %vm1849, %v1847, %v1851
        %v1854 = vpack.c.bf16 %v1852, %v1852
        %v1855 = vpack.c.bf16 %v1853, %v1853
        %1856 = vst [vmem:[#allocation2 + $0x64] sm:$0xf] %v1854
        %1857 = vst [vmem:[#allocation2 + $0x74] sm:$0xf] %v1855
        %v1858 = vld [vmem:[#allocation2 + $0x4] sm:$0xff]
        %v1859 = vld [vmem:[#allocation2 + $0x14] sm:$0xff]
        %v1860 = vld [vmem:[#allocation2 + $0x24] sm:$0xff]
        %v1861 = vld [vmem:[#allocation2 + $0x34] sm:$0xff]
        %v1862 = vld [vmem:[#allocation2 + $0x44] sm:$0xff]
        %v1863 = vld [vmem:[#allocation2 + $0x54] sm:$0xff]
        %v1864 = vld [vmem:[%s5] sm:$0xf]
        %v1865 = vld [vmem:[%s5 + $0x4] sm:$0xf]
        %v1866 = vld [vmem:[%s5 + $0x8] sm:$0xf]
        %v1867 = vld [vmem:[%s5 + $0xc] sm:$0xf]
        %v1868 = vld [vmem:[%s5 + $0x10] sm:$0xf]
        %v1869 = vld [vmem:[%s5 + $0x14] sm:$0xf]
        %v1870 = vld [vmem:[#allocation2 + $0x8] sm:$0xf]
        %v1871 = vld [vmem:[#allocation2 + $0x18] sm:$0xf]
        %v1872 = vld [vmem:[#allocation2 + $0x28] sm:$0xf]
        %v1873 = vld [vmem:[#allocation2 + $0x38] sm:$0xf]
        %v1874 = vld [vmem:[#allocation2 + $0x48] sm:$0xf]
        %v1875 = vld [vmem:[#allocation2 + $0x58] sm:$0xf]
        %v1876 = vld [vmem:[%s1545] sm:$0xf]
        %v1877 = vld [vmem:[%s1545 + $0x4] sm:$0xf]
        %v1878 = vld [vmem:[%s1545 + $0x8] sm:$0xf]
        %v1879 = vld [vmem:[%s1545 + $0xc] sm:$0xf]
        %v1880 = vld [vmem:[%s1545 + $0x10] sm:$0xf]
        %v1881 = vld [vmem:[%s1545 + $0x14] sm:$0xf]
        %v1888 = vunpack.c.l.b16 %v1876
        %v1889 = vunpack.c.l.b16 %v1877
        %v1890 = vunpack.c.l.b16 %v1878
        %v1891 = vunpack.c.l.b16 %v1879
        %v1892 = vunpack.c.l.b16 %v1880
        %v1893 = vunpack.c.l.b16 %v1881
        %v1894 = vpack.c.b16 %v1889, %v1888
        %v1895 = vpack.c.b16 %v1891, %v1890
        %v1896 = vpack.c.b16 %v1893, %v1892
        %v1903 = vunpack.c.l.b16 %v1870
        %v1904 = vunpack.c.l.b16 %v1871
        %v1905 = vunpack.c.l.b16 %v1872
        %v1906 = vunpack.c.l.b16 %v1873
        %v1907 = vunpack.c.l.b16 %v1874
        %v1908 = vunpack.c.l.b16 %v1875
        %v1909 = vpack.c.b16 %v1904, %v1903
        %v1910 = vpack.c.b16 %v1906, %v1905
        %v1911 = vpack.c.b16 %v1908, %v1907
        %v1916 = vsel %vm1585, %v1894, 0
        %v1919 = vsel %vm1585, %v1895, 0
        %v1922 = vsel %vm1585, %v1896, 0
        %1924 = vmatpush.bf16.msra.mxu0 0
        %1925 = vmatpush.bf16.msra.mxu0 0
        %1926 = vmatpush.bf16.msra.mxu0 0
        %1927 = vmatpush.bf16.msra.mxu0 0
        %1928 = vmatpush.bf16.msra.mxu0 0
        %1929 = vmatpush.bf16.msra.mxu0 %v1911
        %1930 = vmatpush.bf16.msra.mxu0 %v1910
        %1931 = vmatpush.bf16.msra.mxu0 %v1909
        %1932 = vmatmul.bf16.gmra.mxu0 %v1916
        %v1933 = vpop.f32.mrf.mxu0
        %v1934 = vadd.f32 0.0, %v1933
        %v1935 = vpop.f32.mrf.mxu0
        %v1936 = vadd.f32 0.0, %v1935
        %1937 = vmatmul.bf16.gmra.mxu0 %v1919
        %v1938 = vpop.f32.mrf.mxu0
        %v1939 = vadd.f32 0.0, %v1938
        %v1940 = vpop.f32.mrf.mxu0
        %v1941 = vadd.f32 0.0, %v1940
        %1942 = vmatmul.bf16.gmra.mxu0 %v1922
        %v1943 = vpop.f32.mrf.mxu0
        %v1944 = vadd.f32 0.0, %v1943
        %v1945 = vpop.f32.mrf.mxu0
        %v1946 = vadd.f32 0.0, %v1945
        %1947 = vdwg.mxu0
        %v1954 = vunpack.c.l.b16 %v1864
        %v1955 = vunpack.c.l.b16 %v1865
        %v1956 = vunpack.c.l.b16 %v1866
        %v1957 = vunpack.c.l.b16 %v1867
        %v1958 = vunpack.c.l.b16 %v1868
        %v1959 = vunpack.c.l.b16 %v1869
        %v1960 = vpack.c.b16 %v1955, %v1954
        %v1961 = vpack.c.b16 %v1957, %v1956
        %v1962 = vpack.c.b16 %v1959, %v1958
        %v1969 = vunpack.c.l.b16 %v1858
        %v1970 = vunpack.c.h.b16 %v1858
        %v1971 = vunpack.c.l.b16 %v1859
        %v1972 = vunpack.c.h.b16 %v1859
        %v1973 = vunpack.c.l.b16 %v1860
        %v1974 = vunpack.c.h.b16 %v1860
        %v1975 = vunpack.c.l.b16 %v1861
        %v1976 = vunpack.c.h.b16 %v1861
        %v1977 = vunpack.c.l.b16 %v1862
        %v1978 = vunpack.c.h.b16 %v1862
        %v1979 = vunpack.c.l.b16 %v1863
        %v1980 = vunpack.c.h.b16 %v1863
        %v1981 = vpack.c.b16 %v1971, %v1969
        %v1982 = vpack.c.b16 %v1972, %v1970
        %v1983 = vpack.c.b16 %v1975, %v1973
        %v1984 = vpack.c.b16 %v1976, %v1974
        %v1985 = vpack.c.b16 %v1979, %v1977
        %v1986 = vpack.c.b16 %v1980, %v1978
        %1987 = vrot.lane.b32.xlu0 %v1981, 16
        %v1988 = vpop.permute.xlu0 %1987
        %1989 = vrot.lane.b32.xlu0 %v1982, 16
        %v1990 = vpop.permute.xlu0 %1989
        %1991 = vrot.lane.b32.xlu0 %v1983, 16
        %v1992 = vpop.permute.xlu0 %1991
        %1993 = vrot.lane.b32.xlu0 %v1984, 16
        %v1994 = vpop.permute.xlu0 %1993
        %1995 = vrot.lane.b32.xlu0 %v1985, 16
        %v1996 = vpop.permute.xlu0 %1995
        %1997 = vrot.lane.b32.xlu0 %v1986, 16
        %v1998 = vpop.permute.xlu0 %1997
        %v1999 = vsel %vm546, %v1988, %v1990
        %v2000 = vsel %vm546, %v1992, %v1994
        %v2001 = vsel %vm546, %v1996, %v1998
        %v2006 = vsel %vm1585, %v1960, 0
        %v2009 = vsel %vm1585, %v1961, 0
        %v2012 = vsel %vm1585, %v1962, 0
        %2014 = vmatpush.bf16.msra.mxu0 0
        %2015 = vmatpush.bf16.msra.mxu0 0
        %2016 = vmatpush.bf16.msra.mxu0 0
        %2017 = vmatpush.bf16.msra.mxu0 0
        %2018 = vmatpush.bf16.msra.mxu0 0
        %2019 = vmatpush.bf16.msra.mxu0 %v2001
        %2020 = vmatpush.bf16.msra.mxu0 %v2000
        %2021 = vmatpush.bf16.msra.mxu0 %v1999
        %2022 = vmatmul.bf16.gmra.mxu0 %v2006
        %v2023 = vpop.f32.mrf.mxu0
        %v2024 = vadd.f32 %v1934, %v2023
        %v2025 = vpop.f32.mrf.mxu0
        %v2026 = vadd.f32 %v1936, %v2025
        %2027 = vmatmul.bf16.gmra.mxu0 %v2009
        %v2028 = vpop.f32.mrf.mxu0
        %v2029 = vadd.f32 %v1939, %v2028
        %v2030 = vpop.f32.mrf.mxu0
        %v2031 = vadd.f32 %v1941, %v2030
        %2032 = vmatmul.bf16.gmra.mxu0 %v2012
        %v2033 = vpop.f32.mrf.mxu0
        %v2034 = vadd.f32 %v1944, %v2033
        %v2035 = vpop.f32.mrf.mxu0
        %v2036 = vadd.f32 %v1946, %v2035
        %2037 = vdwg.mxu0
        %v2038 = vld [vmem:[#allocation2 + $0x8] sm:$0xff]
        %v2039 = vld [vmem:[#allocation2 + $0x18] sm:$0xff]
        %v2040 = vld [vmem:[#allocation2 + $0x28] sm:$0xff]
        %v2041 = vld [vmem:[#allocation2 + $0x38] sm:$0xff]
        %v2042 = vld [vmem:[#allocation2 + $0x48] sm:$0xff]
        %v2043 = vld [vmem:[#allocation2 + $0x58] sm:$0xff]
        %v2044 = vld [vmem:[%s1715] sm:$0xf]
        %v2045 = vld [vmem:[%s1715 + $0x4] sm:$0xf]
        %v2046 = vld [vmem:[%s1715 + $0x8] sm:$0xf]
        %v2047 = vld [vmem:[%s1715 + $0xc] sm:$0xf]
        %v2048 = vld [vmem:[%s1715 + $0x10] sm:$0xf]
        %v2049 = vld [vmem:[%s1715 + $0x14] sm:$0xf]
        %v2056 = vunpack.c.l.b16 %v2044
        %v2057 = vunpack.c.l.b16 %v2045
        %v2058 = vunpack.c.l.b16 %v2046
        %v2059 = vunpack.c.l.b16 %v2047
        %v2060 = vunpack.c.l.b16 %v2048
        %v2061 = vunpack.c.l.b16 %v2049
        %v2062 = vpack.c.b16 %v2057, %v2056
        %v2063 = vpack.c.b16 %v2059, %v2058
        %v2064 = vpack.c.b16 %v2061, %v2060
        %v2071 = vunpack.c.l.b16 %v2038
        %v2072 = vunpack.c.h.b16 %v2038
        %v2073 = vunpack.c.l.b16 %v2039
        %v2074 = vunpack.c.h.b16 %v2039
        %v2075 = vunpack.c.l.b16 %v2040
        %v2076 = vunpack.c.h.b16 %v2040
        %v2077 = vunpack.c.l.b16 %v2041
        %v2078 = vunpack.c.h.b16 %v2041
        %v2079 = vunpack.c.l.b16 %v2042
        %v2080 = vunpack.c.h.b16 %v2042
        %v2081 = vunpack.c.l.b16 %v2043
        %v2082 = vunpack.c.h.b16 %v2043
        %v2083 = vpack.c.b16 %v2073, %v2071
        %v2084 = vpack.c.b16 %v2074, %v2072
        %v2085 = vpack.c.b16 %v2077, %v2075
        %v2086 = vpack.c.b16 %v2078, %v2076
        %v2087 = vpack.c.b16 %v2081, %v2079
        %v2088 = vpack.c.b16 %v2082, %v2080
        %2089 = vrot.lane.b32.xlu0 %v2083, 112
        %v2090 = vpop.permute.xlu0 %2089
        %2091 = vrot.lane.b32.xlu0 %v2084, 112
        %v2092 = vpop.permute.xlu0 %2091
        %2093 = vrot.lane.b32.xlu0 %v2085, 112
        %v2094 = vpop.permute.xlu0 %2093
        %2095 = vrot.lane.b32.xlu0 %v2086, 112
        %v2096 = vpop.permute.xlu0 %2095
        %2097 = vrot.lane.b32.xlu0 %v2087, 112
        %v2098 = vpop.permute.xlu0 %2097
        %2099 = vrot.lane.b32.xlu0 %v2088, 112
        %v2100 = vpop.permute.xlu0 %2099
        %v2101 = vsel %vm618, %v2090, %v2092
        %v2102 = vsel %vm618, %v2094, %v2096
        %v2103 = vsel %vm618, %v2098, %v2100
        %v2108 = vsel %vm1585, %v2062, 0
        %v2111 = vsel %vm1585, %v2063, 0
        %v2114 = vsel %vm1585, %v2064, 0
        %2116 = vmatpush.bf16.msra.mxu0 0
        %2117 = vmatpush.bf16.msra.mxu0 0
        %2118 = vmatpush.bf16.msra.mxu0 0
        %2119 = vmatpush.bf16.msra.mxu0 0
        %2120 = vmatpush.bf16.msra.mxu0 0
        %2121 = vmatpush.bf16.msra.mxu0 %v2103
        %2122 = vmatpush.bf16.msra.mxu0 %v2102
        %2123 = vmatpush.bf16.msra.mxu0 %v2101
        %2124 = vmatmul.bf16.gmra.mxu0 %v2108
        %v2125 = vpop.f32.mrf.mxu0
        %v2126 = vadd.f32 0.0, %v2125
        %v2127 = vpop.f32.mrf.mxu0
        %v2128 = vadd.f32 0.0, %v2127
        %2129 = vmatmul.bf16.gmra.mxu0 %v2111
        %v2130 = vpop.f32.mrf.mxu0
        %v2131 = vadd.f32 0.0, %v2130
        %v2132 = vpop.f32.mrf.mxu0
        %v2133 = vadd.f32 0.0, %v2132
        %2134 = vmatmul.bf16.gmra.mxu0 %v2114
        %v2135 = vpop.f32.mrf.mxu0
        %v2136 = vadd.f32 0.0, %v2135
        %v2137 = vpop.f32.mrf.mxu0
        %v2138 = vadd.f32 0.0, %v2137
        %2139 = vdwg.mxu0
        %v2140 = vadd.f32 %v2024, %v2126
        %v2141 = vadd.f32 %v2026, %v2128
        %v2142 = vadd.f32 %v2029, %v2131
        %v2143 = vadd.f32 %v2031, %v2133
        %v2144 = vadd.f32 %v2034, %v2136
        %v2145 = vadd.f32 %v2036, %v2138
        %2146 = vrot.lane.b32.xlu0 %v2140, 1
        %v2147 = vpop.permute.xlu0 %2146
        %2148 = vrot.lane.b32.xlu0 %v2141, 1
        %v2149 = vpop.permute.xlu0 %2148
        %v2150 = vmul.f32 %v2147, %v443
        %v2151 = vmul.f32 %v2149, %v443
        %v2152 = vadd.f32 %v2142, %v2150
        %v2153 = vadd.f32 %v2143, %v2151
        %2154 = vrot.lane.b32.xlu0 %v2144, 127
        %v2155 = vpop.permute.xlu0 %2154
        %2156 = vrot.lane.b32.xlu0 %v2145, 127
        %v2157 = vpop.permute.xlu0 %2156
        %v2158 = vmul.f32 %v2155, %v446
        %v2159 = vmul.f32 %v2157, %v446
        %v2160 = vadd.f32 %v2152, %v2158
        %v2161 = vadd.f32 %v2153, %v2159
        %v2162 = vld [vmem:[%s6] sm:$0xff]
        %v2163 = vld [vmem:[%s6 + $0x8] sm:$0xff]
        %2165 = vset.pattern.permute.xlu0 0
        %2166 = vperm.xlu0 %2165, %v2162
        %v2167 = vpop.permute.xlu0 %2166
        %2170 = vset.pattern.permute.xlu0 0
        %2171 = vperm.xlu0 %2170, %v2163
        %v2172 = vpop.permute.xlu0 %2171
        %v2174 = vadd.f32 %v2160, %v2167
        %v2175 = vadd.f32 %v2161, %v2172
        %vm2176 = vcmp.ge.f32.partialorder %v2174, 0.0
        %vm2177 = vcmp.ge.f32.partialorder %v2175, 0.0
        %v2178 = vmul.f32 %v2174, 0.01
        %v2179 = vmul.f32 %v2175, 0.01
        %v2180 = vsel %vm2176, %v2174, %v2178
        %v2181 = vsel %vm2177, %v2175, %v2179
        %v2182 = vpack.c.bf16 %v2180, %v2180
        %v2183 = vpack.c.bf16 %v2181, %v2181
        %2184 = vst [vmem:[#allocation2 + $0x68] sm:$0xf] %v2182
        %2185 = vst [vmem:[#allocation2 + $0x78] sm:$0xf] %v2183
        %v2186 = vld [vmem:[#allocation2] sm:$0xff]
        %v2187 = vld [vmem:[#allocation2 + $0x10] sm:$0xff]
        %v2188 = vld [vmem:[#allocation2 + $0x20] sm:$0xff]
        %v2189 = vld [vmem:[#allocation2 + $0x30] sm:$0xff]
        %v2190 = vld [vmem:[#allocation2 + $0x40] sm:$0xff]
        %v2191 = vld [vmem:[#allocation2 + $0x50] sm:$0xff]
        %v2192 = vld [vmem:[#allocation2 + $0x60] sm:$0xff]
        %v2193 = vld [vmem:[#allocation2 + $0x70] sm:$0xff]
        %v2194 = vld [vmem:[%s7] sm:$0xf]
        %v2195 = vld [vmem:[%s7 + $0x4] sm:$0xf]
        %v2196 = vld [vmem:[%s7 + $0x8] sm:$0xf]
        %v2197 = vld [vmem:[%s7 + $0xc] sm:$0xf]
        %v2198 = vld [vmem:[%s7 + $0x10] sm:$0xf]
        %v2199 = vld [vmem:[%s7 + $0x14] sm:$0xf]
        %v2200 = vld [vmem:[#allocation2 + $0x4] sm:$0xf]
        %v2201 = vld [vmem:[#allocation2 + $0x14] sm:$0xf]
        %v2202 = vld [vmem:[#allocation2 + $0x24] sm:$0xf]
        %v2203 = vld [vmem:[#allocation2 + $0x34] sm:$0xf]
        %v2204 = vld [vmem:[#allocation2 + $0x44] sm:$0xf]
        %v2205 = vld [vmem:[#allocation2 + $0x54] sm:$0xf]
        %v2206 = vld [vmem:[#allocation2 + $0x64] sm:$0xf]
        %v2207 = vld [vmem:[#allocation2 + $0x74] sm:$0xf]
        %s2208 = scalar_lea.vmem %s7, 24
        %v2209 = vld [vmem:[%s2208] sm:$0xf]
        %v2210 = vld [vmem:[%s2208 + $0x4] sm:$0xf]
        %v2211 = vld [vmem:[%s2208 + $0x8] sm:$0xf]
        %v2212 = vld [vmem:[%s2208 + $0xc] sm:$0xf]
        %v2213 = vld [vmem:[%s2208 + $0x10] sm:$0xf]
        %v2214 = vld [vmem:[%s2208 + $0x14] sm:$0xf]
        %v2221 = vunpack.c.l.b16 %v2209
        %v2222 = vunpack.c.l.b16 %v2210
        %v2223 = vunpack.c.l.b16 %v2211
        %v2224 = vunpack.c.l.b16 %v2212
        %v2225 = vunpack.c.l.b16 %v2213
        %v2226 = vunpack.c.l.b16 %v2214
        %v2227 = vpack.c.b16 %v2222, %v2221
        %v2228 = vpack.c.b16 %v2224, %v2223
        %v2229 = vpack.c.b16 %v2226, %v2225
        %v2238 = vunpack.c.l.b16 %v2200
        %v2239 = vunpack.c.l.b16 %v2201
        %v2240 = vunpack.c.l.b16 %v2202
        %v2241 = vunpack.c.l.b16 %v2203
        %v2242 = vunpack.c.l.b16 %v2204
        %v2243 = vunpack.c.l.b16 %v2205
        %v2244 = vunpack.c.l.b16 %v2206
        %v2245 = vunpack.c.l.b16 %v2207
        %v2246 = vpack.c.b16 %v2239, %v2238
        %v2247 = vpack.c.b16 %v2241, %v2240
        %v2248 = vpack.c.b16 %v2243, %v2242
        %v2249 = vpack.c.b16 %v2245, %v2244
        %vm2254 = vcmask 523264
        %v2256 = vsel %vm2254, %v2227, 0
        %v2259 = vsel %vm2254, %v2228, 0
        %v2262 = vsel %vm2254, %v2229, 0
        %2264 = vmatpush.bf16.msra.mxu0 0
        %2265 = vmatpush.bf16.msra.mxu0 0
        %2266 = vmatpush.bf16.msra.mxu0 0
        %2267 = vmatpush.bf16.msra.mxu0 0
        %2268 = vmatpush.bf16.msra.mxu0 %v2249
        %2269 = vmatpush.bf16.msra.mxu0 %v2248
        %2270 = vmatpush.bf16.msra.mxu0 %v2247
        %2271 = vmatpush.bf16.msra.mxu0 %v2246
        %2272 = vmatmul.bf16.gmra.mxu0 %v2256
        %v2273 = vpop.f32.mrf.mxu0
        %v2274 = vadd.f32 0.0, %v2273
        %v2275 = vpop.f32.mrf.mxu0
        %v2276 = vadd.f32 0.0, %v2275
        %2277 = vmatmul.bf16.gmra.mxu0 %v2259
        %v2278 = vpop.f32.mrf.mxu0
        %v2279 = vadd.f32 0.0, %v2278
        %v2280 = vpop.f32.mrf.mxu0
        %v2281 = vadd.f32 0.0, %v2280
        %2282 = vmatmul.bf16.gmra.mxu0 %v2262
        %v2283 = vpop.f32.mrf.mxu0
        %v2284 = vadd.f32 0.0, %v2283
        %v2285 = vpop.f32.mrf.mxu0
        %v2286 = vadd.f32 0.0, %v2285
        %2287 = vdwg.mxu0
        %v2294 = vunpack.c.l.b16 %v2194
        %v2295 = vunpack.c.l.b16 %v2195
        %v2296 = vunpack.c.l.b16 %v2196
        %v2297 = vunpack.c.l.b16 %v2197
        %v2298 = vunpack.c.l.b16 %v2198
        %v2299 = vunpack.c.l.b16 %v2199
        %v2300 = vpack.c.b16 %v2295, %v2294
        %v2301 = vpack.c.b16 %v2297, %v2296
        %v2302 = vpack.c.b16 %v2299, %v2298
        %v2311 = vunpack.c.l.b16 %v2186
        %v2312 = vunpack.c.h.b16 %v2186
        %v2313 = vunpack.c.l.b16 %v2187
        %v2314 = vunpack.c.h.b16 %v2187
        %v2315 = vunpack.c.l.b16 %v2188
        %v2316 = vunpack.c.h.b16 %v2188
        %v2317 = vunpack.c.l.b16 %v2189
        %v2318 = vunpack.c.h.b16 %v2189
        %v2319 = vunpack.c.l.b16 %v2190
        %v2320 = vunpack.c.h.b16 %v2190
        %v2321 = vunpack.c.l.b16 %v2191
        %v2322 = vunpack.c.h.b16 %v2191
        %v2323 = vunpack.c.l.b16 %v2192
        %v2324 = vunpack.c.h.b16 %v2192
        %v2325 = vunpack.c.l.b16 %v2193
        %v2326 = vunpack.c.h.b16 %v2193
        %v2327 = vpack.c.b16 %v2313, %v2311
        %v2328 = vpack.c.b16 %v2314, %v2312
        %v2329 = vpack.c.b16 %v2317, %v2315
        %v2330 = vpack.c.b16 %v2318, %v2316
        %v2331 = vpack.c.b16 %v2321, %v2319
        %v2332 = vpack.c.b16 %v2322, %v2320
        %v2333 = vpack.c.b16 %v2325, %v2323
        %v2334 = vpack.c.b16 %v2326, %v2324
        %2335 = vrot.lane.b32.xlu0 %v2327, 16
        %v2336 = vpop.permute.xlu0 %2335
        %2337 = vrot.lane.b32.xlu0 %v2328, 16
        %v2338 = vpop.permute.xlu0 %2337
        %2339 = vrot.lane.b32.xlu0 %v2329, 16
        %v2340 = vpop.permute.xlu0 %2339
        %2341 = vrot.lane.b32.xlu0 %v2330, 16
        %v2342 = vpop.permute.xlu0 %2341
        %2343 = vrot.lane.b32.xlu0 %v2331, 16
        %v2344 = vpop.permute.xlu0 %2343
        %2345 = vrot.lane.b32.xlu0 %v2332, 16
        %v2346 = vpop.permute.xlu0 %2345
        %2347 = vrot.lane.b32.xlu0 %v2333, 16
        %v2348 = vpop.permute.xlu0 %2347
        %2349 = vrot.lane.b32.xlu0 %v2334, 16
        %v2350 = vpop.permute.xlu0 %2349
        %v2351 = vsel %vm546, %v2336, %v2338
        %v2352 = vsel %vm546, %v2340, %v2342
        %v2353 = vsel %vm546, %v2344, %v2346
        %v2354 = vsel %vm546, %v2348, %v2350
        %v2360 = vsel %vm2254, %v2300, 0
        %v2363 = vsel %vm2254, %v2301, 0
        %v2366 = vsel %vm2254, %v2302, 0
        %2368 = vmatpush.bf16.msra.mxu0 0
        %2369 = vmatpush.bf16.msra.mxu0 0
        %2370 = vmatpush.bf16.msra.mxu0 0
        %2371 = vmatpush.bf16.msra.mxu0 0
        %2372 = vmatpush.bf16.msra.mxu0 %v2354
        %2373 = vmatpush.bf16.msra.mxu0 %v2353
        %2374 = vmatpush.bf16.msra.mxu0 %v2352
        %2375 = vmatpush.bf16.msra.mxu0 %v2351
        %2376 = vmatmul.bf16.gmra.mxu0 %v2360
        %v2377 = vpop.f32.mrf.mxu0
        %v2378 = vadd.f32 %v2274, %v2377
        %v2379 = vpop.f32.mrf.mxu0
        %v2380 = vadd.f32 %v2276, %v2379
        %2381 = vmatmul.bf16.gmra.mxu0 %v2363
        %v2382 = vpop.f32.mrf.mxu0
        %v2383 = vadd.f32 %v2279, %v2382
        %v2384 = vpop.f32.mrf.mxu0
        %v2385 = vadd.f32 %v2281, %v2384
        %2386 = vmatmul.bf16.gmra.mxu0 %v2366
        %v2387 = vpop.f32.mrf.mxu0
        %v2388 = vadd.f32 %v2284, %v2387
        %v2389 = vpop.f32.mrf.mxu0
        %v2390 = vadd.f32 %v2286, %v2389
        %2391 = vdwg.mxu0
        %v2392 = vld [vmem:[#allocation2 + $0x4] sm:$0xff]
        %v2393 = vld [vmem:[#allocation2 + $0x14] sm:$0xff]
        %v2394 = vld [vmem:[#allocation2 + $0x24] sm:$0xff]
        %v2395 = vld [vmem:[#allocation2 + $0x34] sm:$0xff]
        %v2396 = vld [vmem:[#allocation2 + $0x44] sm:$0xff]
        %v2397 = vld [vmem:[#allocation2 + $0x54] sm:$0xff]
        %v2398 = vld [vmem:[#allocation2 + $0x64] sm:$0xff]
        %v2399 = vld [vmem:[#allocation2 + $0x74] sm:$0xff]
        %s2400 = scalar_lea.vmem %s7, 48
        %v2401 = vld [vmem:[%s2400] sm:$0xf]
        %v2402 = vld [vmem:[%s2400 + $0x4] sm:$0xf]
        %v2403 = vld [vmem:[%s2400 + $0x8] sm:$0xf]
        %v2404 = vld [vmem:[%s2400 + $0xc] sm:$0xf]
        %v2405 = vld [vmem:[%s2400 + $0x10] sm:$0xf]
        %v2406 = vld [vmem:[%s2400 + $0x14] sm:$0xf]
        %v2413 = vunpack.c.l.b16 %v2401
        %v2414 = vunpack.c.l.b16 %v2402
        %v2415 = vunpack.c.l.b16 %v2403
        %v2416 = vunpack.c.l.b16 %v2404
        %v2417 = vunpack.c.l.b16 %v2405
        %v2418 = vunpack.c.l.b16 %v2406
        %v2419 = vpack.c.b16 %v2414, %v2413
        %v2420 = vpack.c.b16 %v2416, %v2415
        %v2421 = vpack.c.b16 %v2418, %v2417
        %v2430 = vunpack.c.l.b16 %v2392
        %v2431 = vunpack.c.h.b16 %v2392
        %v2432 = vunpack.c.l.b16 %v2393
        %v2433 = vunpack.c.h.b16 %v2393
        %v2434 = vunpack.c.l.b16 %v2394
        %v2435 = vunpack.c.h.b16 %v2394
        %v2436 = vunpack.c.l.b16 %v2395
        %v2437 = vunpack.c.h.b16 %v2395
        %v2438 = vunpack.c.l.b16 %v2396
        %v2439 = vunpack.c.h.b16 %v2396
        %v2440 = vunpack.c.l.b16 %v2397
        %v2441 = vunpack.c.h.b16 %v2397
        %v2442 = vunpack.c.l.b16 %v2398
        %v2443 = vunpack.c.h.b16 %v2398
        %v2444 = vunpack.c.l.b16 %v2399
        %v2445 = vunpack.c.h.b16 %v2399
        %v2446 = vpack.c.b16 %v2432, %v2430
        %v2447 = vpack.c.b16 %v2433, %v2431
        %v2448 = vpack.c.b16 %v2436, %v2434
        %v2449 = vpack.c.b16 %v2437, %v2435
        %v2450 = vpack.c.b16 %v2440, %v2438
        %v2451 = vpack.c.b16 %v2441, %v2439
        %v2452 = vpack.c.b16 %v2444, %v2442
        %v2453 = vpack.c.b16 %v2445, %v2443
        %2454 = vrot.lane.b32.xlu0 %v2446, 112
        %v2455 = vpop.permute.xlu0 %2454
        %2456 = vrot.lane.b32.xlu0 %v2447, 112
        %v2457 = vpop.permute.xlu0 %2456
        %2458 = vrot.lane.b32.xlu0 %v2448, 112
        %v2459 = vpop.permute.xlu0 %2458
        %2460 = vrot.lane.b32.xlu0 %v2449, 112
        %v2461 = vpop.permute.xlu0 %2460
        %2462 = vrot.lane.b32.xlu0 %v2450, 112
        %v2463 = vpop.permute.xlu0 %2462
        %2464 = vrot.lane.b32.xlu0 %v2451, 112
        %v2465 = vpop.permute.xlu0 %2464
        %2466 = vrot.lane.b32.xlu0 %v2452, 112
        %v2467 = vpop.permute.xlu0 %2466
        %2468 = vrot.lane.b32.xlu0 %v2453, 112
        %v2469 = vpop.permute.xlu0 %2468
        %v2470 = vsel %vm618, %v2455, %v2457
        %v2471 = vsel %vm618, %v2459, %v2461
        %v2472 = vsel %vm618, %v2463, %v2465
        %v2473 = vsel %vm618, %v2467, %v2469
        %v2479 = vsel %vm2254, %v2419, 0
        %v2482 = vsel %vm2254, %v2420, 0
        %v2485 = vsel %vm2254, %v2421, 0
        %2487 = vmatpush.bf16.msra.mxu0 0
        %2488 = vmatpush.bf16.msra.mxu0 0
        %2489 = vmatpush.bf16.msra.mxu0 0
        %2490 = vmatpush.bf16.msra.mxu0 0
        %2491 = vmatpush.bf16.msra.mxu0 %v2473
        %2492 = vmatpush.bf16.msra.mxu0 %v2472
        %2493 = vmatpush.bf16.msra.mxu0 %v2471
        %2494 = vmatpush.bf16.msra.mxu0 %v2470
        %2495 = vmatmul.bf16.gmra.mxu0 %v2479
        %v2496 = vpop.f32.mrf.mxu0
        %v2497 = vadd.f32 0.0, %v2496
        %v2498 = vpop.f32.mrf.mxu0
        %v2499 = vadd.f32 0.0, %v2498
        %2500 = vmatmul.bf16.gmra.mxu0 %v2482
        %v2501 = vpop.f32.mrf.mxu0
        %v2502 = vadd.f32 0.0, %v2501
        %v2503 = vpop.f32.mrf.mxu0
        %v2504 = vadd.f32 0.0, %v2503
        %2505 = vmatmul.bf16.gmra.mxu0 %v2485
        %v2506 = vpop.f32.mrf.mxu0
        %v2507 = vadd.f32 0.0, %v2506
        %v2508 = vpop.f32.mrf.mxu0
        %v2509 = vadd.f32 0.0, %v2508
        %2510 = vdwg.mxu0
        %v2511 = vadd.f32 %v2378, %v2497
        %v2512 = vadd.f32 %v2380, %v2499
        %v2513 = vadd.f32 %v2383, %v2502
        %v2514 = vadd.f32 %v2385, %v2504
        %v2515 = vadd.f32 %v2388, %v2507
        %v2516 = vadd.f32 %v2390, %v2509
        %2517 = vrot.lane.b32.xlu0 %v2511, 1
        %v2518 = vpop.permute.xlu0 %2517
        %2519 = vrot.lane.b32.xlu0 %v2512, 1
        %v2520 = vpop.permute.xlu0 %2519
        %v2521 = vmul.f32 %v2518, %v443
        %v2522 = vmul.f32 %v2520, %v443
        %v2523 = vadd.f32 %v2513, %v2521
        %v2524 = vadd.f32 %v2514, %v2522
        %2525 = vrot.lane.b32.xlu0 %v2515, 127
        %v2526 = vpop.permute.xlu0 %2525
        %2527 = vrot.lane.b32.xlu0 %v2516, 127
        %v2528 = vpop.permute.xlu0 %2527
        %v2529 = vmul.f32 %v2526, %v446
        %v2530 = vmul.f32 %v2528, %v446
        %v2531 = vadd.f32 %v2523, %v2529
        %v2532 = vadd.f32 %v2524, %v2530
        %v2533 = vld [vmem:[%s8] sm:$0xff]
        %v2534 = vld [vmem:[%s8 + $0x8] sm:$0xff]
        %2536 = vset.pattern.permute.xlu0 0
        %2537 = vperm.xlu0 %2536, %v2533
        %v2538 = vpop.permute.xlu0 %2537
        %2541 = vset.pattern.permute.xlu0 0
        %2542 = vperm.xlu0 %2541, %v2534
        %v2543 = vpop.permute.xlu0 %2542
        %v2545 = vadd.f32 %v2531, %v2538
        %v2546 = vadd.f32 %v2532, %v2543
        %vm2547 = vcmp.ge.f32.partialorder %v2545, 0.0
        %vm2548 = vcmp.ge.f32.partialorder %v2546, 0.0
        %v2549 = vmul.f32 %v2545, 0.01
        %v2550 = vmul.f32 %v2546, 0.01
        %v2551 = vsel %vm2547, %v2545, %v2549
        %v2552 = vsel %vm2548, %v2546, %v2550
        %v2553 = vpack.c.bf16 %v2551, %v2551
        %v2554 = vpack.c.bf16 %v2552, %v2552
        %2555 = vst [vmem:[#allocation2 + $0x84] sm:$0xf] %v2553
        %2556 = vst [vmem:[#allocation2 + $0x94] sm:$0xf] %v2554
        %v2557 = vld [vmem:[#allocation2 + $0x4] sm:$0xff]
        %v2558 = vld [vmem:[#allocation2 + $0x14] sm:$0xff]
        %v2559 = vld [vmem:[#allocation2 + $0x24] sm:$0xff]
        %v2560 = vld [vmem:[#allocation2 + $0x34] sm:$0xff]
        %v2561 = vld [vmem:[#allocation2 + $0x44] sm:$0xff]
        %v2562 = vld [vmem:[#allocation2 + $0x54] sm:$0xff]
        %v2563 = vld [vmem:[#allocation2 + $0x64] sm:$0xff]
        %v2564 = vld [vmem:[#allocation2 + $0x74] sm:$0xff]
        %v2565 = vld [vmem:[%s7] sm:$0xf]
        %v2566 = vld [vmem:[%s7 + $0x4] sm:$0xf]
        %v2567 = vld [vmem:[%s7 + $0x8] sm:$0xf]
        %v2568 = vld [vmem:[%s7 + $0xc] sm:$0xf]
        %v2569 = vld [vmem:[%s7 + $0x10] sm:$0xf]
        %v2570 = vld [vmem:[%s7 + $0x14] sm:$0xf]
        %v2571 = vld [vmem:[#allocation2 + $0x8] sm:$0xf]
        %v2572 = vld [vmem:[#allocation2 + $0x18] sm:$0xf]
        %v2573 = vld [vmem:[#allocation2 + $0x28] sm:$0xf]
        %v2574 = vld [vmem:[#allocation2 + $0x38] sm:$0xf]
        %v2575 = vld [vmem:[#allocation2 + $0x48] sm:$0xf]
        %v2576 = vld [vmem:[#allocation2 + $0x58] sm:$0xf]
        %v2577 = vld [vmem:[#allocation2 + $0x68] sm:$0xf]
        %v2578 = vld [vmem:[#allocation2 + $0x78] sm:$0xf]
        %v2579 = vld [vmem:[%s2208] sm:$0xf]
        %v2580 = vld [vmem:[%s2208 + $0x4] sm:$0xf]
        %v2581 = vld [vmem:[%s2208 + $0x8] sm:$0xf]
        %v2582 = vld [vmem:[%s2208 + $0xc] sm:$0xf]
        %v2583 = vld [vmem:[%s2208 + $0x10] sm:$0xf]
        %v2584 = vld [vmem:[%s2208 + $0x14] sm:$0xf]
        %v2591 = vunpack.c.l.b16 %v2579
        %v2592 = vunpack.c.l.b16 %v2580
        %v2593 = vunpack.c.l.b16 %v2581
        %v2594 = vunpack.c.l.b16 %v2582
        %v2595 = vunpack.c.l.b16 %v2583
        %v2596 = vunpack.c.l.b16 %v2584
        %v2597 = vpack.c.b16 %v2592, %v2591
        %v2598 = vpack.c.b16 %v2594, %v2593
        %v2599 = vpack.c.b16 %v2596, %v2595
        %v2608 = vunpack.c.l.b16 %v2571
        %v2609 = vunpack.c.l.b16 %v2572
        %v2610 = vunpack.c.l.b16 %v2573
        %v2611 = vunpack.c.l.b16 %v2574
        %v2612 = vunpack.c.l.b16 %v2575
        %v2613 = vunpack.c.l.b16 %v2576
        %v2614 = vunpack.c.l.b16 %v2577
        %v2615 = vunpack.c.l.b16 %v2578
        %v2616 = vpack.c.b16 %v2609, %v2608
        %v2617 = vpack.c.b16 %v2611, %v2610
        %v2618 = vpack.c.b16 %v2613, %v2612
        %v2619 = vpack.c.b16 %v2615, %v2614
        %v2625 = vsel %vm2254, %v2597, 0
        %v2628 = vsel %vm2254, %v2598, 0
        %v2631 = vsel %vm2254, %v2599, 0
        %2633 = vmatpush.bf16.msra.mxu0 0
        %2634 = vmatpush.bf16.msra.mxu0 0
        %2635 = vmatpush.bf16.msra.mxu0 0
        %2636 = vmatpush.bf16.msra.mxu0 0
        %2637 = vmatpush.bf16.msra.mxu0 %v2619
        %2638 = vmatpush.bf16.msra.mxu0 %v2618
        %2639 = vmatpush.bf16.msra.mxu0 %v2617
        %2640 = vmatpush.bf16.msra.mxu0 %v2616
        %2641 = vmatmul.bf16.gmra.mxu0 %v2625
        %v2642 = vpop.f32.mrf.mxu0
        %v2643 = vadd.f32 0.0, %v2642
        %v2644 = vpop.f32.mrf.mxu0
        %v2645 = vadd.f32 0.0, %v2644
        %2646 = vmatmul.bf16.gmra.mxu0 %v2628
        %v2647 = vpop.f32.mrf.mxu0
        %v2648 = vadd.f32 0.0, %v2647
        %v2649 = vpop.f32.mrf.mxu0
        %v2650 = vadd.f32 0.0, %v2649
        %2651 = vmatmul.bf16.gmra.mxu0 %v2631
        %v2652 = vpop.f32.mrf.mxu0
        %v2653 = vadd.f32 0.0, %v2652
        %v2654 = vpop.f32.mrf.mxu0
        %v2655 = vadd.f32 0.0, %v2654
        %2656 = vdwg.mxu0
        %v2663 = vunpack.c.l.b16 %v2565
        %v2664 = vunpack.c.l.b16 %v2566
        %v2665 = vunpack.c.l.b16 %v2567
        %v2666 = vunpack.c.l.b16 %v2568
        %v2667 = vunpack.c.l.b16 %v2569
        %v2668 = vunpack.c.l.b16 %v2570
        %v2669 = vpack.c.b16 %v2664, %v2663
        %v2670 = vpack.c.b16 %v2666, %v2665
        %v2671 = vpack.c.b16 %v2668, %v2667
        %v2680 = vunpack.c.l.b16 %v2557
        %v2681 = vunpack.c.h.b16 %v2557
        %v2682 = vunpack.c.l.b16 %v2558
        %v2683 = vunpack.c.h.b16 %v2558
        %v2684 = vunpack.c.l.b16 %v2559
        %v2685 = vunpack.c.h.b16 %v2559
        %v2686 = vunpack.c.l.b16 %v2560
        %v2687 = vunpack.c.h.b16 %v2560
        %v2688 = vunpack.c.l.b16 %v2561
        %v2689 = vunpack.c.h.b16 %v2561
        %v2690 = vunpack.c.l.b16 %v2562
        %v2691 = vunpack.c.h.b16 %v2562
        %v2692 = vunpack.c.l.b16 %v2563
        %v2693 = vunpack.c.h.b16 %v2563
        %v2694 = vunpack.c.l.b16 %v2564
        %v2695 = vunpack.c.h.b16 %v2564
        %v2696 = vpack.c.b16 %v2682, %v2680
        %v2697 = vpack.c.b16 %v2683, %v2681
        %v2698 = vpack.c.b16 %v2686, %v2684
        %v2699 = vpack.c.b16 %v2687, %v2685
        %v2700 = vpack.c.b16 %v2690, %v2688
        %v2701 = vpack.c.b16 %v2691, %v2689
        %v2702 = vpack.c.b16 %v2694, %v2692
        %v2703 = vpack.c.b16 %v2695, %v2693
        %2704 = vrot.lane.b32.xlu0 %v2696, 16
        %v2705 = vpop.permute.xlu0 %2704
        %2706 = vrot.lane.b32.xlu0 %v2697, 16
        %v2707 = vpop.permute.xlu0 %2706
        %2708 = vrot.lane.b32.xlu0 %v2698, 16
        %v2709 = vpop.permute.xlu0 %2708
        %2710 = vrot.lane.b32.xlu0 %v2699, 16
        %v2711 = vpop.permute.xlu0 %2710
        %2712 = vrot.lane.b32.xlu0 %v2700, 16
        %v2713 = vpop.permute.xlu0 %2712
        %2714 = vrot.lane.b32.xlu0 %v2701, 16
        %v2715 = vpop.permute.xlu0 %2714
        %2716 = vrot.lane.b32.xlu0 %v2702, 16
        %v2717 = vpop.permute.xlu0 %2716
        %2718 = vrot.lane.b32.xlu0 %v2703, 16
        %v2719 = vpop.permute.xlu0 %2718
        %v2720 = vsel %vm546, %v2705, %v2707
        %v2721 = vsel %vm546, %v2709, %v2711
        %v2722 = vsel %vm546, %v2713, %v2715
        %v2723 = vsel %vm546, %v2717, %v2719
        %v2729 = vsel %vm2254, %v2669, 0
        %v2732 = vsel %vm2254, %v2670, 0
        %v2735 = vsel %vm2254, %v2671, 0
        %2737 = vmatpush.bf16.msra.mxu0 0
        %2738 = vmatpush.bf16.msra.mxu0 0
        %2739 = vmatpush.bf16.msra.mxu0 0
        %2740 = vmatpush.bf16.msra.mxu0 0
        %2741 = vmatpush.bf16.msra.mxu0 %v2723
        %2742 = vmatpush.bf16.msra.mxu0 %v2722
        %2743 = vmatpush.bf16.msra.mxu0 %v2721
        %2744 = vmatpush.bf16.msra.mxu0 %v2720
        %2745 = vmatmul.bf16.gmra.mxu0 %v2729
        %v2746 = vpop.f32.mrf.mxu0
        %v2747 = vadd.f32 %v2643, %v2746
        %v2748 = vpop.f32.mrf.mxu0
        %v2749 = vadd.f32 %v2645, %v2748
        %2750 = vmatmul.bf16.gmra.mxu0 %v2732
        %v2751 = vpop.f32.mrf.mxu0
        %v2752 = vadd.f32 %v2648, %v2751
        %v2753 = vpop.f32.mrf.mxu0
        %v2754 = vadd.f32 %v2650, %v2753
        %2755 = vmatmul.bf16.gmra.mxu0 %v2735
        %v2756 = vpop.f32.mrf.mxu0
        %v2757 = vadd.f32 %v2653, %v2756
        %v2758 = vpop.f32.mrf.mxu0
        %v2759 = vadd.f32 %v2655, %v2758
        %2760 = vdwg.mxu0
        %v2761 = vld [vmem:[#allocation2 + $0x8] sm:$0xff]
        %v2762 = vld [vmem:[#allocation2 + $0x18] sm:$0xff]
        %v2763 = vld [vmem:[#allocation2 + $0x28] sm:$0xff]
        %v2764 = vld [vmem:[#allocation2 + $0x38] sm:$0xff]
        %v2765 = vld [vmem:[#allocation2 + $0x48] sm:$0xff]
        %v2766 = vld [vmem:[#allocation2 + $0x58] sm:$0xff]
        %v2767 = vld [vmem:[#allocation2 + $0x68] sm:$0xff]
        %v2768 = vld [vmem:[#allocation2 + $0x78] sm:$0xff]
        %v2769 = vld [vmem:[%s2400] sm:$0xf]
        %v2770 = vld [vmem:[%s2400 + $0x4] sm:$0xf]
        %v2771 = vld [vmem:[%s2400 + $0x8] sm:$0xf]
        %v2772 = vld [vmem:[%s2400 + $0xc] sm:$0xf]
        %v2773 = vld [vmem:[%s2400 + $0x10] sm:$0xf]
        %v2774 = vld [vmem:[%s2400 + $0x14] sm:$0xf]
        %v2781 = vunpack.c.l.b16 %v2769
        %v2782 = vunpack.c.l.b16 %v2770
        %v2783 = vunpack.c.l.b16 %v2771
        %v2784 = vunpack.c.l.b16 %v2772
        %v2785 = vunpack.c.l.b16 %v2773
        %v2786 = vunpack.c.l.b16 %v2774
        %v2787 = vpack.c.b16 %v2782, %v2781
        %v2788 = vpack.c.b16 %v2784, %v2783
        %v2789 = vpack.c.b16 %v2786, %v2785
        %v2798 = vunpack.c.l.b16 %v2761
        %v2799 = vunpack.c.h.b16 %v2761
        %v2800 = vunpack.c.l.b16 %v2762
        %v2801 = vunpack.c.h.b16 %v2762
        %v2802 = vunpack.c.l.b16 %v2763
        %v2803 = vunpack.c.h.b16 %v2763
        %v2804 = vunpack.c.l.b16 %v2764
        %v2805 = vunpack.c.h.b16 %v2764
        %v2806 = vunpack.c.l.b16 %v2765
        %v2807 = vunpack.c.h.b16 %v2765
        %v2808 = vunpack.c.l.b16 %v2766
        %v2809 = vunpack.c.h.b16 %v2766
        %v2810 = vunpack.c.l.b16 %v2767
        %v2811 = vunpack.c.h.b16 %v2767
        %v2812 = vunpack.c.l.b16 %v2768
        %v2813 = vunpack.c.h.b16 %v2768
        %v2814 = vpack.c.b16 %v2800, %v2798
        %v2815 = vpack.c.b16 %v2801, %v2799
        %v2816 = vpack.c.b16 %v2804, %v2802
        %v2817 = vpack.c.b16 %v2805, %v2803
        %v2818 = vpack.c.b16 %v2808, %v2806
        %v2819 = vpack.c.b16 %v2809, %v2807
        %v2820 = vpack.c.b16 %v2812, %v2810
        %v2821 = vpack.c.b16 %v2813, %v2811
        %2822 = vrot.lane.b32.xlu0 %v2814, 112
        %v2823 = vpop.permute.xlu0 %2822
        %2824 = vrot.lane.b32.xlu0 %v2815, 112
        %v2825 = vpop.permute.xlu0 %2824
        %2826 = vrot.lane.b32.xlu0 %v2816, 112
        %v2827 = vpop.permute.xlu0 %2826
        %2828 = vrot.lane.b32.xlu0 %v2817, 112
        %v2829 = vpop.permute.xlu0 %2828
        %2830 = vrot.lane.b32.xlu0 %v2818, 112
        %v2831 = vpop.permute.xlu0 %2830
        %2832 = vrot.lane.b32.xlu0 %v2819, 112
        %v2833 = vpop.permute.xlu0 %2832
        %2834 = vrot.lane.b32.xlu0 %v2820, 112
        %v2835 = vpop.permute.xlu0 %2834
        %2836 = vrot.lane.b32.xlu0 %v2821, 112
        %v2837 = vpop.permute.xlu0 %2836
        %v2838 = vsel %vm618, %v2823, %v2825
        %v2839 = vsel %vm618, %v2827, %v2829
        %v2840 = vsel %vm618, %v2831, %v2833
        %v2841 = vsel %vm618, %v2835, %v2837
        %v2847 = vsel %vm2254, %v2787, 0
        %v2850 = vsel %vm2254, %v2788, 0
        %v2853 = vsel %vm2254, %v2789, 0
        %2855 = vmatpush.bf16.msra.mxu0 0
        %2856 = vmatpush.bf16.msra.mxu0 0
        %2857 = vmatpush.bf16.msra.mxu0 0
        %2858 = vmatpush.bf16.msra.mxu0 0
        %2859 = vmatpush.bf16.msra.mxu0 %v2841
        %2860 = vmatpush.bf16.msra.mxu0 %v2840
        %2861 = vmatpush.bf16.msra.mxu0 %v2839
        %2862 = vmatpush.bf16.msra.mxu0 %v2838
        %2863 = vmatmul.bf16.gmra.mxu0 %v2847
        %v2864 = vpop.f32.mrf.mxu0
        %v2865 = vadd.f32 0.0, %v2864
        %v2866 = vpop.f32.mrf.mxu0
        %v2867 = vadd.f32 0.0, %v2866
        %2868 = vmatmul.bf16.gmra.mxu0 %v2850
        %v2869 = vpop.f32.mrf.mxu0
        %v2870 = vadd.f32 0.0, %v2869
        %v2871 = vpop.f32.mrf.mxu0
        %v2872 = vadd.f32 0.0, %v2871
        %2873 = vmatmul.bf16.gmra.mxu0 %v2853
        %v2874 = vpop.f32.mrf.mxu0
        %v2875 = vadd.f32 0.0, %v2874
        %v2876 = vpop.f32.mrf.mxu0
        %v2877 = vadd.f32 0.0, %v2876
        %2878 = vdwg.mxu0
        %v2879 = vadd.f32 %v2747, %v2865
        %v2880 = vadd.f32 %v2749, %v2867
        %v2881 = vadd.f32 %v2752, %v2870
        %v2882 = vadd.f32 %v2754, %v2872
        %v2883 = vadd.f32 %v2757, %v2875
        %v2884 = vadd.f32 %v2759, %v2877
        %2885 = vrot.lane.b32.xlu0 %v2879, 1
        %v2886 = vpop.permute.xlu0 %2885
        %2887 = vrot.lane.b32.xlu0 %v2880, 1
        %v2888 = vpop.permute.xlu0 %2887
        %v2889 = vmul.f32 %v2886, %v443
        %v2890 = vmul.f32 %v2888, %v443
        %v2891 = vadd.f32 %v2881, %v2889
        %v2892 = vadd.f32 %v2882, %v2890
        %2893 = vrot.lane.b32.xlu0 %v2883, 127
        %v2894 = vpop.permute.xlu0 %2893
        %2895 = vrot.lane.b32.xlu0 %v2884, 127
        %v2896 = vpop.permute.xlu0 %2895
        %v2897 = vmul.f32 %v2894, %v446
        %v2898 = vmul.f32 %v2896, %v446
        %v2899 = vadd.f32 %v2891, %v2897
        %v2900 = vadd.f32 %v2892, %v2898
        %v2901 = vld [vmem:[%s8] sm:$0xff]
        %v2902 = vld [vmem:[%s8 + $0x8] sm:$0xff]
        %2904 = vset.pattern.permute.xlu0 0
        %2905 = vperm.xlu0 %2904, %v2901
        %v2906 = vpop.permute.xlu0 %2905
        %2909 = vset.pattern.permute.xlu0 0
        %2910 = vperm.xlu0 %2909, %v2902
        %v2911 = vpop.permute.xlu0 %2910
        %v2913 = vadd.f32 %v2899, %v2906
        %v2914 = vadd.f32 %v2900, %v2911
        %vm2915 = vcmp.ge.f32.partialorder %v2913, 0.0
        %vm2916 = vcmp.ge.f32.partialorder %v2914, 0.0
        %v2917 = vmul.f32 %v2913, 0.01
        %v2918 = vmul.f32 %v2914, 0.01
        %v2919 = vsel %vm2915, %v2913, %v2917
        %v2920 = vsel %vm2916, %v2914, %v2918
        %v2921 = vpack.c.bf16 %v2919, %v2919
        %v2922 = vpack.c.bf16 %v2920, %v2920
        %2923 = vst [vmem:[#allocation2 + $0x88] sm:$0xf] %v2921
        %2924 = vst [vmem:[#allocation2 + $0x98] sm:$0xf] %v2922
        %v2925 = vld [vmem:[#allocation2] sm:$0xff]
        %v2926 = vld [vmem:[#allocation2 + $0x10] sm:$0xff]
        %v2927 = vld [vmem:[#allocation2 + $0x20] sm:$0xff]
        %v2928 = vld [vmem:[#allocation2 + $0x30] sm:$0xff]
        %v2929 = vld [vmem:[#allocation2 + $0x40] sm:$0xff]
        %v2930 = vld [vmem:[#allocation2 + $0x50] sm:$0xff]
        %v2931 = vld [vmem:[#allocation2 + $0x60] sm:$0xff]
        %v2932 = vld [vmem:[#allocation2 + $0x70] sm:$0xff]
        %v2933 = vld [vmem:[#allocation2 + $0x80] sm:$0xff]
        %v2934 = vld [vmem:[#allocation2 + $0x90] sm:$0xff]
        %v2935 = vld [vmem:[#allocation3] sm:$0xf]
        %v2936 = vld [vmem:[#allocation3 + $0x4] sm:$0xf]
        %v2937 = vld [vmem:[#allocation3 + $0x8] sm:$0xf]
        %v2938 = vld [vmem:[#allocation3 + $0xc] sm:$0xf]
        %v2939 = vld [vmem:[#allocation3 + $0x10] sm:$0xf]
        %v2940 = vld [vmem:[#allocation3 + $0x14] sm:$0xf]
        %v2941 = vld [vmem:[#allocation2 + $0x4] sm:$0xf]
        %v2942 = vld [vmem:[#allocation2 + $0x14] sm:$0xf]
        %v2943 = vld [vmem:[#allocation2 + $0x24] sm:$0xf]
        %v2944 = vld [vmem:[#allocation2 + $0x34] sm:$0xf]
        %v2945 = vld [vmem:[#allocation2 + $0x44] sm:$0xf]
        %v2946 = vld [vmem:[#allocation2 + $0x54] sm:$0xf]
        %v2947 = vld [vmem:[#allocation2 + $0x64] sm:$0xf]
        %v2948 = vld [vmem:[#allocation2 + $0x74] sm:$0xf]
        %v2949 = vld [vmem:[#allocation2 + $0x84] sm:$0xf]
        %v2950 = vld [vmem:[#allocation2 + $0x94] sm:$0xf]
        %s2951 = scalar_lea.vmem [#allocation3], 24
        %v2952 = vld [vmem:[%s2951] sm:$0xf]
        %v2953 = vld [vmem:[%s2951 + $0x4] sm:$0xf]
        %v2954 = vld [vmem:[%s2951 + $0x8] sm:$0xf]
        %v2955 = vld [vmem:[%s2951 + $0xc] sm:$0xf]
        %v2956 = vld [vmem:[%s2951 + $0x10] sm:$0xf]
        %v2957 = vld [vmem:[%s2951 + $0x14] sm:$0xf]
        %v2964 = vunpack.c.l.b16 %v2952
        %v2965 = vunpack.c.l.b16 %v2953
        %v2966 = vunpack.c.l.b16 %v2954
        %v2967 = vunpack.c.l.b16 %v2955
        %v2968 = vunpack.c.l.b16 %v2956
        %v2969 = vunpack.c.l.b16 %v2957
        %v2970 = vpack.c.b16 %v2965, %v2964
        %v2971 = vpack.c.b16 %v2967, %v2966
        %v2972 = vpack.c.b16 %v2969, %v2968
        %v2983 = vunpack.c.l.b16 %v2941
        %v2984 = vunpack.c.l.b16 %v2942
        %v2985 = vunpack.c.l.b16 %v2943
        %v2986 = vunpack.c.l.b16 %v2944
        %v2987 = vunpack.c.l.b16 %v2945
        %v2988 = vunpack.c.l.b16 %v2946
        %v2989 = vunpack.c.l.b16 %v2947
        %v2990 = vunpack.c.l.b16 %v2948
        %v2991 = vunpack.c.l.b16 %v2949
        %v2992 = vunpack.c.l.b16 %v2950
        %v2993 = vpack.c.b16 %v2984, %v2983
        %v2994 = vpack.c.b16 %v2986, %v2985
        %v2995 = vpack.c.b16 %v2988, %v2987
        %v2996 = vpack.c.b16 %v2990, %v2989
        %v2997 = vpack.c.b16 %v2992, %v2991
        %vm3003 = vcmask 654336
        %v3005 = vsel %vm3003, %v2970, 0
        %v3008 = vsel %vm3003, %v2971, 0
        %v3011 = vsel %vm3003, %v2972, 0
        %3013 = vmatpush.bf16.msra.mxu0 0
        %3014 = vmatpush.bf16.msra.mxu0 0
        %3015 = vmatpush.bf16.msra.mxu0 0
        %3016 = vmatpush.bf16.msra.mxu0 %v2997
        %3017 = vmatpush.bf16.msra.mxu0 %v2996
        %3018 = vmatpush.bf16.msra.mxu0 %v2995
        %3019 = vmatpush.bf16.msra.mxu0 %v2994
        %3020 = vmatpush.bf16.msra.mxu0 %v2993
        %3021 = vmatmul.bf16.gmra.mxu0 %v3005
        %v3022 = vpop.f32.mrf.mxu0
        %v3023 = vadd.f32 0.0, %v3022
        %v3024 = vpop.f32.mrf.mxu0
        %v3025 = vadd.f32 0.0, %v3024
        %3026 = vmatmul.bf16.gmra.mxu0 %v3008
        %v3027 = vpop.f32.mrf.mxu0
        %v3028 = vadd.f32 0.0, %v3027
        %v3029 = vpop.f32.mrf.mxu0
        %v3030 = vadd.f32 0.0, %v3029
        %3031 = vmatmul.bf16.gmra.mxu0 %v3011
        %v3032 = vpop.f32.mrf.mxu0
        %v3033 = vadd.f32 0.0, %v3032
        %v3034 = vpop.f32.mrf.mxu0
        %v3035 = vadd.f32 0.0, %v3034
        %3036 = vdwg.mxu0
        %v3043 = vunpack.c.l.b16 %v2935
        %v3044 = vunpack.c.l.b16 %v2936
        %v3045 = vunpack.c.l.b16 %v2937
        %v3046 = vunpack.c.l.b16 %v2938
        %v3047 = vunpack.c.l.b16 %v2939
        %v3048 = vunpack.c.l.b16 %v2940
        %v3049 = vpack.c.b16 %v3044, %v3043
        %v3050 = vpack.c.b16 %v3046, %v3045
        %v3051 = vpack.c.b16 %v3048, %v3047
        %v3062 = vunpack.c.l.b16 %v2925
        %v3063 = vunpack.c.h.b16 %v2925
        %v3064 = vunpack.c.l.b16 %v2926
        %v3065 = vunpack.c.h.b16 %v2926
        %v3066 = vunpack.c.l.b16 %v2927
        %v3067 = vunpack.c.h.b16 %v2927
        %v3068 = vunpack.c.l.b16 %v2928
        %v3069 = vunpack.c.h.b16 %v2928
        %v3070 = vunpack.c.l.b16 %v2929
        %v3071 = vunpack.c.h.b16 %v2929
        %v3072 = vunpack.c.l.b16 %v2930
        %v3073 = vunpack.c.h.b16 %v2930
        %v3074 = vunpack.c.l.b16 %v2931
        %v3075 = vunpack.c.h.b16 %v2931
        %v3076 = vunpack.c.l.b16 %v2932
        %v3077 = vunpack.c.h.b16 %v2932
        %v3078 = vunpack.c.l.b16 %v2933
        %v3079 = vunpack.c.h.b16 %v2933
        %v3080 = vunpack.c.l.b16 %v2934
        %v3081 = vunpack.c.h.b16 %v2934
        %v3082 = vpack.c.b16 %v3064, %v3062
        %v3083 = vpack.c.b16 %v3065, %v3063
        %v3084 = vpack.c.b16 %v3068, %v3066
        %v3085 = vpack.c.b16 %v3069, %v3067
        %v3086 = vpack.c.b16 %v3072, %v3070
        %v3087 = vpack.c.b16 %v3073, %v3071
        %v3088 = vpack.c.b16 %v3076, %v3074
        %v3089 = vpack.c.b16 %v3077, %v3075
        %v3090 = vpack.c.b16 %v3080, %v3078
        %v3091 = vpack.c.b16 %v3081, %v3079
        %3092 = vrot.lane.b32.xlu0 %v3082, 16
        %v3093 = vpop.permute.xlu0 %3092
        %3094 = vrot.lane.b32.xlu0 %v3083, 16
        %v3095 = vpop.permute.xlu0 %3094
        %3096 = vrot.lane.b32.xlu0 %v3084, 16
        %v3097 = vpop.permute.xlu0 %3096
        %3098 = vrot.lane.b32.xlu0 %v3085, 16
        %v3099 = vpop.permute.xlu0 %3098
        %3100 = vrot.lane.b32.xlu0 %v3086, 16
        %v3101 = vpop.permute.xlu0 %3100
        %3102 = vrot.lane.b32.xlu0 %v3087, 16
        %v3103 = vpop.permute.xlu0 %3102
        %3104 = vrot.lane.b32.xlu0 %v3088, 16
        %v3105 = vpop.permute.xlu0 %3104
        %3106 = vrot.lane.b32.xlu0 %v3089, 16
        %v3107 = vpop.permute.xlu0 %3106
        %3108 = vrot.lane.b32.xlu0 %v3090, 16
        %v3109 = vpop.permute.xlu0 %3108
        %3110 = vrot.lane.b32.xlu0 %v3091, 16
        %v3111 = vpop.permute.xlu0 %3110
        %v3112 = vsel %vm546, %v3093, %v3095
        %v3113 = vsel %vm546, %v3097, %v3099
        %v3114 = vsel %vm546, %v3101, %v3103
        %v3115 = vsel %vm546, %v3105, %v3107
        %v3116 = vsel %vm546, %v3109, %v3111
        %v3123 = vsel %vm3003, %v3049, 0
        %v3126 = vsel %vm3003, %v3050, 0
        %v3129 = vsel %vm3003, %v3051, 0
        %3131 = vmatpush.bf16.msra.mxu0 0
        %3132 = vmatpush.bf16.msra.mxu0 0
        %3133 = vmatpush.bf16.msra.mxu0 0
        %3134 = vmatpush.bf16.msra.mxu0 %v3116
        %3135 = vmatpush.bf16.msra.mxu0 %v3115
        %3136 = vmatpush.bf16.msra.mxu0 %v3114
        %3137 = vmatpush.bf16.msra.mxu0 %v3113
        %3138 = vmatpush.bf16.msra.mxu0 %v3112
        %3139 = vmatmul.bf16.gmra.mxu0 %v3123
        %v3140 = vpop.f32.mrf.mxu0
        %v3141 = vadd.f32 %v3023, %v3140
        %v3142 = vpop.f32.mrf.mxu0
        %v3143 = vadd.f32 %v3025, %v3142
        %3144 = vmatmul.bf16.gmra.mxu0 %v3126
        %v3145 = vpop.f32.mrf.mxu0
        %v3146 = vadd.f32 %v3028, %v3145
        %v3147 = vpop.f32.mrf.mxu0
        %v3148 = vadd.f32 %v3030, %v3147
        %3149 = vmatmul.bf16.gmra.mxu0 %v3129
        %v3150 = vpop.f32.mrf.mxu0
        %v3151 = vadd.f32 %v3033, %v3150
        %v3152 = vpop.f32.mrf.mxu0
        %v3153 = vadd.f32 %v3035, %v3152
        %3154 = vdwg.mxu0
        %v3155 = vld [vmem:[#allocation2 + $0x4] sm:$0xff]
        %v3156 = vld [vmem:[#allocation2 + $0x14] sm:$0xff]
        %v3157 = vld [vmem:[#allocation2 + $0x24] sm:$0xff]
        %v3158 = vld [vmem:[#allocation2 + $0x34] sm:$0xff]
        %v3159 = vld [vmem:[#allocation2 + $0x44] sm:$0xff]
        %v3160 = vld [vmem:[#allocation2 + $0x54] sm:$0xff]
        %v3161 = vld [vmem:[#allocation2 + $0x64] sm:$0xff]
        %v3162 = vld [vmem:[#allocation2 + $0x74] sm:$0xff]
        %v3163 = vld [vmem:[#allocation2 + $0x84] sm:$0xff]
        %v3164 = vld [vmem:[#allocation2 + $0x94] sm:$0xff]
        %s3165 = scalar_lea.vmem [#allocation3], 48
        %v3166 = vld [vmem:[%s3165] sm:$0xf]
        %v3167 = vld [vmem:[%s3165 + $0x4] sm:$0xf]
        %v3168 = vld [vmem:[%s3165 + $0x8] sm:$0xf]
        %v3169 = vld [vmem:[%s3165 + $0xc] sm:$0xf]
        %v3170 = vld [vmem:[%s3165 + $0x10] sm:$0xf]
        %v3171 = vld [vmem:[%s3165 + $0x14] sm:$0xf]
        %v3178 = vunpack.c.l.b16 %v3166
        %v3179 = vunpack.c.l.b16 %v3167
        %v3180 = vunpack.c.l.b16 %v3168
        %v3181 = vunpack.c.l.b16 %v3169
        %v3182 = vunpack.c.l.b16 %v3170
        %v3183 = vunpack.c.l.b16 %v3171
        %v3184 = vpack.c.b16 %v3179, %v3178
        %v3185 = vpack.c.b16 %v3181, %v3180
        %v3186 = vpack.c.b16 %v3183, %v3182
        %v3197 = vunpack.c.l.b16 %v3155
        %v3198 = vunpack.c.h.b16 %v3155
        %v3199 = vunpack.c.l.b16 %v3156
        %v3200 = vunpack.c.h.b16 %v3156
        %v3201 = vunpack.c.l.b16 %v3157
        %v3202 = vunpack.c.h.b16 %v3157
        %v3203 = vunpack.c.l.b16 %v3158
        %v3204 = vunpack.c.h.b16 %v3158
        %v3205 = vunpack.c.l.b16 %v3159
        %v3206 = vunpack.c.h.b16 %v3159
        %v3207 = vunpack.c.l.b16 %v3160
        %v3208 = vunpack.c.h.b16 %v3160
        %v3209 = vunpack.c.l.b16 %v3161
        %v3210 = vunpack.c.h.b16 %v3161
        %v3211 = vunpack.c.l.b16 %v3162
        %v3212 = vunpack.c.h.b16 %v3162
        %v3213 = vunpack.c.l.b16 %v3163
        %v3214 = vunpack.c.h.b16 %v3163
        %v3215 = vunpack.c.l.b16 %v3164
        %v3216 = vunpack.c.h.b16 %v3164
        %v3217 = vpack.c.b16 %v3199, %v3197
        %v3218 = vpack.c.b16 %v3200, %v3198
        %v3219 = vpack.c.b16 %v3203, %v3201
        %v3220 = vpack.c.b16 %v3204, %v3202
        %v3221 = vpack.c.b16 %v3207, %v3205
        %v3222 = vpack.c.b16 %v3208, %v3206
        %v3223 = vpack.c.b16 %v3211, %v3209
        %v3224 = vpack.c.b16 %v3212, %v3210
        %v3225 = vpack.c.b16 %v3215, %v3213
        %v3226 = vpack.c.b16 %v3216, %v3214
        %3227 = vrot.lane.b32.xlu0 %v3217, 112
        %v3228 = vpop.permute.xlu0 %3227
        %3229 = vrot.lane.b32.xlu0 %v3218, 112
        %v3230 = vpop.permute.xlu0 %3229
        %3231 = vrot.lane.b32.xlu0 %v3219, 112
        %v3232 = vpop.permute.xlu0 %3231
        %3233 = vrot.lane.b32.xlu0 %v3220, 112
        %v3234 = vpop.permute.xlu0 %3233
        %3235 = vrot.lane.b32.xlu0 %v3221, 112
        %v3236 = vpop.permute.xlu0 %3235
        %3237 = vrot.lane.b32.xlu0 %v3222, 112
        %v3238 = vpop.permute.xlu0 %3237
        %3239 = vrot.lane.b32.xlu0 %v3223, 112
        %v3240 = vpop.permute.xlu0 %3239
        %3241 = vrot.lane.b32.xlu0 %v3224, 112
        %v3242 = vpop.permute.xlu0 %3241
        %3243 = vrot.lane.b32.xlu0 %v3225, 112
        %v3244 = vpop.permute.xlu0 %3243
        %3245 = vrot.lane.b32.xlu0 %v3226, 112
        %v3246 = vpop.permute.xlu0 %3245
        %v3247 = vsel %vm618, %v3228, %v3230
        %v3248 = vsel %vm618, %v3232, %v3234
        %v3249 = vsel %vm618, %v3236, %v3238
        %v3250 = vsel %vm618, %v3240, %v3242
        %v3251 = vsel %vm618, %v3244, %v3246
        %v3258 = vsel %vm3003, %v3184, 0
        %v3261 = vsel %vm3003, %v3185, 0
        %v3264 = vsel %vm3003, %v3186, 0
        %3266 = vmatpush.bf16.msra.mxu0 0
        %3267 = vmatpush.bf16.msra.mxu0 0
        %3268 = vmatpush.bf16.msra.mxu0 0
        %3269 = vmatpush.bf16.msra.mxu0 %v3251
        %3270 = vmatpush.bf16.msra.mxu0 %v3250
        %3271 = vmatpush.bf16.msra.mxu0 %v3249
        %3272 = vmatpush.bf16.msra.mxu0 %v3248
        %3273 = vmatpush.bf16.msra.mxu0 %v3247
        %3274 = vmatmul.bf16.gmra.mxu0 %v3258
        %v3275 = vpop.f32.mrf.mxu0
        %v3276 = vadd.f32 0.0, %v3275
        %v3277 = vpop.f32.mrf.mxu0
        %v3278 = vadd.f32 0.0, %v3277
        %3279 = vmatmul.bf16.gmra.mxu0 %v3261
        %v3280 = vpop.f32.mrf.mxu0
        %v3281 = vadd.f32 0.0, %v3280
        %v3282 = vpop.f32.mrf.mxu0
        %v3283 = vadd.f32 0.0, %v3282
        %3284 = vmatmul.bf16.gmra.mxu0 %v3264
        %v3285 = vpop.f32.mrf.mxu0
        %v3286 = vadd.f32 0.0, %v3285
        %v3287 = vpop.f32.mrf.mxu0
        %v3288 = vadd.f32 0.0, %v3287
        %3289 = vdwg.mxu0
        %v3290 = vadd.f32 %v3141, %v3276
        %v3291 = vadd.f32 %v3143, %v3278
        %v3292 = vadd.f32 %v3146, %v3281
        %v3293 = vadd.f32 %v3148, %v3283
        %v3294 = vadd.f32 %v3151, %v3286
        %v3295 = vadd.f32 %v3153, %v3288
        %3296 = vrot.lane.b32.xlu0 %v3290, 1
        %v3297 = vpop.permute.xlu0 %3296
        %3298 = vrot.lane.b32.xlu0 %v3291, 1
        %v3299 = vpop.permute.xlu0 %3298
        %v3300 = vmul.f32 %v3297, %v443
        %v3301 = vmul.f32 %v3299, %v443
        %v3302 = vadd.f32 %v3292, %v3300
        %v3303 = vadd.f32 %v3293, %v3301
        %3304 = vrot.lane.b32.xlu0 %v3294, 127
        %v3305 = vpop.permute.xlu0 %3304
        %3306 = vrot.lane.b32.xlu0 %v3295, 127
        %v3307 = vpop.permute.xlu0 %3306
        %v3308 = vmul.f32 %v3305, %v446
        %v3309 = vmul.f32 %v3307, %v446
        %v3310 = vadd.f32 %v3302, %v3308
        %v3311 = vadd.f32 %v3303, %v3309
        %v3312 = vld [vmem:[%s10] sm:$0xff]
        %v3313 = vld [vmem:[%s10 + $0x8] sm:$0xff]
        %3315 = vset.pattern.permute.xlu0 0
        %3316 = vperm.xlu0 %3315, %v3312
        %v3317 = vpop.permute.xlu0 %3316
        %3320 = vset.pattern.permute.xlu0 0
        %3321 = vperm.xlu0 %3320, %v3313
        %v3322 = vpop.permute.xlu0 %3321
        %v3324 = vadd.f32 %v3310, %v3317
        %v3325 = vadd.f32 %v3311, %v3322
        %v3326 = vld [vmem:[%s401] sm:$0xf]
        %v3327 = vld [vmem:[%s401 + $0x8] sm:$0xf]
        %v3328 = vunpack.c.l.bf16 %v3326
        %v3329 = vunpack.c.l.bf16 %v3327
        %v3330 = vmul.f32 %v3324, 0.2
        %v3331 = vmul.f32 %v3325, 0.2
        %v3332 = vadd.f32 %v3330, %v3328
        %v3333 = vadd.f32 %v3331, %v3329
        %v3334 = vpack.c.bf16 %v3332, %v3332
        %v3335 = vpack.c.bf16 %v3333, %v3333
        %3336 = vst [vmem:[%s396] sm:$0xf] %v3334
        %3337 = vst [vmem:[%s396 + $0x8] sm:$0xf] %v3335
        %v3338 = vld [vmem:[#allocation2 + $0x4] sm:$0xff]
        %v3339 = vld [vmem:[#allocation2 + $0x14] sm:$0xff]
        %v3340 = vld [vmem:[#allocation2 + $0x24] sm:$0xff]
        %v3341 = vld [vmem:[#allocation2 + $0x34] sm:$0xff]
        %v3342 = vld [vmem:[#allocation2 + $0x44] sm:$0xff]
        %v3343 = vld [vmem:[#allocation2 + $0x54] sm:$0xff]
        %v3344 = vld [vmem:[#allocation2 + $0x64] sm:$0xff]
        %v3345 = vld [vmem:[#allocation2 + $0x74] sm:$0xff]
        %v3346 = vld [vmem:[#allocation2 + $0x84] sm:$0xff]
        %v3347 = vld [vmem:[#allocation2 + $0x94] sm:$0xff]
        %v3348 = vld [vmem:[#allocation3] sm:$0xf]
        %v3349 = vld [vmem:[#allocation3 + $0x4] sm:$0xf]
        %v3350 = vld [vmem:[#allocation3 + $0x8] sm:$0xf]
        %v3351 = vld [vmem:[#allocation3 + $0xc] sm:$0xf]
        %v3352 = vld [vmem:[#allocation3 + $0x10] sm:$0xf]
        %v3353 = vld [vmem:[#allocation3 + $0x14] sm:$0xf]
        %v3354 = vld [vmem:[#allocation2 + $0x8] sm:$0xf]
        %v3355 = vld [vmem:[#allocation2 + $0x18] sm:$0xf]
        %v3356 = vld [vmem:[#allocation2 + $0x28] sm:$0xf]
        %v3357 = vld [vmem:[#allocation2 + $0x38] sm:$0xf]
        %v3358 = vld [vmem:[#allocation2 + $0x48] sm:$0xf]
        %v3359 = vld [vmem:[#allocation2 + $0x58] sm:$0xf]
        %v3360 = vld [vmem:[#allocation2 + $0x68] sm:$0xf]
        %v3361 = vld [vmem:[#allocation2 + $0x78] sm:$0xf]
        %v3362 = vld [vmem:[#allocation2 + $0x88] sm:$0xf]
        %v3363 = vld [vmem:[#allocation2 + $0x98] sm:$0xf]
        %v3364 = vld [vmem:[%s2951] sm:$0xf]
        %v3365 = vld [vmem:[%s2951 + $0x4] sm:$0xf]
        %v3366 = vld [vmem:[%s2951 + $0x8] sm:$0xf]
        %v3367 = vld [vmem:[%s2951 + $0xc] sm:$0xf]
        %v3368 = vld [vmem:[%s2951 + $0x10] sm:$0xf]
        %v3369 = vld [vmem:[%s2951 + $0x14] sm:$0xf]
        %v3376 = vunpack.c.l.b16 %v3364
        %v3377 = vunpack.c.l.b16 %v3365
        %v3378 = vunpack.c.l.b16 %v3366
        %v3379 = vunpack.c.l.b16 %v3367
        %v3380 = vunpack.c.l.b16 %v3368
        %v3381 = vunpack.c.l.b16 %v3369
        %v3382 = vpack.c.b16 %v3377, %v3376
        %v3383 = vpack.c.b16 %v3379, %v3378
        %v3384 = vpack.c.b16 %v3381, %v3380
        %v3395 = vunpack.c.l.b16 %v3354
        %v3396 = vunpack.c.l.b16 %v3355
        %v3397 = vunpack.c.l.b16 %v3356
        %v3398 = vunpack.c.l.b16 %v3357
        %v3399 = vunpack.c.l.b16 %v3358
        %v3400 = vunpack.c.l.b16 %v3359
        %v3401 = vunpack.c.l.b16 %v3360
        %v3402 = vunpack.c.l.b16 %v3361
        %v3403 = vunpack.c.l.b16 %v3362
        %v3404 = vunpack.c.l.b16 %v3363
        %v3405 = vpack.c.b16 %v3396, %v3395
        %v3406 = vpack.c.b16 %v3398, %v3397
        %v3407 = vpack.c.b16 %v3400, %v3399
        %v3408 = vpack.c.b16 %v3402, %v3401
        %v3409 = vpack.c.b16 %v3404, %v3403
        %v3416 = vsel %vm3003, %v3382, 0
        %v3419 = vsel %vm3003, %v3383, 0
        %v3422 = vsel %vm3003, %v3384, 0
        %3424 = vmatpush.bf16.msra.mxu0 0
        %3425 = vmatpush.bf16.msra.mxu0 0
        %3426 = vmatpush.bf16.msra.mxu0 0
        %3427 = vmatpush.bf16.msra.mxu0 %v3409
        %3428 = vmatpush.bf16.msra.mxu0 %v3408
        %3429 = vmatpush.bf16.msra.mxu0 %v3407
        %3430 = vmatpush.bf16.msra.mxu0 %v3406
        %3431 = vmatpush.bf16.msra.mxu0 %v3405
        %3432 = vmatmul.bf16.gmra.mxu0 %v3416
        %v3433 = vpop.f32.mrf.mxu0
        %v3434 = vadd.f32 0.0, %v3433
        %v3435 = vpop.f32.mrf.mxu0
        %v3436 = vadd.f32 0.0, %v3435
        %3437 = vmatmul.bf16.gmra.mxu0 %v3419
        %v3438 = vpop.f32.mrf.mxu0
        %v3439 = vadd.f32 0.0, %v3438
        %v3440 = vpop.f32.mrf.mxu0
        %v3441 = vadd.f32 0.0, %v3440
        %3442 = vmatmul.bf16.gmra.mxu0 %v3422
        %v3443 = vpop.f32.mrf.mxu0
        %v3444 = vadd.f32 0.0, %v3443
        %v3445 = vpop.f32.mrf.mxu0
        %v3446 = vadd.f32 0.0, %v3445
        %3447 = vdwg.mxu0
        %v3454 = vunpack.c.l.b16 %v3348
        %v3455 = vunpack.c.l.b16 %v3349
        %v3456 = vunpack.c.l.b16 %v3350
        %v3457 = vunpack.c.l.b16 %v3351
        %v3458 = vunpack.c.l.b16 %v3352
        %v3459 = vunpack.c.l.b16 %v3353
        %v3460 = vpack.c.b16 %v3455, %v3454
        %v3461 = vpack.c.b16 %v3457, %v3456
        %v3462 = vpack.c.b16 %v3459, %v3458
        %v3473 = vunpack.c.l.b16 %v3338
        %v3474 = vunpack.c.h.b16 %v3338
        %v3475 = vunpack.c.l.b16 %v3339
        %v3476 = vunpack.c.h.b16 %v3339
        %v3477 = vunpack.c.l.b16 %v3340
        %v3478 = vunpack.c.h.b16 %v3340
        %v3479 = vunpack.c.l.b16 %v3341
        %v3480 = vunpack.c.h.b16 %v3341
        %v3481 = vunpack.c.l.b16 %v3342
        %v3482 = vunpack.c.h.b16 %v3342
        %v3483 = vunpack.c.l.b16 %v3343
        %v3484 = vunpack.c.h.b16 %v3343
        %v3485 = vunpack.c.l.b16 %v3344
        %v3486 = vunpack.c.h.b16 %v3344
        %v3487 = vunpack.c.l.b16 %v3345
        %v3488 = vunpack.c.h.b16 %v3345
        %v3489 = vunpack.c.l.b16 %v3346
        %v3490 = vunpack.c.h.b16 %v3346
        %v3491 = vunpack.c.l.b16 %v3347
        %v3492 = vunpack.c.h.b16 %v3347
        %v3493 = vpack.c.b16 %v3475, %v3473
        %v3494 = vpack.c.b16 %v3476, %v3474
        %v3495 = vpack.c.b16 %v3479, %v3477
        %v3496 = vpack.c.b16 %v3480, %v3478
        %v3497 = vpack.c.b16 %v3483, %v3481
        %v3498 = vpack.c.b16 %v3484, %v3482
        %v3499 = vpack.c.b16 %v3487, %v3485
        %v3500 = vpack.c.b16 %v3488, %v3486
        %v3501 = vpack.c.b16 %v3491, %v3489
        %v3502 = vpack.c.b16 %v3492, %v3490
        %3503 = vrot.lane.b32.xlu0 %v3493, 16
        %v3504 = vpop.permute.xlu0 %3503
        %3505 = vrot.lane.b32.xlu0 %v3494, 16
        %v3506 = vpop.permute.xlu0 %3505
        %3507 = vrot.lane.b32.xlu0 %v3495, 16
        %v3508 = vpop.permute.xlu0 %3507
        %3509 = vrot.lane.b32.xlu0 %v3496, 16
        %v3510 = vpop.permute.xlu0 %3509
        %3511 = vrot.lane.b32.xlu0 %v3497, 16
        %v3512 = vpop.permute.xlu0 %3511
        %3513 = vrot.lane.b32.xlu0 %v3498, 16
        %v3514 = vpop.permute.xlu0 %3513
        %3515 = vrot.lane.b32.xlu0 %v3499, 16
        %v3516 = vpop.permute.xlu0 %3515
        %3517 = vrot.lane.b32.xlu0 %v3500, 16
        %v3518 = vpop.permute.xlu0 %3517
        %3519 = vrot.lane.b32.xlu0 %v3501, 16
        %v3520 = vpop.permute.xlu0 %3519
        %3521 = vrot.lane.b32.xlu0 %v3502, 16
        %v3522 = vpop.permute.xlu0 %3521
        %v3523 = vsel %vm546, %v3504, %v3506
        %v3524 = vsel %vm546, %v3508, %v3510
        %v3525 = vsel %vm546, %v3512, %v3514
        %v3526 = vsel %vm546, %v3516, %v3518
        %v3527 = vsel %vm546, %v3520, %v3522
        %v3534 = vsel %vm3003, %v3460, 0
        %v3537 = vsel %vm3003, %v3461, 0
        %v3540 = vsel %vm3003, %v3462, 0
        %3542 = vmatpush.bf16.msra.mxu0 0
        %3543 = vmatpush.bf16.msra.mxu0 0
        %3544 = vmatpush.bf16.msra.mxu0 0
        %3545 = vmatpush.bf16.msra.mxu0 %v3527
        %3546 = vmatpush.bf16.msra.mxu0 %v3526
        %3547 = vmatpush.bf16.msra.mxu0 %v3525
        %3548 = vmatpush.bf16.msra.mxu0 %v3524
        %3549 = vmatpush.bf16.msra.mxu0 %v3523
        %3550 = vmatmul.bf16.gmra.mxu0 %v3534
        %v3551 = vpop.f32.mrf.mxu0
        %v3552 = vadd.f32 %v3434, %v3551
        %v3553 = vpop.f32.mrf.mxu0
        %v3554 = vadd.f32 %v3436, %v3553
        %3555 = vmatmul.bf16.gmra.mxu0 %v3537
        %v3556 = vpop.f32.mrf.mxu0
        %v3557 = vadd.f32 %v3439, %v3556
        %v3558 = vpop.f32.mrf.mxu0
        %v3559 = vadd.f32 %v3441, %v3558
        %3560 = vmatmul.bf16.gmra.mxu0 %v3540
        %v3561 = vpop.f32.mrf.mxu0
        %v3562 = vadd.f32 %v3444, %v3561
        %v3563 = vpop.f32.mrf.mxu0
        %v3564 = vadd.f32 %v3446, %v3563
        %3565 = vdwg.mxu0
        %v3566 = vld [vmem:[#allocation2 + $0x8] sm:$0xff]
        %v3567 = vld [vmem:[#allocation2 + $0x18] sm:$0xff]
        %v3568 = vld [vmem:[#allocation2 + $0x28] sm:$0xff]
        %v3569 = vld [vmem:[#allocation2 + $0x38] sm:$0xff]
        %v3570 = vld [vmem:[#allocation2 + $0x48] sm:$0xff]
        %v3571 = vld [vmem:[#allocation2 + $0x58] sm:$0xff]
        %v3572 = vld [vmem:[#allocation2 + $0x68] sm:$0xff]
        %v3573 = vld [vmem:[#allocation2 + $0x78] sm:$0xff]
        %v3574 = vld [vmem:[#allocation2 + $0x88] sm:$0xff]
        %v3575 = vld [vmem:[#allocation2 + $0x98] sm:$0xff]
        %v3576 = vld [vmem:[%s3165] sm:$0xf]
        %v3577 = vld [vmem:[%s3165 + $0x4] sm:$0xf]
        %v3578 = vld [vmem:[%s3165 + $0x8] sm:$0xf]
        %v3579 = vld [vmem:[%s3165 + $0xc] sm:$0xf]
        %v3580 = vld [vmem:[%s3165 + $0x10] sm:$0xf]
        %v3581 = vld [vmem:[%s3165 + $0x14] sm:$0xf]
        %v3588 = vunpack.c.l.b16 %v3576
        %v3589 = vunpack.c.l.b16 %v3577
        %v3590 = vunpack.c.l.b16 %v3578
        %v3591 = vunpack.c.l.b16 %v3579
        %v3592 = vunpack.c.l.b16 %v3580
        %v3593 = vunpack.c.l.b16 %v3581
        %v3594 = vpack.c.b16 %v3589, %v3588
        %v3595 = vpack.c.b16 %v3591, %v3590
        %v3596 = vpack.c.b16 %v3593, %v3592
        %v3607 = vunpack.c.l.b16 %v3566
        %v3608 = vunpack.c.h.b16 %v3566
        %v3609 = vunpack.c.l.b16 %v3567
        %v3610 = vunpack.c.h.b16 %v3567
        %v3611 = vunpack.c.l.b16 %v3568
        %v3612 = vunpack.c.h.b16 %v3568
        %v3613 = vunpack.c.l.b16 %v3569
        %v3614 = vunpack.c.h.b16 %v3569
        %v3615 = vunpack.c.l.b16 %v3570
        %v3616 = vunpack.c.h.b16 %v3570
        %v3617 = vunpack.c.l.b16 %v3571
        %v3618 = vunpack.c.h.b16 %v3571
        %v3619 = vunpack.c.l.b16 %v3572
        %v3620 = vunpack.c.h.b16 %v3572
        %v3621 = vunpack.c.l.b16 %v3573
        %v3622 = vunpack.c.h.b16 %v3573
        %v3623 = vunpack.c.l.b16 %v3574
        %v3624 = vunpack.c.h.b16 %v3574
        %v3625 = vunpack.c.l.b16 %v3575
        %v3626 = vunpack.c.h.b16 %v3575
        %v3627 = vpack.c.b16 %v3609, %v3607
        %v3628 = vpack.c.b16 %v3610, %v3608
        %v3629 = vpack.c.b16 %v3613, %v3611
        %v3630 = vpack.c.b16 %v3614, %v3612
        %v3631 = vpack.c.b16 %v3617, %v3615
        %v3632 = vpack.c.b16 %v3618, %v3616
        %v3633 = vpack.c.b16 %v3621, %v3619
        %v3634 = vpack.c.b16 %v3622, %v3620
        %v3635 = vpack.c.b16 %v3625, %v3623
        %v3636 = vpack.c.b16 %v3626, %v3624
        %3637 = vrot.lane.b32.xlu0 %v3627, 112
        %v3638 = vpop.permute.xlu0 %3637
        %3639 = vrot.lane.b32.xlu0 %v3628, 112
        %v3640 = vpop.permute.xlu0 %3639
        %3641 = vrot.lane.b32.xlu0 %v3629, 112
        %v3642 = vpop.permute.xlu0 %3641
        %3643 = vrot.lane.b32.xlu0 %v3630, 112
        %v3644 = vpop.permute.xlu0 %3643
        %3645 = vrot.lane.b32.xlu0 %v3631, 112
        %v3646 = vpop.permute.xlu0 %3645
        %3647 = vrot.lane.b32.xlu0 %v3632, 112
        %v3648 = vpop.permute.xlu0 %3647
        %3649 = vrot.lane.b32.xlu0 %v3633, 112
        %v3650 = vpop.permute.xlu0 %3649
        %3651 = vrot.lane.b32.xlu0 %v3634, 112
        %v3652 = vpop.permute.xlu0 %3651
        %3653 = vrot.lane.b32.xlu0 %v3635, 112
        %v3654 = vpop.permute.xlu0 %3653
        %3655 = vrot.lane.b32.xlu0 %v3636, 112
        %v3656 = vpop.permute.xlu0 %3655
        %v3657 = vsel %vm618, %v3638, %v3640
        %v3658 = vsel %vm618, %v3642, %v3644
        %v3659 = vsel %vm618, %v3646, %v3648
        %v3660 = vsel %vm618, %v3650, %v3652
        %v3661 = vsel %vm618, %v3654, %v3656
        %v3668 = vsel %vm3003, %v3594, 0
        %v3671 = vsel %vm3003, %v3595, 0
        %v3674 = vsel %vm3003, %v3596, 0
        %3676 = vmatpush.bf16.msra.mxu0 0
        %3677 = vmatpush.bf16.msra.mxu0 0
        %3678 = vmatpush.bf16.msra.mxu0 0
        %3679 = vmatpush.bf16.msra.mxu0 %v3661
        %3680 = vmatpush.bf16.msra.mxu0 %v3660
        %3681 = vmatpush.bf16.msra.mxu0 %v3659
        %3682 = vmatpush.bf16.msra.mxu0 %v3658
        %3683 = vmatpush.bf16.msra.mxu0 %v3657
        %3684 = vmatmul.bf16.gmra.mxu0 %v3668
        %v3685 = vpop.f32.mrf.mxu0
        %v3686 = vadd.f32 0.0, %v3685
        %v3687 = vpop.f32.mrf.mxu0
        %v3688 = vadd.f32 0.0, %v3687
        %3689 = vmatmul.bf16.gmra.mxu0 %v3671
        %v3690 = vpop.f32.mrf.mxu0
        %v3691 = vadd.f32 0.0, %v3690
        %v3692 = vpop.f32.mrf.mxu0
        %v3693 = vadd.f32 0.0, %v3692
        %3694 = vmatmul.bf16.gmra.mxu0 %v3674
        %v3695 = vpop.f32.mrf.mxu0
        %v3696 = vadd.f32 0.0, %v3695
        %v3697 = vpop.f32.mrf.mxu0
        %v3698 = vadd.f32 0.0, %v3697
        %3699 = vdwg.mxu0
        %v3700 = vadd.f32 %v3552, %v3686
        %v3701 = vadd.f32 %v3554, %v3688
        %v3702 = vadd.f32 %v3557, %v3691
        %v3703 = vadd.f32 %v3559, %v3693
        %v3704 = vadd.f32 %v3562, %v3696
        %v3705 = vadd.f32 %v3564, %v3698
        %3706 = vrot.lane.b32.xlu0 %v3700, 1
        %v3707 = vpop.permute.xlu0 %3706
        %3708 = vrot.lane.b32.xlu0 %v3701, 1
        %v3709 = vpop.permute.xlu0 %3708
        %v3710 = vmul.f32 %v3707, %v443
        %v3711 = vmul.f32 %v3709, %v443
        %v3712 = vadd.f32 %v3702, %v3710
        %v3713 = vadd.f32 %v3703, %v3711
        %3714 = vrot.lane.b32.xlu0 %v3704, 127
        %v3715 = vpop.permute.xlu0 %3714
        %3716 = vrot.lane.b32.xlu0 %v3705, 127
        %v3717 = vpop.permute.xlu0 %3716
        %v3718 = vmul.f32 %v3715, %v446
        %v3719 = vmul.f32 %v3717, %v446
        %v3720 = vadd.f32 %v3712, %v3718
        %v3721 = vadd.f32 %v3713, %v3719
        %v3722 = vld [vmem:[%s10] sm:$0xff]
        %v3723 = vld [vmem:[%s10 + $0x8] sm:$0xff]
        %3725 = vset.pattern.permute.xlu0 0
        %3726 = vperm.xlu0 %3725, %v3722
        %v3727 = vpop.permute.xlu0 %3726
        %3730 = vset.pattern.permute.xlu0 0
        %3731 = vperm.xlu0 %3730, %v3723
        %v3732 = vpop.permute.xlu0 %3731
        %v3734 = vadd.f32 %v3720, %v3727
        %v3735 = vadd.f32 %v3721, %v3732
        %v3736 = vld [vmem:[%s401 + $0x4] sm:$0xf]
        %v3737 = vld [vmem:[%s401 + $0xc] sm:$0xf]
        %v3738 = vunpack.c.l.bf16 %v3736
        %v3739 = vunpack.c.l.bf16 %v3737
        %v3740 = vmul.f32 %v3734, 0.2
        %v3741 = vmul.f32 %v3735, 0.2
        %v3742 = vadd.f32 %v3740, %v3738
        %v3743 = vadd.f32 %v3741, %v3739
        %v3744 = vpack.c.bf16 %v3742, %v3742
        %v3745 = vpack.c.bf16 %v3743, %v3743
        %3746 = vst [vmem:[%s396 + $0x4] sm:$0xf] %v3744
        %3747 = vst [vmem:[%s396 + $0xc] sm:$0xf] %v3745
        %s3748 = sand.u32 %s270, 1
        %s3749 = scalar_lea.sflag [#allocation5], %s3748
        %s3750 = sand.u32 %s270, 1
        %s3751 = smul.addr %s3750, 16
        %s3752 = scalar_lea.vmem [#allocation6], %s3751
        // Predicated region
        $region69: #{tpu_custom_call.1} parent=63 // pred_check
          %p3753 = pneg %p280
        $region70: #{tpu_custom_call.1} parent=63 // pred_check_branch
          %3755 = sbr.rel (%p3753) target = $region72
        $region71: #{tpu_custom_call.1} parent=63 // pred_region
          %3757 = vsyncadd %s3749, 0
          %s3758 = smul.addr %s26, 4
          %s3759 = smul.addr %s3758, 4
          %s3760 = scalar_lea.hbm %s11, %s3759
          %s3761 = sshll.u32 %s3752, 4
          %s3762 = int_to_ptr.vmem [resolvable:$true] %s3761
          %s3763 = sshll.u32 %s3760, 4
          %s3764 = int_to_ptr.hbm [resolvable:$true] %s3763
          %3769 = dma.vmem_to_hbm [thread:$0]  %s3762, 256, %s3764, %s3749, 128, 128, 8
        $region72: #{tpu_custom_call.1} parent=63 // pred_fallthru
          _
      $region64: #{tpu_custom_call.1} parent=5 // pred_fallthru
        _
      %p3770 = scmp.le.s32.totalorder 2, %s21
      // Predicated region
      $region73: #{tpu_custom_call.1} parent=5 // pred_check
        %p3771 = pneg %p3770
      $region74: #{tpu_custom_call.1} parent=5 // pred_check_branch
        %3773 = sbr.rel (%p3771) target = $region76
      $region75: #{tpu_custom_call.1} parent=5 // pred_region
        %s3774 = ssub.s32 %s21, 2
        // Predicated region
        $region77: #{tpu_custom_call.1} parent=75 // pred_check
          %p3775 = pneg %p286
        $region78: #{tpu_custom_call.1} parent=75 // pred_check_branch
          %3777 = sbr.rel (%p3775) target = $region80
        $region79: #{tpu_custom_call.1} parent=75 // pred_region
          %s3778 = sand.u32 %s271, 1
          %s3779 = scalar_lea.sflag [#allocation5], %s3778
          %s3780 = sand.u32 %s271, 1
          %s3781 = smul.addr %s3780, 16
          %s3782 = scalar_lea.vmem [#allocation6], %s3781
          %3784 = dma.done %s3779, 256
        $region80: #{tpu_custom_call.1} parent=75 // pred_fallthru
          _
      $region76: #{tpu_custom_call.1} parent=5 // pred_fallthru
        _
    $region6: #{tpu_custom_call.1} parent=1 // loop_footer
      %s25 = sadd.s32 1, %s21
    $region7: #{tpu_custom_call.1} parent=1 // loop_footer_branch
      %20 = sbr.rel target = $region3
    $region8: #{tpu_custom_call.1} parent=1 // loop_exit
      _
    %3785 = vsyncpa [#allocation4], 1
    %s3786 = scalar_lea.sflag [#allocation4], 1
    %3787 = vsyncpa %s3786, 1
    %3788 = vsyncpa [#allocation5], 1
    %s3789 = scalar_lea.sflag [#allocation5], 1
    %3790 = vsyncpa %s3789, 1

</llo_original>
